<compile_context>
chip_gen: v5e
topology: v5e:2x2
jax: 0.10.0
libtpu: 0.0.40
codegen_flags: <defaults>
</compile_context>

<pallas_src>
import functools

import numpy as np
import jax
import jax.numpy as jnp
from jax.experimental import pallas as pl
from jax.experimental.pallas import tpu as pltpu


_VMEM_SPEC = pl.BlockSpec(memory_space=pltpu.MemorySpace.VMEM)


# ---------------------------------------------------------------------------
# LSTM cell elementwise math from pre-activated gates.
# S = sigmoid(gates), G = tanh(gates) are computed ONCE on the full-width
# gates tensor; this helper only slices (PyTorch gate order i, f, g, o) and
# does the cheap VPU math.  `off` selects the decoder (0) or predictor (4H)
# half of a fused (B, 8H) gate tensor.
# ---------------------------------------------------------------------------
def _cell_from_act(S, G, c_prev, off, hidden):
    i = S[:, off + 0 * hidden: off + 1 * hidden]
    f = S[:, off + 1 * hidden: off + 2 * hidden]
    g = G[:, off + 2 * hidden: off + 3 * hidden]
    o = S[:, off + 3 * hidden: off + 4 * hidden]
    c_new = f * c_prev + i * g
    h_new = o * jnp.tanh(c_new)
    return h_new, c_new


# ---------------------------------------------------------------------------
# Fused AE-with-Predictor forward kernel (grid-less, everything in VMEM)
# ---------------------------------------------------------------------------
def _ae_kernel(x_ref,                                       # (T*B, 1)
               e_w0_ref, e_whh0_ref, e_b0_ref,              # (1,4H) (H,4H) (1,4H)
               e_wc_ref, e_bc_ref,                          # (L-1,2H,4H) (L-1,1,4H)
               dp_wih0_ref, dp_b0_ref, dp_whh0_ref,         # (H,8H) (1,8H) (2H,8H)
               dp_wc_ref, dp_bc_ref,                        # (L-1,4H,8H) (L-1,1,8H)
               w_out_ref, b_out_ref,                        # (2H,2O) (1,2O)
               out_ref,                                     # (T*B, 2O)
               comb_h_s,                                    # scratch (T*B, 2H)
               *, num_layers, hidden, seq_len, batch):
    L, H, T, B = num_layers, hidden, seq_len, batch
    f32 = jnp.float32
    dot = functools.partial(jnp.dot, preferred_element_type=f32)

    # --- Encoder layer-0 input term for ALL timesteps at once:
    #     (T*B, 1) * (1, 4H) broadcast-multiply + bias (one bulk VPU pass).
    xg = x_ref[...] * e_w0_ref[...] + e_b0_ref[...]          # (T*B, 4H)

    # ---------------- Encoder (state in vregs, small-T static unroll) -------
    zeros = jnp.zeros((B, H), f32)
    h = [zeros] * L
    c = [zeros] * L
    for t in range(T):                                       # static unroll (T tiny)
        # layer 0: input term precomputed; only the hidden matmul remains.
        gates = xg[t * B:(t + 1) * B, :] + dot(h[0], e_whh0_ref[...])
        S = jax.nn.sigmoid(gates)
        G = jnp.tanh(gates)
        h[0], c[0] = _cell_from_act(S, G, c[0], 0, H)
        x_in = h[0]
        for l in range(1, L):
            # fused [W_ih; W_hh]: one MXU push, contraction depth 2H.
            op = jnp.concatenate([x_in, h[l]], axis=1)       # (B, 2H)
            gates = dot(op, e_wc_ref[l - 1]) + e_bc_ref[l - 1]
            S = jax.nn.sigmoid(gates)
            G = jnp.tanh(gates)
            h[l], c[l] = _cell_from_act(S, G, c[l], 0, H)
            x_in = h[l]

    ctx = h[L - 1]                                           # (B, H) context

    # Decoder / predictor layer-0 input is the constant context every step:
    # one fused matmul for BOTH heads (+ both biases), reused every timestep.
    ctx_g = dot(ctx, dp_wih0_ref[...]) + dp_b0_ref[...]      # (B, 8H)

    # ---------------- Decoder & Predictor (fused block-diagonal chain) ------
    hd, cd = list(h), list(c)                                # seeded with h_n, c_n
    hp, cp = list(h), list(c)
    for t in range(T):                                       # static unroll
        # layer 0: one (B,2H)@(2H,8H) push covers both recurrences.
        op0 = jnp.concatenate([hd[0], hp[0]], axis=1)        # (B, 2H)
        g0 = ctx_g + dot(op0, dp_whh0_ref[...])              # (B, 8H)
        S = jax.nn.sigmoid(g0)
        G = jnp.tanh(g0)
        hd[0], cd[0] = _cell_from_act(S, G, cd[0], 0, H)
        hp[0], cp[0] = _cell_from_act(S, G, cp[0], 4 * H, H)
        xd, xp = hd[0], hp[0]
        for l in range(1, L):
            # one (B,4H)@(4H,8H) block-diagonal push per layer-step for both
            # heads; gd/gp split at lane 4H is vreg-aligned (free).
            op = jnp.concatenate([xd, hd[l], xp, hp[l]], axis=1)   # (B, 4H)
            g = dot(op, dp_wc_ref[l - 1]) + dp_bc_ref[l - 1]       # (B, 8H)
            S = jax.nn.sigmoid(g)
            G = jnp.tanh(g)
            hd[l], cd[l] = _cell_from_act(S, G, cd[l], 0, H)
            hp[l], cp[l] = _cell_from_act(S, G, cp[l], 4 * H, H)
            xd, xp = hd[l], hp[l]
        # stage both top-layer hiddens side by side; the output Linear is
        # hoisted out of the recurrence.
        comb_h_s[t * B:(t + 1) * B, :] = jnp.concatenate([xd, xp], axis=1)

    # ---------------- Hoisted, fused output Linear: ONE matmul + ONE store --
    out_ref[...] = (dot(comb_h_s[...], w_out_ref[...])
                    + b_out_ref[...]).astype(out_ref.dtype)


# ---------------------------------------------------------------------------
# Parameter init (deterministic, PyTorch-style uniform(-1/sqrt(H), 1/sqrt(H)))
# ---------------------------------------------------------------------------
def init_lstm_params(key, input_size, hidden, num_layers):
    bound = 1.0 / np.sqrt(hidden)
    w_ih, w_hh, bias = [], [], []
    for l in range(num_layers):
        in_sz = input_size if l == 0 else hidden
        key, k1, k2, k3, k4 = jax.random.split(key, 5)
        w_ih.append(jax.random.uniform(k1, (4 * hidden, in_sz),
                                       jnp.float32, -bound, bound))
        w_hh.append(jax.random.uniform(k2, (4 * hidden, hidden),
                                       jnp.float32, -bound, bound))
        b_ih = jax.random.uniform(k3, (4 * hidden,), jnp.float32, -bound, bound)
        b_hh = jax.random.uniform(k4, (4 * hidden,), jnp.float32, -bound, bound)
        bias.append(b_ih + b_hh)                 # PyTorch adds both biases
    return key, (w_ih, w_hh, bias)


def init_linear_params(key, hidden, output_size):
    bound = 1.0 / np.sqrt(hidden)
    key, k1, k2 = jax.random.split(key, 3)
    w = jax.random.uniform(k1, (output_size, hidden), jnp.float32, -bound, bound)
    b = jax.random.uniform(k2, (output_size,), jnp.float32, -bound, bound)
    return key, (w, b)


# ---------------------------------------------------------------------------
# One-time weight packing (kernel-friendly, fused/block-diagonal layouts)
# ---------------------------------------------------------------------------
def pack_encoder(enc, hidden):
    w_ih, w_hh, bias = enc
    L = len(w_ih)
    H = hidden
    e_w0 = w_ih[0].T                                  # (1, 4H) single input feature
    e_whh0 = w_hh[0].T                                # (H, 4H)
    e_b0 = bias[0][None, :]                           # (1, 4H)
    if L > 1:
        e_wc = jnp.stack([jnp.concatenate([w_ih[l].T, w_hh[l].T], axis=0)
                          for l in range(1, L)])      # (L-1, 2H, 4H)
        e_bc = jnp.stack([bias[l][None, :] for l in range(1, L)])  # (L-1, 1, 4H)
    else:                                             # dummies (unused when L == 1)
        e_wc = jnp.zeros((1, 2 * H, 4 * H), jnp.float32)
        e_bc = jnp.zeros((1, 1, 4 * H), jnp.float32)
    return e_w0, e_whh0, e_b0, e_wc, e_bc


def pack_dec_pred(dec, prd, hidden):
    d_wih, d_whh, d_b = dec
    p_wih, p_whh, p_b = prd
    L = len(d_wih)
    H = hidden
    z = jnp.zeros((H, 4 * H), jnp.float32)
    # layer-0: context (input) weights of both heads side by side, biases fused.
    dp_wih0 = jnp.concatenate([d_wih[0].T, p_wih[0].T], axis=1)     # (H, 8H)
    dp_b0 = jnp.concatenate([d_b[0], p_b[0]])[None, :]              # (1, 8H)
    # layer-0: hidden weights block-diagonal.
    dp_whh0 = jnp.concatenate(
        [jnp.concatenate([d_whh[0].T, z], axis=1),
         jnp.concatenate([z, p_whh[0].T], axis=1)], axis=0)         # (2H, 8H)
    # layers >= 1: row-order [xd, hd, xp, hp]; dec gates in cols 0:4H, pred 4H:8H.
    wcs, bcs = [], []
    for l in range(1, L):
        wcs.append(jnp.concatenate(
            [jnp.concatenate([d_wih[l].T, z], axis=1),
             jnp.concatenate([d_whh[l].T, z], axis=1),
             jnp.concatenate([z, p_wih[l].T], axis=1),
             jnp.concatenate([z, p_whh[l].T], axis=1)], axis=0))    # (4H, 8H)
        bcs.append(jnp.concatenate([d_b[l], p_b[l]])[None, :])      # (1, 8H)
    if L > 1:
        dp_wc = jnp.stack(wcs)                                      # (L-1, 4H, 8H)
        dp_bc = jnp.stack(bcs)                                      # (L-1, 1, 8H)
    else:
        dp_wc = jnp.zeros((1, 4 * H, 8 * H), jnp.float32)
        dp_bc = jnp.zeros((1, 1, 8 * H), jnp.float32)
    return dp_wih0, dp_b0, dp_whh0, dp_wc, dp_bc


def pack_out(dec_fc, prd_fc, hidden):
    dw, db = dec_fc
    pw, pb = prd_fc
    O = dw.shape[0]
    z = jnp.zeros((hidden, O), jnp.float32)
    w_out = jnp.concatenate(
        [jnp.concatenate([dw.T, z], axis=1),
         jnp.concatenate([z, pw.T], axis=1)], axis=0)               # (2H, 2O)
    b_out = jnp.concatenate([db, pb])[None, :]                      # (1, 2O)
    return w_out, b_out


def pack_all(enc, dec, dec_fc, prd, prd_fc, hidden):
    return (pack_encoder(enc, hidden)
            + pack_dec_pred(dec, prd, hidden)
            + pack_out(dec_fc, prd_fc, hidden))


# ---------------------------------------------------------------------------
# Jitted forward wrapper (single pallas_call; batch padded to 8 sublanes)
# ---------------------------------------------------------------------------
@functools.partial(jax.jit, static_argnames=("num_layers",))
def forward_pallas(x, packed, *, num_layers):
    (e_w0, e_whh0, e_b0, e_wc, e_bc,
     dp_wih0, dp_b0, dp_whh0, dp_wc, dp_bc,
     w_out, b_out) = packed
    B, T, _ = x.shape
    H = e_whh0.shape[0]
    O = w_out.shape[1] // 2
    L = num_layers
    B_pad = ((B + 7) // 8) * 8                   # sublane-align the batch

    x_tbf = jnp.transpose(x, (1, 0, 2)).astype(jnp.float32)    # (T, B, 1)
    if B_pad != B:
        x_tbf = jnp.pad(x_tbf, ((0, 0), (0, B_pad - B), (0, 0)))
    x_flat = x_tbf.reshape(T * B_pad, 1)

    kernel = functools.partial(_ae_kernel, num_layers=L, hidden=H,
                               seq_len=T, batch=B_pad)

    # TODO(synk): for real batch >= 16 on v7x, add a parallel grid axis over
    # batch blocks (dimension_semantics=("parallel",)) so both TensorCores run.
    out2d = pl.pallas_call(
        kernel,
        out_shape=jax.ShapeDtypeStruct((T * B_pad, 2 * O), jnp.float32),
        in_specs=[_VMEM_SPEC] * 13,
        out_specs=_VMEM_SPEC,
        scratch_shapes=[pltpu.VMEM((T * B_pad, 2 * H), jnp.float32)],
        compiler_params=pltpu.CompilerParams(
            vmem_limit_bytes=32 * 1024 * 1024),  # explicit guard (v7x: 64 MiB phys)
    )(x_flat, e_w0, e_whh0, e_b0, e_wc, e_bc,
      dp_wih0, dp_b0, dp_whh0, dp_wc, dp_bc, w_out, b_out)

    out = out2d.reshape(T, B_pad, 2 * O)[:, :B, :]
    recon = out[:, :, :O].transpose(1, 0, 2)
    pred = out[:, :, O:].transpose(1, 0, 2)
    return recon, pred


# ---------------------------------------------------------------------------
# Pure-JAX reference (for correctness checking only)
# ---------------------------------------------------------------------------
def lstm_ref(x_btf, params, h0, c0, hidden):
    w_ih, w_hh, bias = params
    L = len(w_ih)
    B, T, _ = x_btf.shape
    h = [h0[l] for l in range(L)]
    c = [c0[l] for l in range(L)]
    ys = []
    for t in range(T):
        inp = x_btf[:, t, :]
        for l in range(L):
            gates = inp @ w_ih[l].T + h[l] @ w_hh[l].T + bias[l]
            i = jax.nn.sigmoid(gates[:, :hidden])
            f = jax.nn.sigmoid(gates[:, hidden:2 * hidden])
            g = jnp.tanh(gates[:, 2 * hidden:3 * hidden])
            o = jax.nn.sigmoid(gates[:, 3 * hidden:])
            c[l] = f * c[l] + i * g
            h[l] = o * jnp.tanh(c[l])
            inp = h[l]
        ys.append(inp)
    return jnp.stack(ys, axis=1), jnp.stack(h), jnp.stack(c)


def forward_ref(x, enc, dec, dec_fc, prd, prd_fc, hidden, num_layers):
    B, T, _ = x.shape
    h0 = jnp.zeros((num_layers, B, hidden), jnp.float32)
    c0 = jnp.zeros((num_layers, B, hidden), jnp.float32)
    _, hn, cn = lstm_ref(x, enc, h0, c0, hidden)
    context = hn[-1]
    rep = jnp.tile(context[:, None, :], (1, T, 1))
    dec_y, _, _ = lstm_ref(rep, dec, hn, cn, hidden)
    prd_y, _, _ = lstm_ref(rep, prd, hn, cn, hidden)
    dec_w, dec_b = dec_fc
    prd_w, prd_b = prd_fc
    return dec_y @ dec_w.T + dec_b, prd_y @ prd_w.T + prd_b


# ---------------------------------------------------------------------------
if __name__ == "__main__":
    input_size = output_size = 1
    hidden_size = 32
    num_layers = 2
    batch = 2
    seq_len = 8

    key = jax.random.PRNGKey(0)
    key, kx = jax.random.split(key)
    x = jax.random.normal(kx, (batch, seq_len, input_size), jnp.float32)

    key, enc_params = init_lstm_params(key, input_size, hidden_size, num_layers)
    key, dec_params = init_lstm_params(key, hidden_size, hidden_size, num_layers)
    key, dec_fc = init_linear_params(key, hidden_size, output_size)
    key, prd_params = init_lstm_params(key, hidden_size, hidden_size, num_layers)
    key, prd_fc = init_linear_params(key, hidden_size, output_size)

    # Pack weights ONCE (transposes, block-diagonal fusion, bias fusion).
    packed = pack_all(enc_params, dec_params, dec_fc,
                      prd_params, prd_fc, hidden_size)

    recon, pred = forward_pallas(x, packed, num_layers=num_layers)
    recon = jax.block_until_ready(recon)
    pred = jax.block_until_ready(pred)

    recon_ref, pred_ref = forward_ref(x, enc_params, dec_params, dec_fc,
                                      prd_params, prd_fc, hidden_size, num_layers)

    assert recon.shape == (batch, seq_len, output_size)
    assert pred.shape == (batch, seq_len, output_size)
    np.testing.assert_allclose(np.asarray(recon), np.asarray(recon_ref),
                               rtol=1e-3, atol=1e-3)
    np.testing.assert_allclose(np.asarray(pred), np.asarray(pred_ref),
                               rtol=1e-3, atol=1e-3)
    print("KERNEL_OK")
</pallas_src>

<mosaic_0001>
module attributes {stable_mosaic.version = 11 : i64} {
  func.func @_ae_kernel(%arg0: memref<64x1xf32, #tpu.memory_space<vmem>>, %arg1: memref<1x128xf32, #tpu.memory_space<vmem>>, %arg2: memref<32x128xf32, #tpu.memory_space<vmem>>, %arg3: memref<1x128xf32, #tpu.memory_space<vmem>>, %arg4: memref<1x64x128xf32, #tpu.memory_space<vmem>>, %arg5: memref<1x1x128xf32, #tpu.memory_space<vmem>>, %arg6: memref<32x256xf32, #tpu.memory_space<vmem>>, %arg7: memref<1x256xf32, #tpu.memory_space<vmem>>, %arg8: memref<64x256xf32, #tpu.memory_space<vmem>>, %arg9: memref<1x128x256xf32, #tpu.memory_space<vmem>>, %arg10: memref<1x1x256xf32, #tpu.memory_space<vmem>>, %arg11: memref<64x2xf32, #tpu.memory_space<vmem>>, %arg12: memref<1x2xf32, #tpu.memory_space<vmem>>, %arg13: memref<64x2xf32, #tpu.memory_space<vmem>>, %arg14: memref<64x64xf32, #tpu.memory_space<vmem>>) attributes {dimension_semantics = [], scalar_prefetch = 0 : i64, scratch_operands = 1 : i64, tpu.core_type = #tpu.core_type<tc>} {
    %c0 = arith.constant 0 : index
    %c0_0 = arith.constant 0 : index
    %0 = vector.load %arg0[%c0, %c0_0] : memref<64x1xf32, #tpu.memory_space<vmem>>, vector<64x1xf32>
    %c0_1 = arith.constant 0 : index
    %c0_2 = arith.constant 0 : index
    %1 = vector.load %arg1[%c0_1, %c0_2] : memref<1x128xf32, #tpu.memory_space<vmem>>, vector<1x128xf32>
    %2 = vector.broadcast %0 : vector<64x1xf32> to vector<64x128xf32>
    %3 = vector.broadcast %1 : vector<1x128xf32> to vector<64x128xf32>
    %4 = arith.mulf %2, %3 : vector<64x128xf32>
    %c0_3 = arith.constant 0 : index
    %c0_4 = arith.constant 0 : index
    %5 = vector.load %arg3[%c0_3, %c0_4] : memref<1x128xf32, #tpu.memory_space<vmem>>, vector<1x128xf32>
    %6 = vector.broadcast %5 : vector<1x128xf32> to vector<64x128xf32>
    %7 = arith.addf %4, %6 : vector<64x128xf32>
    %cst = arith.constant 0.000000e+00 : f32
    %8 = vector.broadcast %cst : f32 to vector<8x32xf32>
    %9 = vector.extract_strided_slice %7 {offsets = [0, 0], sizes = [8, 128], strides = [1, 1]} : vector<64x128xf32> to vector<8x128xf32>
    %c0_5 = arith.constant 0 : index
    %c0_6 = arith.constant 0 : index
    %10 = vector.load %arg2[%c0_5, %c0_6] : memref<32x128xf32, #tpu.memory_space<vmem>>, vector<32x128xf32>
    %cst_7 = arith.constant dense<0.000000e+00> : vector<8x128xf32>
    %11 = tpu.matmul %8, %10, %cst_7 {dimension_numbers = #tpu.dot_dimension_numbers<[1], [0], [0], [1], [0, 0, 1, 1], [], []>} : vector<8x32xf32>, vector<32x128xf32>, vector<8x128xf32> -> vector<8x128xf32>
    %12 = arith.addf %9, %11 : vector<8x128xf32>
    %13 = arith.negf %12 : vector<8x128xf32>
    %14 = math.exp %13 : vector<8x128xf32>
    %cst_8 = arith.constant 1.000000e+00 : f32
    %15 = vector.broadcast %cst_8 : f32 to vector<8x128xf32>
    %16 = arith.addf %15, %14 : vector<8x128xf32>
    %17 = arith.divf %15, %16 : vector<8x128xf32>
    %18 = math.tanh %12 : vector<8x128xf32>
    %19 = vector.extract_strided_slice %17 {offsets = [0, 0], sizes = [8, 32], strides = [1, 1]} : vector<8x128xf32> to vector<8x32xf32>
    %20 = vector.extract_strided_slice %17 {offsets = [0, 32], sizes = [8, 32], strides = [1, 1]} : vector<8x128xf32> to vector<8x32xf32>
    %21 = vector.extract_strided_slice %18 {offsets = [0, 64], sizes = [8, 32], strides = [1, 1]} : vector<8x128xf32> to vector<8x32xf32>
    %22 = vector.extract_strided_slice %17 {offsets = [0, 96], sizes = [8, 32], strides = [1, 1]} : vector<8x128xf32> to vector<8x32xf32>
    %23 = arith.mulf %20, %8 : vector<8x32xf32>
    %24 = arith.mulf %19, %21 : vector<8x32xf32>
    %25 = arith.addf %23, %24 : vector<8x32xf32>
    %26 = math.tanh %25 : vector<8x32xf32>
    %27 = arith.mulf %22, %26 : vector<8x32xf32>
    %28 = tpu.concatenate %27, %8 in 1 : vector<8x32xf32>, vector<8x32xf32> -> vector<8x64xf32>
    %c0_9 = arith.constant 0 : index
    %c0_10 = arith.constant 0 : index
    %c0_11 = arith.constant 0 : index
    %29 = vector.load %arg4[%c0_9, %c0_10, %c0_11] : memref<1x64x128xf32, #tpu.memory_space<vmem>>, vector<1x64x128xf32>
    %30 = vector.shape_cast %29 : vector<1x64x128xf32> to vector<64x128xf32>
    %cst_12 = arith.constant dense<0.000000e+00> : vector<8x128xf32>
    %31 = tpu.matmul %28, %30, %cst_12 {dimension_numbers = #tpu.dot_dimension_numbers<[1], [0], [0], [1], [0, 0, 1, 1], [], []>} : vector<8x64xf32>, vector<64x128xf32>, vector<8x128xf32> -> vector<8x128xf32>
    %c0_13 = arith.constant 0 : index
    %c0_14 = arith.constant 0 : index
    %c0_15 = arith.constant 0 : index
    %32 = vector.load %arg5[%c0_13, %c0_14, %c0_15] : memref<1x1x128xf32, #tpu.memory_space<vmem>>, vector<1x1x128xf32>
    %33 = vector.shape_cast %32 : vector<1x1x128xf32> to vector<1x128xf32>
    %34 = vector.broadcast %33 : vector<1x128xf32> to vector<8x128xf32>
    %35 = arith.addf %31, %34 : vector<8x128xf32>
    %36 = arith.negf %35 : vector<8x128xf32>
    %37 = math.exp %36 : vector<8x128xf32>
    %cst_16 = arith.constant 1.000000e+00 : f32
    %38 = vector.broadcast %cst_16 : f32 to vector<8x128xf32>
    %39 = arith.addf %38, %37 : vector<8x128xf32>
    %40 = arith.divf %38, %39 : vector<8x128xf32>
    %41 = math.tanh %35 : vector<8x128xf32>
    %42 = vector.extract_strided_slice %40 {offsets = [0, 0], sizes = [8, 32], strides = [1, 1]} : vector<8x128xf32> to vector<8x32xf32>
    %43 = vector.extract_strided_slice %40 {offsets = [0, 32], sizes = [8, 32], strides = [1, 1]} : vector<8x128xf32> to vector<8x32xf32>
    %44 = vector.extract_strided_slice %41 {offsets = [0, 64], sizes = [8, 32], strides = [1, 1]} : vector<8x128xf32> to vector<8x32xf32>
    %45 = vector.extract_strided_slice %40 {offsets = [0, 96], sizes = [8, 32], strides = [1, 1]} : vector<8x128xf32> to vector<8x32xf32>
    %46 = arith.mulf %43, %8 : vector<8x32xf32>
    %47 = arith.mulf %42, %44 : vector<8x32xf32>
    %48 = arith.addf %46, %47 : vector<8x32xf32>
    %49 = math.tanh %48 : vector<8x32xf32>
    %50 = arith.mulf %45, %49 : vector<8x32xf32>
    %51 = vector.extract_strided_slice %7 {offsets = [8, 0], sizes = [8, 128], strides = [1, 1]} : vector<64x128xf32> to vector<8x128xf32>
    %c0_17 = arith.constant 0 : index
    %c0_18 = arith.constant 0 : index
    %52 = vector.load %arg2[%c0_17, %c0_18] : memref<32x128xf32, #tpu.memory_space<vmem>>, vector<32x128xf32>
    %cst_19 = arith.constant dense<0.000000e+00> : vector<8x128xf32>
    %53 = tpu.matmul %27, %52, %cst_19 {dimension_numbers = #tpu.dot_dimension_numbers<[1], [0], [0], [1], [0, 0, 1, 1], [], []>} : vector<8x32xf32>, vector<32x128xf32>, vector<8x128xf32> -> vector<8x128xf32>
    %54 = arith.addf %51, %53 : vector<8x128xf32>
    %55 = arith.negf %54 : vector<8x128xf32>
    %56 = math.exp %55 : vector<8x128xf32>
    %cst_20 = arith.constant 1.000000e+00 : f32
    %57 = vector.broadcast %cst_20 : f32 to vector<8x128xf32>
    %58 = arith.addf %57, %56 : vector<8x128xf32>
    %59 = arith.divf %57, %58 : vector<8x128xf32>
    %60 = math.tanh %54 : vector<8x128xf32>
    %61 = vector.extract_strided_slice %59 {offsets = [0, 0], sizes = [8, 32], strides = [1, 1]} : vector<8x128xf32> to vector<8x32xf32>
    %62 = vector.extract_strided_slice %59 {offsets = [0, 32], sizes = [8, 32], strides = [1, 1]} : vector<8x128xf32> to vector<8x32xf32>
    %63 = vector.extract_strided_slice %60 {offsets = [0, 64], sizes = [8, 32], strides = [1, 1]} : vector<8x128xf32> to vector<8x32xf32>
    %64 = vector.extract_strided_slice %59 {offsets = [0, 96], sizes = [8, 32], strides = [1, 1]} : vector<8x128xf32> to vector<8x32xf32>
    %65 = arith.mulf %62, %25 : vector<8x32xf32>
    %66 = arith.mulf %61, %63 : vector<8x32xf32>
    %67 = arith.addf %65, %66 : vector<8x32xf32>
    %68 = math.tanh %67 : vector<8x32xf32>
    %69 = arith.mulf %64, %68 : vector<8x32xf32>
    %70 = tpu.concatenate %69, %50 in 1 : vector<8x32xf32>, vector<8x32xf32> -> vector<8x64xf32>
    %c0_21 = arith.constant 0 : index
    %c0_22 = arith.constant 0 : index
    %c0_23 = arith.constant 0 : index
    %71 = vector.load %arg4[%c0_21, %c0_22, %c0_23] : memref<1x64x128xf32, #tpu.memory_space<vmem>>, vector<1x64x128xf32>
    %72 = vector.shape_cast %71 : vector<1x64x128xf32> to vector<64x128xf32>
    %cst_24 = arith.constant dense<0.000000e+00> : vector<8x128xf32>
    %73 = tpu.matmul %70, %72, %cst_24 {dimension_numbers = #tpu.dot_dimension_numbers<[1], [0], [0], [1], [0, 0, 1, 1], [], []>} : vector<8x64xf32>, vector<64x128xf32>, vector<8x128xf32> -> vector<8x128xf32>
    %c0_25 = arith.constant 0 : index
    %c0_26 = arith.constant 0 : index
    %c0_27 = arith.constant 0 : index
    %74 = vector.load %arg5[%c0_25, %c0_26, %c0_27] : memref<1x1x128xf32, #tpu.memory_space<vmem>>, vector<1x1x128xf32>
    %75 = vector.shape_cast %74 : vector<1x1x128xf32> to vector<1x128xf32>
    %76 = vector.broadcast %75 : vector<1x128xf32> to vector<8x128xf32>
    %77 = arith.addf %73, %76 : vector<8x128xf32>
    %78 = arith.negf %77 : vector<8x128xf32>
    %79 = math.exp %78 : vector<8x128xf32>
    %cst_28 = arith.constant 1.000000e+00 : f32
    %80 = vector.broadcast %cst_28 : f32 to vector<8x128xf32>
    %81 = arith.addf %80, %79 : vector<8x128xf32>
    %82 = arith.divf %80, %81 : vector<8x128xf32>
    %83 = math.tanh %77 : vector<8x128xf32>
    %84 = vector.extract_strided_slice %82 {offsets = [0, 0], sizes = [8, 32], strides = [1, 1]} : vector<8x128xf32> to vector<8x32xf32>
    %85 = vector.extract_strided_slice %82 {offsets = [0, 32], sizes = [8, 32], strides = [1, 1]} : vector<8x128xf32> to vector<8x32xf32>
    %86 = vector.extract_strided_slice %83 {offsets = [0, 64], sizes = [8, 32], strides = [1, 1]} : vector<8x128xf32> to vector<8x32xf32>
    %87 = vector.extract_strided_slice %82 {offsets = [0, 96], sizes = [8, 32], strides = [1, 1]} : vector<8x128xf32> to vector<8x32xf32>
    %88 = arith.mulf %85, %48 : vector<8x32xf32>
    %89 = arith.mulf %84, %86 : vector<8x32xf32>
    %90 = arith.addf %88, %89 : vector<8x32xf32>
    %91 = math.tanh %90 : vector<8x32xf32>
    %92 = arith.mulf %87, %91 : vector<8x32xf32>
    %93 = vector.extract_strided_slice %7 {offsets = [16, 0], sizes = [8, 128], strides = [1, 1]} : vector<64x128xf32> to vector<8x128xf32>
    %c0_29 = arith.constant 0 : index
    %c0_30 = arith.constant 0 : index
    %94 = vector.load %arg2[%c0_29, %c0_30] : memref<32x128xf32, #tpu.memory_space<vmem>>, vector<32x128xf32>
    %cst_31 = arith.constant dense<0.000000e+00> : vector<8x128xf32>
    %95 = tpu.matmul %69, %94, %cst_31 {dimension_numbers = #tpu.dot_dimension_numbers<[1], [0], [0], [1], [0, 0, 1, 1], [], []>} : vector<8x32xf32>, vector<32x128xf32>, vector<8x128xf32> -> vector<8x128xf32>
    %96 = arith.addf %93, %95 : vector<8x128xf32>
    %97 = arith.negf %96 : vector<8x128xf32>
    %98 = math.exp %97 : vector<8x128xf32>
    %cst_32 = arith.constant 1.000000e+00 : f32
    %99 = vector.broadcast %cst_32 : f32 to vector<8x128xf32>
    %100 = arith.addf %99, %98 : vector<8x128xf32>
    %101 = arith.divf %99, %100 : vector<8x128xf32>
    %102 = math.tanh %96 : vector<8x128xf32>
    %103 = vector.extract_strided_slice %101 {offsets = [0, 0], sizes = [8, 32], strides = [1, 1]} : vector<8x128xf32> to vector<8x32xf32>
    %104 = vector.extract_strided_slice %101 {offsets = [0, 32], sizes = [8, 32], strides = [1, 1]} : vector<8x128xf32> to vector<8x32xf32>
    %105 = vector.extract_strided_slice %102 {offsets = [0, 64], sizes = [8, 32], strides = [1, 1]} : vector<8x128xf32> to vector<8x32xf32>
    %106 = vector.extract_strided_slice %101 {offsets = [0, 96], sizes = [8, 32], strides = [1, 1]} : vector<8x128xf32> to vector<8x32xf32>
    %107 = arith.mulf %104, %67 : vector<8x32xf32>
    %108 = arith.mulf %103, %105 : vector<8x32xf32>
    %109 = arith.addf %107, %108 : vector<8x32xf32>
    %110 = math.tanh %109 : vector<8x32xf32>
    %111 = arith.mulf %106, %110 : vector<8x32xf32>
    %112 = tpu.concatenate %111, %92 in 1 : vector<8x32xf32>, vector<8x32xf32> -> vector<8x64xf32>
    %c0_33 = arith.constant 0 : index
    %c0_34 = arith.constant 0 : index
    %c0_35 = arith.constant 0 : index
    %113 = vector.load %arg4[%c0_33, %c0_34, %c0_35] : memref<1x64x128xf32, #tpu.memory_space<vmem>>, vector<1x64x128xf32>
    %114 = vector.shape_cast %113 : vector<1x64x128xf32> to vector<64x128xf32>
    %cst_36 = arith.constant dense<0.000000e+00> : vector<8x128xf32>
    %115 = tpu.matmul %112, %114, %cst_36 {dimension_numbers = #tpu.dot_dimension_numbers<[1], [0], [0], [1], [0, 0, 1, 1], [], []>} : vector<8x64xf32>, vector<64x128xf32>, vector<8x128xf32> -> vector<8x128xf32>
    %c0_37 = arith.constant 0 : index
    %c0_38 = arith.constant 0 : index
    %c0_39 = arith.constant 0 : index
    %116 = vector.load %arg5[%c0_37, %c0_38, %c0_39] : memref<1x1x128xf32, #tpu.memory_space<vmem>>, vector<1x1x128xf32>
    %117 = vector.shape_cast %116 : vector<1x1x128xf32> to vector<1x128xf32>
    %118 = vector.broadcast %117 : vector<1x128xf32> to vector<8x128xf32>
    %119 = arith.addf %115, %118 : vector<8x128xf32>
    %120 = arith.negf %119 : vector<8x128xf32>
    %121 = math.exp %120 : vector<8x128xf32>
    %cst_40 = arith.constant 1.000000e+00 : f32
    %122 = vector.broadcast %cst_40 : f32 to vector<8x128xf32>
    %123 = arith.addf %122, %121 : vector<8x128xf32>
    %124 = arith.divf %122, %123 : vector<8x128xf32>
    %125 = math.tanh %119 : vector<8x128xf32>
    %126 = vector.extract_strided_slice %124 {offsets = [0, 0], sizes = [8, 32], strides = [1, 1]} : vector<8x128xf32> to vector<8x32xf32>
    %127 = vector.extract_strided_slice %124 {offsets = [0, 32], sizes = [8, 32], strides = [1, 1]} : vector<8x128xf32> to vector<8x32xf32>
    %128 = vector.extract_strided_slice %125 {offsets = [0, 64], sizes = [8, 32], strides = [1, 1]} : vector<8x128xf32> to vector<8x32xf32>
    %129 = vector.extract_strided_slice %124 {offsets = [0, 96], sizes = [8, 32], strides = [1, 1]} : vector<8x128xf32> to vector<8x32xf32>
    %130 = arith.mulf %127, %90 : vector<8x32xf32>
    %131 = arith.mulf %126, %128 : vector<8x32xf32>
    %132 = arith.addf %130, %131 : vector<8x32xf32>
    %133 = math.tanh %132 : vector<8x32xf32>
    %134 = arith.mulf %129, %133 : vector<8x32xf32>
    %135 = vector.extract_strided_slice %7 {offsets = [24, 0], sizes = [8, 128], strides = [1, 1]} : vector<64x128xf32> to vector<8x128xf32>
    %c0_41 = arith.constant 0 : index
    %c0_42 = arith.constant 0 : index
    %136 = vector.load %arg2[%c0_41, %c0_42] : memref<32x128xf32, #tpu.memory_space<vmem>>, vector<32x128xf32>
    %cst_43 = arith.constant dense<0.000000e+00> : vector<8x128xf32>
    %137 = tpu.matmul %111, %136, %cst_43 {dimension_numbers = #tpu.dot_dimension_numbers<[1], [0], [0], [1], [0, 0, 1, 1], [], []>} : vector<8x32xf32>, vector<32x128xf32>, vector<8x128xf32> -> vector<8x128xf32>
    %138 = arith.addf %135, %137 : vector<8x128xf32>
    %139 = arith.negf %138 : vector<8x128xf32>
    %140 = math.exp %139 : vector<8x128xf32>
    %cst_44 = arith.constant 1.000000e+00 : f32
    %141 = vector.broadcast %cst_44 : f32 to vector<8x128xf32>
    %142 = arith.addf %141, %140 : vector<8x128xf32>
    %143 = arith.divf %141, %142 : vector<8x128xf32>
    %144 = math.tanh %138 : vector<8x128xf32>
    %145 = vector.extract_strided_slice %143 {offsets = [0, 0], sizes = [8, 32], strides = [1, 1]} : vector<8x128xf32> to vector<8x32xf32>
    %146 = vector.extract_strided_slice %143 {offsets = [0, 32], sizes = [8, 32], strides = [1, 1]} : vector<8x128xf32> to vector<8x32xf32>
    %147 = vector.extract_strided_slice %144 {offsets = [0, 64], sizes = [8, 32], strides = [1, 1]} : vector<8x128xf32> to vector<8x32xf32>
    %148 = vector.extract_strided_slice %143 {offsets = [0, 96], sizes = [8, 32], strides = [1, 1]} : vector<8x128xf32> to vector<8x32xf32>
    %149 = arith.mulf %146, %109 : vector<8x32xf32>
    %150 = arith.mulf %145, %147 : vector<8x32xf32>
    %151 = arith.addf %149, %150 : vector<8x32xf32>
    %152 = math.tanh %151 : vector<8x32xf32>
    %153 = arith.mulf %148, %152 : vector<8x32xf32>
    %154 = tpu.concatenate %153, %134 in 1 : vector<8x32xf32>, vector<8x32xf32> -> vector<8x64xf32>
    %c0_45 = arith.constant 0 : index
    %c0_46 = arith.constant 0 : index
    %c0_47 = arith.constant 0 : index
    %155 = vector.load %arg4[%c0_45, %c0_46, %c0_47] : memref<1x64x128xf32, #tpu.memory_space<vmem>>, vector<1x64x128xf32>
    %156 = vector.shape_cast %155 : vector<1x64x128xf32> to vector<64x128xf32>
    %cst_48 = arith.constant dense<0.000000e+00> : vector<8x128xf32>
    %157 = tpu.matmul %154, %156, %cst_48 {dimension_numbers = #tpu.dot_dimension_numbers<[1], [0], [0], [1], [0, 0, 1, 1], [], []>} : vector<8x64xf32>, vector<64x128xf32>, vector<8x128xf32> -> vector<8x128xf32>
    %c0_49 = arith.constant 0 : index
    %c0_50 = arith.constant 0 : index
    %c0_51 = arith.constant 0 : index
    %158 = vector.load %arg5[%c0_49, %c0_50, %c0_51] : memref<1x1x128xf32, #tpu.memory_space<vmem>>, vector<1x1x128xf32>
    %159 = vector.shape_cast %158 : vector<1x1x128xf32> to vector<1x128xf32>
    %160 = vector.broadcast %159 : vector<1x128xf32> to vector<8x128xf32>
    %161 = arith.addf %157, %160 : vector<8x128xf32>
    %162 = arith.negf %161 : vector<8x128xf32>
    %163 = math.exp %162 : vector<8x128xf32>
    %cst_52 = arith.constant 1.000000e+00 : f32
    %164 = vector.broadcast %cst_52 : f32 to vector<8x128xf32>
    %165 = arith.addf %164, %163 : vector<8x128xf32>
    %166 = arith.divf %164, %165 : vector<8x128xf32>
    %167 = math.tanh %161 : vector<8x128xf32>
    %168 = vector.extract_strided_slice %166 {offsets = [0, 0], sizes = [8, 32], strides = [1, 1]} : vector<8x128xf32> to vector<8x32xf32>
    %169 = vector.extract_strided_slice %166 {offsets = [0, 32], sizes = [8, 32], strides = [1, 1]} : vector<8x128xf32> to vector<8x32xf32>
    %170 = vector.extract_strided_slice %167 {offsets = [0, 64], sizes = [8, 32], strides = [1, 1]} : vector<8x128xf32> to vector<8x32xf32>
    %171 = vector.extract_strided_slice %166 {offsets = [0, 96], sizes = [8, 32], strides = [1, 1]} : vector<8x128xf32> to vector<8x32xf32>
    %172 = arith.mulf %169, %132 : vector<8x32xf32>
    %173 = arith.mulf %168, %170 : vector<8x32xf32>
    %174 = arith.addf %172, %173 : vector<8x32xf32>
    %175 = math.tanh %174 : vector<8x32xf32>
    %176 = arith.mulf %171, %175 : vector<8x32xf32>
    %177 = vector.extract_strided_slice %7 {offsets = [32, 0], sizes = [8, 128], strides = [1, 1]} : vector<64x128xf32> to vector<8x128xf32>
    %c0_53 = arith.constant 0 : index
    %c0_54 = arith.constant 0 : index
    %178 = vector.load %arg2[%c0_53, %c0_54] : memref<32x128xf32, #tpu.memory_space<vmem>>, vector<32x128xf32>
    %cst_55 = arith.constant dense<0.000000e+00> : vector<8x128xf32>
    %179 = tpu.matmul %153, %178, %cst_55 {dimension_numbers = #tpu.dot_dimension_numbers<[1], [0], [0], [1], [0, 0, 1, 1], [], []>} : vector<8x32xf32>, vector<32x128xf32>, vector<8x128xf32> -> vector<8x128xf32>
    %180 = arith.addf %177, %179 : vector<8x128xf32>
    %181 = arith.negf %180 : vector<8x128xf32>
    %182 = math.exp %181 : vector<8x128xf32>
    %cst_56 = arith.constant 1.000000e+00 : f32
    %183 = vector.broadcast %cst_56 : f32 to vector<8x128xf32>
    %184 = arith.addf %183, %182 : vector<8x128xf32>
    %185 = arith.divf %183, %184 : vector<8x128xf32>
    %186 = math.tanh %180 : vector<8x128xf32>
    %187 = vector.extract_strided_slice %185 {offsets = [0, 0], sizes = [8, 32], strides = [1, 1]} : vector<8x128xf32> to vector<8x32xf32>
    %188 = vector.extract_strided_slice %185 {offsets = [0, 32], sizes = [8, 32], strides = [1, 1]} : vector<8x128xf32> to vector<8x32xf32>
    %189 = vector.extract_strided_slice %186 {offsets = [0, 64], sizes = [8, 32], strides = [1, 1]} : vector<8x128xf32> to vector<8x32xf32>
    %190 = vector.extract_strided_slice %185 {offsets = [0, 96], sizes = [8, 32], strides = [1, 1]} : vector<8x128xf32> to vector<8x32xf32>
    %191 = arith.mulf %188, %151 : vector<8x32xf32>
    %192 = arith.mulf %187, %189 : vector<8x32xf32>
    %193 = arith.addf %191, %192 : vector<8x32xf32>
    %194 = math.tanh %193 : vector<8x32xf32>
    %195 = arith.mulf %190, %194 : vector<8x32xf32>
    %196 = tpu.concatenate %195, %176 in 1 : vector<8x32xf32>, vector<8x32xf32> -> vector<8x64xf32>
    %c0_57 = arith.constant 0 : index
    %c0_58 = arith.constant 0 : index
    %c0_59 = arith.constant 0 : index
    %197 = vector.load %arg4[%c0_57, %c0_58, %c0_59] : memref<1x64x128xf32, #tpu.memory_space<vmem>>, vector<1x64x128xf32>
    %198 = vector.shape_cast %197 : vector<1x64x128xf32> to vector<64x128xf32>
    %cst_60 = arith.constant dense<0.000000e+00> : vector<8x128xf32>
    %199 = tpu.matmul %196, %198, %cst_60 {dimension_numbers = #tpu.dot_dimension_numbers<[1], [0], [0], [1], [0, 0, 1, 1], [], []>} : vector<8x64xf32>, vector<64x128xf32>, vector<8x128xf32> -> vector<8x128xf32>
    %c0_61 = arith.constant 0 : index
    %c0_62 = arith.constant 0 : index
    %c0_63 = arith.constant 0 : index
    %200 = vector.load %arg5[%c0_61, %c0_62, %c0_63] : memref<1x1x128xf32, #tpu.memory_space<vmem>>, vector<1x1x128xf32>
    %201 = vector.shape_cast %200 : vector<1x1x128xf32> to vector<1x128xf32>
    %202 = vector.broadcast %201 : vector<1x128xf32> to vector<8x128xf32>
    %203 = arith.addf %199, %202 : vector<8x128xf32>
    %204 = arith.negf %203 : vector<8x128xf32>
    %205 = math.exp %204 : vector<8x128xf32>
    %cst_64 = arith.constant 1.000000e+00 : f32
    %206 = vector.broadcast %cst_64 : f32 to vector<8x128xf32>
    %207 = arith.addf %206, %205 : vector<8x128xf32>
    %208 = arith.divf %206, %207 : vector<8x128xf32>
    %209 = math.tanh %203 : vector<8x128xf32>
    %210 = vector.extract_strided_slice %208 {offsets = [0, 0], sizes = [8, 32], strides = [1, 1]} : vector<8x128xf32> to vector<8x32xf32>
    %211 = vector.extract_strided_slice %208 {offsets = [0, 32], sizes = [8, 32], strides = [1, 1]} : vector<8x128xf32> to vector<8x32xf32>
    %212 = vector.extract_strided_slice %209 {offsets = [0, 64], sizes = [8, 32], strides = [1, 1]} : vector<8x128xf32> to vector<8x32xf32>
    %213 = vector.extract_strided_slice %208 {offsets = [0, 96], sizes = [8, 32], strides = [1, 1]} : vector<8x128xf32> to vector<8x32xf32>
    %214 = arith.mulf %211, %174 : vector<8x32xf32>
    %215 = arith.mulf %210, %212 : vector<8x32xf32>
    %216 = arith.addf %214, %215 : vector<8x32xf32>
    %217 = math.tanh %216 : vector<8x32xf32>
    %218 = arith.mulf %213, %217 : vector<8x32xf32>
    %219 = vector.extract_strided_slice %7 {offsets = [40, 0], sizes = [8, 128], strides = [1, 1]} : vector<64x128xf32> to vector<8x128xf32>
    %c0_65 = arith.constant 0 : index
    %c0_66 = arith.constant 0 : index
    %220 = vector.load %arg2[%c0_65, %c0_66] : memref<32x128xf32, #tpu.memory_space<vmem>>, vector<32x128xf32>
    %cst_67 = arith.constant dense<0.000000e+00> : vector<8x128xf32>
    %221 = tpu.matmul %195, %220, %cst_67 {dimension_numbers = #tpu.dot_dimension_numbers<[1], [0], [0], [1], [0, 0, 1, 1], [], []>} : vector<8x32xf32>, vector<32x128xf32>, vector<8x128xf32> -> vector<8x128xf32>
    %222 = arith.addf %219, %221 : vector<8x128xf32>
    %223 = arith.negf %222 : vector<8x128xf32>
    %224 = math.exp %223 : vector<8x128xf32>
    %cst_68 = arith.constant 1.000000e+00 : f32
    %225 = vector.broadcast %cst_68 : f32 to vector<8x128xf32>
    %226 = arith.addf %225, %224 : vector<8x128xf32>
    %227 = arith.divf %225, %226 : vector<8x128xf32>
    %228 = math.tanh %222 : vector<8x128xf32>
    %229 = vector.extract_strided_slice %227 {offsets = [0, 0], sizes = [8, 32], strides = [1, 1]} : vector<8x128xf32> to vector<8x32xf32>
    %230 = vector.extract_strided_slice %227 {offsets = [0, 32], sizes = [8, 32], strides = [1, 1]} : vector<8x128xf32> to vector<8x32xf32>
    %231 = vector.extract_strided_slice %228 {offsets = [0, 64], sizes = [8, 32], strides = [1, 1]} : vector<8x128xf32> to vector<8x32xf32>
    %232 = vector.extract_strided_slice %227 {offsets = [0, 96], sizes = [8, 32], strides = [1, 1]} : vector<8x128xf32> to vector<8x32xf32>
    %233 = arith.mulf %230, %193 : vector<8x32xf32>
    %234 = arith.mulf %229, %231 : vector<8x32xf32>
    %235 = arith.addf %233, %234 : vector<8x32xf32>
    %236 = math.tanh %235 : vector<8x32xf32>
    %237 = arith.mulf %232, %236 : vector<8x32xf32>
    %238 = tpu.concatenate %237, %218 in 1 : vector<8x32xf32>, vector<8x32xf32> -> vector<8x64xf32>
    %c0_69 = arith.constant 0 : index
    %c0_70 = arith.constant 0 : index
    %c0_71 = arith.constant 0 : index
    %239 = vector.load %arg4[%c0_69, %c0_70, %c0_71] : memref<1x64x128xf32, #tpu.memory_space<vmem>>, vector<1x64x128xf32>
    %240 = vector.shape_cast %239 : vector<1x64x128xf32> to vector<64x128xf32>
    %cst_72 = arith.constant dense<0.000000e+00> : vector<8x128xf32>
    %241 = tpu.matmul %238, %240, %cst_72 {dimension_numbers = #tpu.dot_dimension_numbers<[1], [0], [0], [1], [0, 0, 1, 1], [], []>} : vector<8x64xf32>, vector<64x128xf32>, vector<8x128xf32> -> vector<8x128xf32>
    %c0_73 = arith.constant 0 : index
    %c0_74 = arith.constant 0 : index
    %c0_75 = arith.constant 0 : index
    %242 = vector.load %arg5[%c0_73, %c0_74, %c0_75] : memref<1x1x128xf32, #tpu.memory_space<vmem>>, vector<1x1x128xf32>
    %243 = vector.shape_cast %242 : vector<1x1x128xf32> to vector<1x128xf32>
    %244 = vector.broadcast %243 : vector<1x128xf32> to vector<8x128xf32>
    %245 = arith.addf %241, %244 : vector<8x128xf32>
    %246 = arith.negf %245 : vector<8x128xf32>
    %247 = math.exp %246 : vector<8x128xf32>
    %cst_76 = arith.constant 1.000000e+00 : f32
    %248 = vector.broadcast %cst_76 : f32 to vector<8x128xf32>
    %249 = arith.addf %248, %247 : vector<8x128xf32>
    %250 = arith.divf %248, %249 : vector<8x128xf32>
    %251 = math.tanh %245 : vector<8x128xf32>
    %252 = vector.extract_strided_slice %250 {offsets = [0, 0], sizes = [8, 32], strides = [1, 1]} : vector<8x128xf32> to vector<8x32xf32>
    %253 = vector.extract_strided_slice %250 {offsets = [0, 32], sizes = [8, 32], strides = [1, 1]} : vector<8x128xf32> to vector<8x32xf32>
    %254 = vector.extract_strided_slice %251 {offsets = [0, 64], sizes = [8, 32], strides = [1, 1]} : vector<8x128xf32> to vector<8x32xf32>
    %255 = vector.extract_strided_slice %250 {offsets = [0, 96], sizes = [8, 32], strides = [1, 1]} : vector<8x128xf32> to vector<8x32xf32>
    %256 = arith.mulf %253, %216 : vector<8x32xf32>
    %257 = arith.mulf %252, %254 : vector<8x32xf32>
    %258 = arith.addf %256, %257 : vector<8x32xf32>
    %259 = math.tanh %258 : vector<8x32xf32>
    %260 = arith.mulf %255, %259 : vector<8x32xf32>
    %261 = vector.extract_strided_slice %7 {offsets = [48, 0], sizes = [8, 128], strides = [1, 1]} : vector<64x128xf32> to vector<8x128xf32>
    %c0_77 = arith.constant 0 : index
    %c0_78 = arith.constant 0 : index
    %262 = vector.load %arg2[%c0_77, %c0_78] : memref<32x128xf32, #tpu.memory_space<vmem>>, vector<32x128xf32>
    %cst_79 = arith.constant dense<0.000000e+00> : vector<8x128xf32>
    %263 = tpu.matmul %237, %262, %cst_79 {dimension_numbers = #tpu.dot_dimension_numbers<[1], [0], [0], [1], [0, 0, 1, 1], [], []>} : vector<8x32xf32>, vector<32x128xf32>, vector<8x128xf32> -> vector<8x128xf32>
    %264 = arith.addf %261, %263 : vector<8x128xf32>
    %265 = arith.negf %264 : vector<8x128xf32>
    %266 = math.exp %265 : vector<8x128xf32>
    %cst_80 = arith.constant 1.000000e+00 : f32
    %267 = vector.broadcast %cst_80 : f32 to vector<8x128xf32>
    %268 = arith.addf %267, %266 : vector<8x128xf32>
    %269 = arith.divf %267, %268 : vector<8x128xf32>
    %270 = math.tanh %264 : vector<8x128xf32>
    %271 = vector.extract_strided_slice %269 {offsets = [0, 0], sizes = [8, 32], strides = [1, 1]} : vector<8x128xf32> to vector<8x32xf32>
    %272 = vector.extract_strided_slice %269 {offsets = [0, 32], sizes = [8, 32], strides = [1, 1]} : vector<8x128xf32> to vector<8x32xf32>
    %273 = vector.extract_strided_slice %270 {offsets = [0, 64], sizes = [8, 32], strides = [1, 1]} : vector<8x128xf32> to vector<8x32xf32>
    %274 = vector.extract_strided_slice %269 {offsets = [0, 96], sizes = [8, 32], strides = [1, 1]} : vector<8x128xf32> to vector<8x32xf32>
    %275 = arith.mulf %272, %235 : vector<8x32xf32>
    %276 = arith.mulf %271, %273 : vector<8x32xf32>
    %277 = arith.addf %275, %276 : vector<8x32xf32>
    %278 = math.tanh %277 : vector<8x32xf32>
    %279 = arith.mulf %274, %278 : vector<8x32xf32>
    %280 = tpu.concatenate %279, %260 in 1 : vector<8x32xf32>, vector<8x32xf32> -> vector<8x64xf32>
    %c0_81 = arith.constant 0 : index
    %c0_82 = arith.constant 0 : index
    %c0_83 = arith.constant 0 : index
    %281 = vector.load %arg4[%c0_81, %c0_82, %c0_83] : memref<1x64x128xf32, #tpu.memory_space<vmem>>, vector<1x64x128xf32>
    %282 = vector.shape_cast %281 : vector<1x64x128xf32> to vector<64x128xf32>
    %cst_84 = arith.constant dense<0.000000e+00> : vector<8x128xf32>
    %283 = tpu.matmul %280, %282, %cst_84 {dimension_numbers = #tpu.dot_dimension_numbers<[1], [0], [0], [1], [0, 0, 1, 1], [], []>} : vector<8x64xf32>, vector<64x128xf32>, vector<8x128xf32> -> vector<8x128xf32>
    %c0_85 = arith.constant 0 : index
    %c0_86 = arith.constant 0 : index
    %c0_87 = arith.constant 0 : index
    %284 = vector.load %arg5[%c0_85, %c0_86, %c0_87] : memref<1x1x128xf32, #tpu.memory_space<vmem>>, vector<1x1x128xf32>
    %285 = vector.shape_cast %284 : vector<1x1x128xf32> to vector<1x128xf32>
    %286 = vector.broadcast %285 : vector<1x128xf32> to vector<8x128xf32>
    %287 = arith.addf %283, %286 : vector<8x128xf32>
    %288 = arith.negf %287 : vector<8x128xf32>
    %289 = math.exp %288 : vector<8x128xf32>
    %cst_88 = arith.constant 1.000000e+00 : f32
    %290 = vector.broadcast %cst_88 : f32 to vector<8x128xf32>
    %291 = arith.addf %290, %289 : vector<8x128xf32>
    %292 = arith.divf %290, %291 : vector<8x128xf32>
    %293 = math.tanh %287 : vector<8x128xf32>
    %294 = vector.extract_strided_slice %292 {offsets = [0, 0], sizes = [8, 32], strides = [1, 1]} : vector<8x128xf32> to vector<8x32xf32>
    %295 = vector.extract_strided_slice %292 {offsets = [0, 32], sizes = [8, 32], strides = [1, 1]} : vector<8x128xf32> to vector<8x32xf32>
    %296 = vector.extract_strided_slice %293 {offsets = [0, 64], sizes = [8, 32], strides = [1, 1]} : vector<8x128xf32> to vector<8x32xf32>
    %297 = vector.extract_strided_slice %292 {offsets = [0, 96], sizes = [8, 32], strides = [1, 1]} : vector<8x128xf32> to vector<8x32xf32>
    %298 = arith.mulf %295, %258 : vector<8x32xf32>
    %299 = arith.mulf %294, %296 : vector<8x32xf32>
    %300 = arith.addf %298, %299 : vector<8x32xf32>
    %301 = math.tanh %300 : vector<8x32xf32>
    %302 = arith.mulf %297, %301 : vector<8x32xf32>
    %303 = vector.extract_strided_slice %7 {offsets = [56, 0], sizes = [8, 128], strides = [1, 1]} : vector<64x128xf32> to vector<8x128xf32>
    %c0_89 = arith.constant 0 : index
    %c0_90 = arith.constant 0 : index
    %304 = vector.load %arg2[%c0_89, %c0_90] : memref<32x128xf32, #tpu.memory_space<vmem>>, vector<32x128xf32>
    %cst_91 = arith.constant dense<0.000000e+00> : vector<8x128xf32>
    %305 = tpu.matmul %279, %304, %cst_91 {dimension_numbers = #tpu.dot_dimension_numbers<[1], [0], [0], [1], [0, 0, 1, 1], [], []>} : vector<8x32xf32>, vector<32x128xf32>, vector<8x128xf32> -> vector<8x128xf32>
    %306 = arith.addf %303, %305 : vector<8x128xf32>
    %307 = arith.negf %306 : vector<8x128xf32>
    %308 = math.exp %307 : vector<8x128xf32>
    %cst_92 = arith.constant 1.000000e+00 : f32
    %309 = vector.broadcast %cst_92 : f32 to vector<8x128xf32>
    %310 = arith.addf %309, %308 : vector<8x128xf32>
    %311 = arith.divf %309, %310 : vector<8x128xf32>
    %312 = math.tanh %306 : vector<8x128xf32>
    %313 = vector.extract_strided_slice %311 {offsets = [0, 0], sizes = [8, 32], strides = [1, 1]} : vector<8x128xf32> to vector<8x32xf32>
    %314 = vector.extract_strided_slice %311 {offsets = [0, 32], sizes = [8, 32], strides = [1, 1]} : vector<8x128xf32> to vector<8x32xf32>
    %315 = vector.extract_strided_slice %312 {offsets = [0, 64], sizes = [8, 32], strides = [1, 1]} : vector<8x128xf32> to vector<8x32xf32>
    %316 = vector.extract_strided_slice %311 {offsets = [0, 96], sizes = [8, 32], strides = [1, 1]} : vector<8x128xf32> to vector<8x32xf32>
    %317 = arith.mulf %314, %277 : vector<8x32xf32>
    %318 = arith.mulf %313, %315 : vector<8x32xf32>
    %319 = arith.addf %317, %318 : vector<8x32xf32>
    %320 = math.tanh %319 : vector<8x32xf32>
    %321 = arith.mulf %316, %320 : vector<8x32xf32>
    %322 = tpu.concatenate %321, %302 in 1 : vector<8x32xf32>, vector<8x32xf32> -> vector<8x64xf32>
    %c0_93 = arith.constant 0 : index
    %c0_94 = arith.constant 0 : index
    %c0_95 = arith.constant 0 : index
    %323 = vector.load %arg4[%c0_93, %c0_94, %c0_95] : memref<1x64x128xf32, #tpu.memory_space<vmem>>, vector<1x64x128xf32>
    %324 = vector.shape_cast %323 : vector<1x64x128xf32> to vector<64x128xf32>
    %cst_96 = arith.constant dense<0.000000e+00> : vector<8x128xf32>
    %325 = tpu.matmul %322, %324, %cst_96 {dimension_numbers = #tpu.dot_dimension_numbers<[1], [0], [0], [1], [0, 0, 1, 1], [], []>} : vector<8x64xf32>, vector<64x128xf32>, vector<8x128xf32> -> vector<8x128xf32>
    %c0_97 = arith.constant 0 : index
    %c0_98 = arith.constant 0 : index
    %c0_99 = arith.constant 0 : index
    %326 = vector.load %arg5[%c0_97, %c0_98, %c0_99] : memref<1x1x128xf32, #tpu.memory_space<vmem>>, vector<1x1x128xf32>
    %327 = vector.shape_cast %326 : vector<1x1x128xf32> to vector<1x128xf32>
    %328 = vector.broadcast %327 : vector<1x128xf32> to vector<8x128xf32>
    %329 = arith.addf %325, %328 : vector<8x128xf32>
    %330 = arith.negf %329 : vector<8x128xf32>
    %331 = math.exp %330 : vector<8x128xf32>
    %cst_100 = arith.constant 1.000000e+00 : f32
    %332 = vector.broadcast %cst_100 : f32 to vector<8x128xf32>
    %333 = arith.addf %332, %331 : vector<8x128xf32>
    %334 = arith.divf %332, %333 : vector<8x128xf32>
    %335 = math.tanh %329 : vector<8x128xf32>
    %336 = vector.extract_strided_slice %334 {offsets = [0, 0], sizes = [8, 32], strides = [1, 1]} : vector<8x128xf32> to vector<8x32xf32>
    %337 = vector.extract_strided_slice %334 {offsets = [0, 32], sizes = [8, 32], strides = [1, 1]} : vector<8x128xf32> to vector<8x32xf32>
    %338 = vector.extract_strided_slice %335 {offsets = [0, 64], sizes = [8, 32], strides = [1, 1]} : vector<8x128xf32> to vector<8x32xf32>
    %339 = vector.extract_strided_slice %334 {offsets = [0, 96], sizes = [8, 32], strides = [1, 1]} : vector<8x128xf32> to vector<8x32xf32>
    %340 = arith.mulf %337, %300 : vector<8x32xf32>
    %341 = arith.mulf %336, %338 : vector<8x32xf32>
    %342 = arith.addf %340, %341 : vector<8x32xf32>
    %343 = math.tanh %342 : vector<8x32xf32>
    %344 = arith.mulf %339, %343 : vector<8x32xf32>
    %c0_101 = arith.constant 0 : index
    %c0_102 = arith.constant 0 : index
    %345 = vector.load %arg6[%c0_101, %c0_102] : memref<32x256xf32, #tpu.memory_space<vmem>>, vector<32x256xf32>
    %cst_103 = arith.constant dense<0.000000e+00> : vector<8x256xf32>
    %346 = tpu.matmul %344, %345, %cst_103 {dimension_numbers = #tpu.dot_dimension_numbers<[1], [0], [0], [1], [0, 0, 1, 1], [], []>} : vector<8x32xf32>, vector<32x256xf32>, vector<8x256xf32> -> vector<8x256xf32>
    %c0_104 = arith.constant 0 : index
    %c0_105 = arith.constant 0 : index
    %347 = vector.load %arg7[%c0_104, %c0_105] : memref<1x256xf32, #tpu.memory_space<vmem>>, vector<1x256xf32>
    %348 = vector.broadcast %347 : vector<1x256xf32> to vector<8x256xf32>
    %349 = arith.addf %346, %348 : vector<8x256xf32>
    %350 = tpu.concatenate %321, %321 in 1 : vector<8x32xf32>, vector<8x32xf32> -> vector<8x64xf32>
    %c0_106 = arith.constant 0 : index
    %c0_107 = arith.constant 0 : index
    %351 = vector.load %arg8[%c0_106, %c0_107] : memref<64x256xf32, #tpu.memory_space<vmem>>, vector<64x256xf32>
    %cst_108 = arith.constant dense<0.000000e+00> : vector<8x256xf32>
    %352 = tpu.matmul %350, %351, %cst_108 {dimension_numbers = #tpu.dot_dimension_numbers<[1], [0], [0], [1], [0, 0, 1, 1], [], []>} : vector<8x64xf32>, vector<64x256xf32>, vector<8x256xf32> -> vector<8x256xf32>
    %353 = arith.addf %349, %352 : vector<8x256xf32>
    %354 = arith.negf %353 : vector<8x256xf32>
    %355 = math.exp %354 : vector<8x256xf32>
    %cst_109 = arith.constant 1.000000e+00 : f32
    %356 = vector.broadcast %cst_109 : f32 to vector<8x256xf32>
    %357 = arith.addf %356, %355 : vector<8x256xf32>
    %358 = arith.divf %356, %357 : vector<8x256xf32>
    %359 = math.tanh %353 : vector<8x256xf32>
    %360 = vector.extract_strided_slice %358 {offsets = [0, 0], sizes = [8, 32], strides = [1, 1]} : vector<8x256xf32> to vector<8x32xf32>
    %361 = vector.extract_strided_slice %358 {offsets = [0, 32], sizes = [8, 32], strides = [1, 1]} : vector<8x256xf32> to vector<8x32xf32>
    %362 = vector.extract_strided_slice %359 {offsets = [0, 64], sizes = [8, 32], strides = [1, 1]} : vector<8x256xf32> to vector<8x32xf32>
    %363 = vector.extract_strided_slice %358 {offsets = [0, 96], sizes = [8, 32], strides = [1, 1]} : vector<8x256xf32> to vector<8x32xf32>
    %364 = arith.mulf %361, %319 : vector<8x32xf32>
    %365 = arith.mulf %360, %362 : vector<8x32xf32>
    %366 = arith.addf %364, %365 : vector<8x32xf32>
    %367 = math.tanh %366 : vector<8x32xf32>
    %368 = arith.mulf %363, %367 : vector<8x32xf32>
    %369 = vector.extract_strided_slice %358 {offsets = [0, 128], sizes = [8, 32], strides = [1, 1]} : vector<8x256xf32> to vector<8x32xf32>
    %370 = vector.extract_strided_slice %358 {offsets = [0, 160], sizes = [8, 32], strides = [1, 1]} : vector<8x256xf32> to vector<8x32xf32>
    %371 = vector.extract_strided_slice %359 {offsets = [0, 192], sizes = [8, 32], strides = [1, 1]} : vector<8x256xf32> to vector<8x32xf32>
    %372 = vector.extract_strided_slice %358 {offsets = [0, 224], sizes = [8, 32], strides = [1, 1]} : vector<8x256xf32> to vector<8x32xf32>
    %373 = arith.mulf %370, %319 : vector<8x32xf32>
    %374 = arith.mulf %369, %371 : vector<8x32xf32>
    %375 = arith.addf %373, %374 : vector<8x32xf32>
    %376 = math.tanh %375 : vector<8x32xf32>
    %377 = arith.mulf %372, %376 : vector<8x32xf32>
    %378 = tpu.concatenate %368, %344, %377, %344 in 1 : vector<8x32xf32>, vector<8x32xf32>, vector<8x32xf32>, vector<8x32xf32> -> vector<8x128xf32>
    %c0_110 = arith.constant 0 : index
    %c0_111 = arith.constant 0 : index
    %c0_112 = arith.constant 0 : index
    %379 = vector.load %arg9[%c0_110, %c0_111, %c0_112] : memref<1x128x256xf32, #tpu.memory_space<vmem>>, vector<1x128x256xf32>
    %380 = vector.shape_cast %379 : vector<1x128x256xf32> to vector<128x256xf32>
    %cst_113 = arith.constant dense<0.000000e+00> : vector<8x256xf32>
    %381 = tpu.matmul %378, %380, %cst_113 {dimension_numbers = #tpu.dot_dimension_numbers<[1], [0], [0], [1], [0, 0, 1, 1], [], []>} : vector<8x128xf32>, vector<128x256xf32>, vector<8x256xf32> -> vector<8x256xf32>
    %c0_114 = arith.constant 0 : index
    %c0_115 = arith.constant 0 : index
    %c0_116 = arith.constant 0 : index
    %382 = vector.load %arg10[%c0_114, %c0_115, %c0_116] : memref<1x1x256xf32, #tpu.memory_space<vmem>>, vector<1x1x256xf32>
    %383 = vector.shape_cast %382 : vector<1x1x256xf32> to vector<1x256xf32>
    %384 = vector.broadcast %383 : vector<1x256xf32> to vector<8x256xf32>
    %385 = arith.addf %381, %384 : vector<8x256xf32>
    %386 = arith.negf %385 : vector<8x256xf32>
    %387 = math.exp %386 : vector<8x256xf32>
    %cst_117 = arith.constant 1.000000e+00 : f32
    %388 = vector.broadcast %cst_117 : f32 to vector<8x256xf32>
    %389 = arith.addf %388, %387 : vector<8x256xf32>
    %390 = arith.divf %388, %389 : vector<8x256xf32>
    %391 = math.tanh %385 : vector<8x256xf32>
    %392 = vector.extract_strided_slice %390 {offsets = [0, 0], sizes = [8, 32], strides = [1, 1]} : vector<8x256xf32> to vector<8x32xf32>
    %393 = vector.extract_strided_slice %390 {offsets = [0, 32], sizes = [8, 32], strides = [1, 1]} : vector<8x256xf32> to vector<8x32xf32>
    %394 = vector.extract_strided_slice %391 {offsets = [0, 64], sizes = [8, 32], strides = [1, 1]} : vector<8x256xf32> to vector<8x32xf32>
    %395 = vector.extract_strided_slice %390 {offsets = [0, 96], sizes = [8, 32], strides = [1, 1]} : vector<8x256xf32> to vector<8x32xf32>
    %396 = arith.mulf %393, %342 : vector<8x32xf32>
    %397 = arith.mulf %392, %394 : vector<8x32xf32>
    %398 = arith.addf %396, %397 : vector<8x32xf32>
    %399 = math.tanh %398 : vector<8x32xf32>
    %400 = arith.mulf %395, %399 : vector<8x32xf32>
    %401 = vector.extract_strided_slice %390 {offsets = [0, 128], sizes = [8, 32], strides = [1, 1]} : vector<8x256xf32> to vector<8x32xf32>
    %402 = vector.extract_strided_slice %390 {offsets = [0, 160], sizes = [8, 32], strides = [1, 1]} : vector<8x256xf32> to vector<8x32xf32>
    %403 = vector.extract_strided_slice %391 {offsets = [0, 192], sizes = [8, 32], strides = [1, 1]} : vector<8x256xf32> to vector<8x32xf32>
    %404 = vector.extract_strided_slice %390 {offsets = [0, 224], sizes = [8, 32], strides = [1, 1]} : vector<8x256xf32> to vector<8x32xf32>
    %405 = arith.mulf %402, %342 : vector<8x32xf32>
    %406 = arith.mulf %401, %403 : vector<8x32xf32>
    %407 = arith.addf %405, %406 : vector<8x32xf32>
    %408 = math.tanh %407 : vector<8x32xf32>
    %409 = arith.mulf %404, %408 : vector<8x32xf32>
    %410 = tpu.concatenate %400, %409 in 1 : vector<8x32xf32>, vector<8x32xf32> -> vector<8x64xf32>
    %c0_118 = arith.constant 0 : index
    %c0_119 = arith.constant 0 : index
    %411 = vector.load %arg14[%c0_118, %c0_119] : memref<64x64xf32, #tpu.memory_space<vmem>>, vector<8x64xf32>
    tpu.vector_store %arg14[%c0_118, %c0_119], %410 {strides = array<i32>} : memref<64x64xf32, #tpu.memory_space<vmem>>, vector<8x64xf32>,
    %412 = tpu.concatenate %368, %377 in 1 : vector<8x32xf32>, vector<8x32xf32> -> vector<8x64xf32>
    %c0_120 = arith.constant 0 : index
    %c0_121 = arith.constant 0 : index
    %413 = vector.load %arg8[%c0_120, %c0_121] : memref<64x256xf32, #tpu.memory_space<vmem>>, vector<64x256xf32>
    %cst_122 = arith.constant dense<0.000000e+00> : vector<8x256xf32>
    %414 = tpu.matmul %412, %413, %cst_122 {dimension_numbers = #tpu.dot_dimension_numbers<[1], [0], [0], [1], [0, 0, 1, 1], [], []>} : vector<8x64xf32>, vector<64x256xf32>, vector<8x256xf32> -> vector<8x256xf32>
    %415 = arith.addf %349, %414 : vector<8x256xf32>
    %416 = arith.negf %415 : vector<8x256xf32>
    %417 = math.exp %416 : vector<8x256xf32>
    %cst_123 = arith.constant 1.000000e+00 : f32
    %418 = vector.broadcast %cst_123 : f32 to vector<8x256xf32>
    %419 = arith.addf %418, %417 : vector<8x256xf32>
    %420 = arith.divf %418, %419 : vector<8x256xf32>
    %421 = math.tanh %415 : vector<8x256xf32>
    %422 = vector.extract_strided_slice %420 {offsets = [0, 0], sizes = [8, 32], strides = [1, 1]} : vector<8x256xf32> to vector<8x32xf32>
    %423 = vector.extract_strided_slice %420 {offsets = [0, 32], sizes = [8, 32], strides = [1, 1]} : vector<8x256xf32> to vector<8x32xf32>
    %424 = vector.extract_strided_slice %421 {offsets = [0, 64], sizes = [8, 32], strides = [1, 1]} : vector<8x256xf32> to vector<8x32xf32>
    %425 = vector.extract_strided_slice %420 {offsets = [0, 96], sizes = [8, 32], strides = [1, 1]} : vector<8x256xf32> to vector<8x32xf32>
    %426 = arith.mulf %423, %366 : vector<8x32xf32>
    %427 = arith.mulf %422, %424 : vector<8x32xf32>
    %428 = arith.addf %426, %427 : vector<8x32xf32>
    %429 = math.tanh %428 : vector<8x32xf32>
    %430 = arith.mulf %425, %429 : vector<8x32xf32>
    %431 = vector.extract_strided_slice %420 {offsets = [0, 128], sizes = [8, 32], strides = [1, 1]} : vector<8x256xf32> to vector<8x32xf32>
    %432 = vector.extract_strided_slice %420 {offsets = [0, 160], sizes = [8, 32], strides = [1, 1]} : vector<8x256xf32> to vector<8x32xf32>
    %433 = vector.extract_strided_slice %421 {offsets = [0, 192], sizes = [8, 32], strides = [1, 1]} : vector<8x256xf32> to vector<8x32xf32>
    %434 = vector.extract_strided_slice %420 {offsets = [0, 224], sizes = [8, 32], strides = [1, 1]} : vector<8x256xf32> to vector<8x32xf32>
    %435 = arith.mulf %432, %375 : vector<8x32xf32>
    %436 = arith.mulf %431, %433 : vector<8x32xf32>
    %437 = arith.addf %435, %436 : vector<8x32xf32>
    %438 = math.tanh %437 : vector<8x32xf32>
    %439 = arith.mulf %434, %438 : vector<8x32xf32>
    %440 = tpu.concatenate %430, %400, %439, %409 in 1 : vector<8x32xf32>, vector<8x32xf32>, vector<8x32xf32>, vector<8x32xf32> -> vector<8x128xf32>
    %c0_124 = arith.constant 0 : index
    %c0_125 = arith.constant 0 : index
    %c0_126 = arith.constant 0 : index
    %441 = vector.load %arg9[%c0_124, %c0_125, %c0_126] : memref<1x128x256xf32, #tpu.memory_space<vmem>>, vector<1x128x256xf32>
    %442 = vector.shape_cast %441 : vector<1x128x256xf32> to vector<128x256xf32>
    %cst_127 = arith.constant dense<0.000000e+00> : vector<8x256xf32>
    %443 = tpu.matmul %440, %442, %cst_127 {dimension_numbers = #tpu.dot_dimension_numbers<[1], [0], [0], [1], [0, 0, 1, 1], [], []>} : vector<8x128xf32>, vector<128x256xf32>, vector<8x256xf32> -> vector<8x256xf32>
    %c0_128 = arith.constant 0 : index
    %c0_129 = arith.constant 0 : index
    %c0_130 = arith.constant 0 : index
    %444 = vector.load %arg10[%c0_128, %c0_129, %c0_130] : memref<1x1x256xf32, #tpu.memory_space<vmem>>, vector<1x1x256xf32>
    %445 = vector.shape_cast %444 : vector<1x1x256xf32> to vector<1x256xf32>
    %446 = vector.broadcast %445 : vector<1x256xf32> to vector<8x256xf32>
    %447 = arith.addf %443, %446 : vector<8x256xf32>
    %448 = arith.negf %447 : vector<8x256xf32>
    %449 = math.exp %448 : vector<8x256xf32>
    %cst_131 = arith.constant 1.000000e+00 : f32
    %450 = vector.broadcast %cst_131 : f32 to vector<8x256xf32>
    %451 = arith.addf %450, %449 : vector<8x256xf32>
    %452 = arith.divf %450, %451 : vector<8x256xf32>
    %453 = math.tanh %447 : vector<8x256xf32>
    %454 = vector.extract_strided_slice %452 {offsets = [0, 0], sizes = [8, 32], strides = [1, 1]} : vector<8x256xf32> to vector<8x32xf32>
    %455 = vector.extract_strided_slice %452 {offsets = [0, 32], sizes = [8, 32], strides = [1, 1]} : vector<8x256xf32> to vector<8x32xf32>
    %456 = vector.extract_strided_slice %453 {offsets = [0, 64], sizes = [8, 32], strides = [1, 1]} : vector<8x256xf32> to vector<8x32xf32>
    %457 = vector.extract_strided_slice %452 {offsets = [0, 96], sizes = [8, 32], strides = [1, 1]} : vector<8x256xf32> to vector<8x32xf32>
    %458 = arith.mulf %455, %398 : vector<8x32xf32>
    %459 = arith.mulf %454, %456 : vector<8x32xf32>
    %460 = arith.addf %458, %459 : vector<8x32xf32>
    %461 = math.tanh %460 : vector<8x32xf32>
    %462 = arith.mulf %457, %461 : vector<8x32xf32>
    %463 = vector.extract_strided_slice %452 {offsets = [0, 128], sizes = [8, 32], strides = [1, 1]} : vector<8x256xf32> to vector<8x32xf32>
    %464 = vector.extract_strided_slice %452 {offsets = [0, 160], sizes = [8, 32], strides = [1, 1]} : vector<8x256xf32> to vector<8x32xf32>
    %465 = vector.extract_strided_slice %453 {offsets = [0, 192], sizes = [8, 32], strides = [1, 1]} : vector<8x256xf32> to vector<8x32xf32>
    %466 = vector.extract_strided_slice %452 {offsets = [0, 224], sizes = [8, 32], strides = [1, 1]} : vector<8x256xf32> to vector<8x32xf32>
    %467 = arith.mulf %464, %407 : vector<8x32xf32>
    %468 = arith.mulf %463, %465 : vector<8x32xf32>
    %469 = arith.addf %467, %468 : vector<8x32xf32>
    %470 = math.tanh %469 : vector<8x32xf32>
    %471 = arith.mulf %466, %470 : vector<8x32xf32>
    %472 = tpu.concatenate %462, %471 in 1 : vector<8x32xf32>, vector<8x32xf32> -> vector<8x64xf32>
    %c8 = arith.constant 8 : index
    %c0_132 = arith.constant 0 : index
    %473 = vector.load %arg14[%c8, %c0_132] : memref<64x64xf32, #tpu.memory_space<vmem>>, vector<8x64xf32>
    tpu.vector_store %arg14[%c8, %c0_132], %472 {strides = array<i32>} : memref<64x64xf32, #tpu.memory_space<vmem>>, vector<8x64xf32>,
    %474 = tpu.concatenate %430, %439 in 1 : vector<8x32xf32>, vector<8x32xf32> -> vector<8x64xf32>
    %c0_133 = arith.constant 0 : index
    %c0_134 = arith.constant 0 : index
    %475 = vector.load %arg8[%c0_133, %c0_134] : memref<64x256xf32, #tpu.memory_space<vmem>>, vector<64x256xf32>
    %cst_135 = arith.constant dense<0.000000e+00> : vector<8x256xf32>
    %476 = tpu.matmul %474, %475, %cst_135 {dimension_numbers = #tpu.dot_dimension_numbers<[1], [0], [0], [1], [0, 0, 1, 1], [], []>} : vector<8x64xf32>, vector<64x256xf32>, vector<8x256xf32> -> vector<8x256xf32>
    %477 = arith.addf %349, %476 : vector<8x256xf32>
    %478 = arith.negf %477 : vector<8x256xf32>
    %479 = math.exp %478 : vector<8x256xf32>
    %cst_136 = arith.constant 1.000000e+00 : f32
    %480 = vector.broadcast %cst_136 : f32 to vector<8x256xf32>
    %481 = arith.addf %480, %479 : vector<8x256xf32>
    %482 = arith.divf %480, %481 : vector<8x256xf32>
    %483 = math.tanh %477 : vector<8x256xf32>
    %484 = vector.extract_strided_slice %482 {offsets = [0, 0], sizes = [8, 32], strides = [1, 1]} : vector<8x256xf32> to vector<8x32xf32>
    %485 = vector.extract_strided_slice %482 {offsets = [0, 32], sizes = [8, 32], strides = [1, 1]} : vector<8x256xf32> to vector<8x32xf32>
    %486 = vector.extract_strided_slice %483 {offsets = [0, 64], sizes = [8, 32], strides = [1, 1]} : vector<8x256xf32> to vector<8x32xf32>
    %487 = vector.extract_strided_slice %482 {offsets = [0, 96], sizes = [8, 32], strides = [1, 1]} : vector<8x256xf32> to vector<8x32xf32>
    %488 = arith.mulf %485, %428 : vector<8x32xf32>
    %489 = arith.mulf %484, %486 : vector<8x32xf32>
    %490 = arith.addf %488, %489 : vector<8x32xf32>
    %491 = math.tanh %490 : vector<8x32xf32>
    %492 = arith.mulf %487, %491 : vector<8x32xf32>
    %493 = vector.extract_strided_slice %482 {offsets = [0, 128], sizes = [8, 32], strides = [1, 1]} : vector<8x256xf32> to vector<8x32xf32>
    %494 = vector.extract_strided_slice %482 {offsets = [0, 160], sizes = [8, 32], strides = [1, 1]} : vector<8x256xf32> to vector<8x32xf32>
    %495 = vector.extract_strided_slice %483 {offsets = [0, 192], sizes = [8, 32], strides = [1, 1]} : vector<8x256xf32> to vector<8x32xf32>
    %496 = vector.extract_strided_slice %482 {offsets = [0, 224], sizes = [8, 32], strides = [1, 1]} : vector<8x256xf32> to vector<8x32xf32>
    %497 = arith.mulf %494, %437 : vector<8x32xf32>
    %498 = arith.mulf %493, %495 : vector<8x32xf32>
    %499 = arith.addf %497, %498 : vector<8x32xf32>
    %500 = math.tanh %499 : vector<8x32xf32>
    %501 = arith.mulf %496, %500 : vector<8x32xf32>
    %502 = tpu.concatenate %492, %462, %501, %471 in 1 : vector<8x32xf32>, vector<8x32xf32>, vector<8x32xf32>, vector<8x32xf32> -> vector<8x128xf32>
    %c0_137 = arith.constant 0 : index
    %c0_138 = arith.constant 0 : index
    %c0_139 = arith.constant 0 : index
    %503 = vector.load %arg9[%c0_137, %c0_138, %c0_139] : memref<1x128x256xf32, #tpu.memory_space<vmem>>, vector<1x128x256xf32>
    %504 = vector.shape_cast %503 : vector<1x128x256xf32> to vector<128x256xf32>
    %cst_140 = arith.constant dense<0.000000e+00> : vector<8x256xf32>
    %505 = tpu.matmul %502, %504, %cst_140 {dimension_numbers = #tpu.dot_dimension_numbers<[1], [0], [0], [1], [0, 0, 1, 1], [], []>} : vector<8x128xf32>, vector<128x256xf32>, vector<8x256xf32> -> vector<8x256xf32>
    %c0_141 = arith.constant 0 : index
    %c0_142 = arith.constant 0 : index
    %c0_143 = arith.constant 0 : index
    %506 = vector.load %arg10[%c0_141, %c0_142, %c0_143] : memref<1x1x256xf32, #tpu.memory_space<vmem>>, vector<1x1x256xf32>
    %507 = vector.shape_cast %506 : vector<1x1x256xf32> to vector<1x256xf32>
    %508 = vector.broadcast %507 : vector<1x256xf32> to vector<8x256xf32>
    %509 = arith.addf %505, %508 : vector<8x256xf32>
    %510 = arith.negf %509 : vector<8x256xf32>
    %511 = math.exp %510 : vector<8x256xf32>
    %cst_144 = arith.constant 1.000000e+00 : f32
    %512 = vector.broadcast %cst_144 : f32 to vector<8x256xf32>
    %513 = arith.addf %512, %511 : vector<8x256xf32>
    %514 = arith.divf %512, %513 : vector<8x256xf32>
    %515 = math.tanh %509 : vector<8x256xf32>
    %516 = vector.extract_strided_slice %514 {offsets = [0, 0], sizes = [8, 32], strides = [1, 1]} : vector<8x256xf32> to vector<8x32xf32>
    %517 = vector.extract_strided_slice %514 {offsets = [0, 32], sizes = [8, 32], strides = [1, 1]} : vector<8x256xf32> to vector<8x32xf32>
    %518 = vector.extract_strided_slice %515 {offsets = [0, 64], sizes = [8, 32], strides = [1, 1]} : vector<8x256xf32> to vector<8x32xf32>
    %519 = vector.extract_strided_slice %514 {offsets = [0, 96], sizes = [8, 32], strides = [1, 1]} : vector<8x256xf32> to vector<8x32xf32>
    %520 = arith.mulf %517, %460 : vector<8x32xf32>
    %521 = arith.mulf %516, %518 : vector<8x32xf32>
    %522 = arith.addf %520, %521 : vector<8x32xf32>
    %523 = math.tanh %522 : vector<8x32xf32>
    %524 = arith.mulf %519, %523 : vector<8x32xf32>
    %525 = vector.extract_strided_slice %514 {offsets = [0, 128], sizes = [8, 32], strides = [1, 1]} : vector<8x256xf32> to vector<8x32xf32>
    %526 = vector.extract_strided_slice %514 {offsets = [0, 160], sizes = [8, 32], strides = [1, 1]} : vector<8x256xf32> to vector<8x32xf32>
    %527 = vector.extract_strided_slice %515 {offsets = [0, 192], sizes = [8, 32], strides = [1, 1]} : vector<8x256xf32> to vector<8x32xf32>
    %528 = vector.extract_strided_slice %514 {offsets = [0, 224], sizes = [8, 32], strides = [1, 1]} : vector<8x256xf32> to vector<8x32xf32>
    %529 = arith.mulf %526, %469 : vector<8x32xf32>
    %530 = arith.mulf %525, %527 : vector<8x32xf32>
    %531 = arith.addf %529, %530 : vector<8x32xf32>
    %532 = math.tanh %531 : vector<8x32xf32>
    %533 = arith.mulf %528, %532 : vector<8x32xf32>
    %534 = tpu.concatenate %524, %533 in 1 : vector<8x32xf32>, vector<8x32xf32> -> vector<8x64xf32>
    %c16 = arith.constant 16 : index
    %c0_145 = arith.constant 0 : index
    %535 = vector.load %arg14[%c16, %c0_145] : memref<64x64xf32, #tpu.memory_space<vmem>>, vector<8x64xf32>
    tpu.vector_store %arg14[%c16, %c0_145], %534 {strides = array<i32>} : memref<64x64xf32, #tpu.memory_space<vmem>>, vector<8x64xf32>,
    %536 = tpu.concatenate %492, %501 in 1 : vector<8x32xf32>, vector<8x32xf32> -> vector<8x64xf32>
    %c0_146 = arith.constant 0 : index
    %c0_147 = arith.constant 0 : index
    %537 = vector.load %arg8[%c0_146, %c0_147] : memref<64x256xf32, #tpu.memory_space<vmem>>, vector<64x256xf32>
    %cst_148 = arith.constant dense<0.000000e+00> : vector<8x256xf32>
    %538 = tpu.matmul %536, %537, %cst_148 {dimension_numbers = #tpu.dot_dimension_numbers<[1], [0], [0], [1], [0, 0, 1, 1], [], []>} : vector<8x64xf32>, vector<64x256xf32>, vector<8x256xf32> -> vector<8x256xf32>
    %539 = arith.addf %349, %538 : vector<8x256xf32>
    %540 = arith.negf %539 : vector<8x256xf32>
    %541 = math.exp %540 : vector<8x256xf32>
    %cst_149 = arith.constant 1.000000e+00 : f32
    %542 = vector.broadcast %cst_149 : f32 to vector<8x256xf32>
    %543 = arith.addf %542, %541 : vector<8x256xf32>
    %544 = arith.divf %542, %543 : vector<8x256xf32>
    %545 = math.tanh %539 : vector<8x256xf32>
    %546 = vector.extract_strided_slice %544 {offsets = [0, 0], sizes = [8, 32], strides = [1, 1]} : vector<8x256xf32> to vector<8x32xf32>
    %547 = vector.extract_strided_slice %544 {offsets = [0, 32], sizes = [8, 32], strides = [1, 1]} : vector<8x256xf32> to vector<8x32xf32>
    %548 = vector.extract_strided_slice %545 {offsets = [0, 64], sizes = [8, 32], strides = [1, 1]} : vector<8x256xf32> to vector<8x32xf32>
    %549 = vector.extract_strided_slice %544 {offsets = [0, 96], sizes = [8, 32], strides = [1, 1]} : vector<8x256xf32> to vector<8x32xf32>
    %550 = arith.mulf %547, %490 : vector<8x32xf32>
    %551 = arith.mulf %546, %548 : vector<8x32xf32>
    %552 = arith.addf %550, %551 : vector<8x32xf32>
    %553 = math.tanh %552 : vector<8x32xf32>
    %554 = arith.mulf %549, %553 : vector<8x32xf32>
    %555 = vector.extract_strided_slice %544 {offsets = [0, 128], sizes = [8, 32], strides = [1, 1]} : vector<8x256xf32> to vector<8x32xf32>
    %556 = vector.extract_strided_slice %544 {offsets = [0, 160], sizes = [8, 32], strides = [1, 1]} : vector<8x256xf32> to vector<8x32xf32>
    %557 = vector.extract_strided_slice %545 {offsets = [0, 192], sizes = [8, 32], strides = [1, 1]} : vector<8x256xf32> to vector<8x32xf32>
    %558 = vector.extract_strided_slice %544 {offsets = [0, 224], sizes = [8, 32], strides = [1, 1]} : vector<8x256xf32> to vector<8x32xf32>
    %559 = arith.mulf %556, %499 : vector<8x32xf32>
    %560 = arith.mulf %555, %557 : vector<8x32xf32>
    %561 = arith.addf %559, %560 : vector<8x32xf32>
    %562 = math.tanh %561 : vector<8x32xf32>
    %563 = arith.mulf %558, %562 : vector<8x32xf32>
    %564 = tpu.concatenate %554, %524, %563, %533 in 1 : vector<8x32xf32>, vector<8x32xf32>, vector<8x32xf32>, vector<8x32xf32> -> vector<8x128xf32>
    %c0_150 = arith.constant 0 : index
    %c0_151 = arith.constant 0 : index
    %c0_152 = arith.constant 0 : index
    %565 = vector.load %arg9[%c0_150, %c0_151, %c0_152] : memref<1x128x256xf32, #tpu.memory_space<vmem>>, vector<1x128x256xf32>
    %566 = vector.shape_cast %565 : vector<1x128x256xf32> to vector<128x256xf32>
    %cst_153 = arith.constant dense<0.000000e+00> : vector<8x256xf32>
    %567 = tpu.matmul %564, %566, %cst_153 {dimension_numbers = #tpu.dot_dimension_numbers<[1], [0], [0], [1], [0, 0, 1, 1], [], []>} : vector<8x128xf32>, vector<128x256xf32>, vector<8x256xf32> -> vector<8x256xf32>
    %c0_154 = arith.constant 0 : index
    %c0_155 = arith.constant 0 : index
    %c0_156 = arith.constant 0 : index
    %568 = vector.load %arg10[%c0_154, %c0_155, %c0_156] : memref<1x1x256xf32, #tpu.memory_space<vmem>>, vector<1x1x256xf32>
    %569 = vector.shape_cast %568 : vector<1x1x256xf32> to vector<1x256xf32>
    %570 = vector.broadcast %569 : vector<1x256xf32> to vector<8x256xf32>
    %571 = arith.addf %567, %570 : vector<8x256xf32>
    %572 = arith.negf %571 : vector<8x256xf32>
    %573 = math.exp %572 : vector<8x256xf32>
    %cst_157 = arith.constant 1.000000e+00 : f32
    %574 = vector.broadcast %cst_157 : f32 to vector<8x256xf32>
    %575 = arith.addf %574, %573 : vector<8x256xf32>
    %576 = arith.divf %574, %575 : vector<8x256xf32>
    %577 = math.tanh %571 : vector<8x256xf32>
    %578 = vector.extract_strided_slice %576 {offsets = [0, 0], sizes = [8, 32], strides = [1, 1]} : vector<8x256xf32> to vector<8x32xf32>
    %579 = vector.extract_strided_slice %576 {offsets = [0, 32], sizes = [8, 32], strides = [1, 1]} : vector<8x256xf32> to vector<8x32xf32>
    %580 = vector.extract_strided_slice %577 {offsets = [0, 64], sizes = [8, 32], strides = [1, 1]} : vector<8x256xf32> to vector<8x32xf32>
    %581 = vector.extract_strided_slice %576 {offsets = [0, 96], sizes = [8, 32], strides = [1, 1]} : vector<8x256xf32> to vector<8x32xf32>
    %582 = arith.mulf %579, %522 : vector<8x32xf32>
    %583 = arith.mulf %578, %580 : vector<8x32xf32>
    %584 = arith.addf %582, %583 : vector<8x32xf32>
    %585 = math.tanh %584 : vector<8x32xf32>
    %586 = arith.mulf %581, %585 : vector<8x32xf32>
    %587 = vector.extract_strided_slice %576 {offsets = [0, 128], sizes = [8, 32], strides = [1, 1]} : vector<8x256xf32> to vector<8x32xf32>
    %588 = vector.extract_strided_slice %576 {offsets = [0, 160], sizes = [8, 32], strides = [1, 1]} : vector<8x256xf32> to vector<8x32xf32>
    %589 = vector.extract_strided_slice %577 {offsets = [0, 192], sizes = [8, 32], strides = [1, 1]} : vector<8x256xf32> to vector<8x32xf32>
    %590 = vector.extract_strided_slice %576 {offsets = [0, 224], sizes = [8, 32], strides = [1, 1]} : vector<8x256xf32> to vector<8x32xf32>
    %591 = arith.mulf %588, %531 : vector<8x32xf32>
    %592 = arith.mulf %587, %589 : vector<8x32xf32>
    %593 = arith.addf %591, %592 : vector<8x32xf32>
    %594 = math.tanh %593 : vector<8x32xf32>
    %595 = arith.mulf %590, %594 : vector<8x32xf32>
    %596 = tpu.concatenate %586, %595 in 1 : vector<8x32xf32>, vector<8x32xf32> -> vector<8x64xf32>
    %c24 = arith.constant 24 : index
    %c0_158 = arith.constant 0 : index
    %597 = vector.load %arg14[%c24, %c0_158] : memref<64x64xf32, #tpu.memory_space<vmem>>, vector<8x64xf32>
    tpu.vector_store %arg14[%c24, %c0_158], %596 {strides = array<i32>} : memref<64x64xf32, #tpu.memory_space<vmem>>, vector<8x64xf32>,
    %598 = tpu.concatenate %554, %563 in 1 : vector<8x32xf32>, vector<8x32xf32> -> vector<8x64xf32>
    %c0_159 = arith.constant 0 : index
    %c0_160 = arith.constant 0 : index
    %599 = vector.load %arg8[%c0_159, %c0_160] : memref<64x256xf32, #tpu.memory_space<vmem>>, vector<64x256xf32>
    %cst_161 = arith.constant dense<0.000000e+00> : vector<8x256xf32>
    %600 = tpu.matmul %598, %599, %cst_161 {dimension_numbers = #tpu.dot_dimension_numbers<[1], [0], [0], [1], [0, 0, 1, 1], [], []>} : vector<8x64xf32>, vector<64x256xf32>, vector<8x256xf32> -> vector<8x256xf32>
    %601 = arith.addf %349, %600 : vector<8x256xf32>
    %602 = arith.negf %601 : vector<8x256xf32>
    %603 = math.exp %602 : vector<8x256xf32>
    %cst_162 = arith.constant 1.000000e+00 : f32
    %604 = vector.broadcast %cst_162 : f32 to vector<8x256xf32>
    %605 = arith.addf %604, %603 : vector<8x256xf32>
    %606 = arith.divf %604, %605 : vector<8x256xf32>
    %607 = math.tanh %601 : vector<8x256xf32>
    %608 = vector.extract_strided_slice %606 {offsets = [0, 0], sizes = [8, 32], strides = [1, 1]} : vector<8x256xf32> to vector<8x32xf32>
    %609 = vector.extract_strided_slice %606 {offsets = [0, 32], sizes = [8, 32], strides = [1, 1]} : vector<8x256xf32> to vector<8x32xf32>
    %610 = vector.extract_strided_slice %607 {offsets = [0, 64], sizes = [8, 32], strides = [1, 1]} : vector<8x256xf32> to vector<8x32xf32>
    %611 = vector.extract_strided_slice %606 {offsets = [0, 96], sizes = [8, 32], strides = [1, 1]} : vector<8x256xf32> to vector<8x32xf32>
    %612 = arith.mulf %609, %552 : vector<8x32xf32>
    %613 = arith.mulf %608, %610 : vector<8x32xf32>
    %614 = arith.addf %612, %613 : vector<8x32xf32>
    %615 = math.tanh %614 : vector<8x32xf32>
    %616 = arith.mulf %611, %615 : vector<8x32xf32>
    %617 = vector.extract_strided_slice %606 {offsets = [0, 128], sizes = [8, 32], strides = [1, 1]} : vector<8x256xf32> to vector<8x32xf32>
    %618 = vector.extract_strided_slice %606 {offsets = [0, 160], sizes = [8, 32], strides = [1, 1]} : vector<8x256xf32> to vector<8x32xf32>
    %619 = vector.extract_strided_slice %607 {offsets = [0, 192], sizes = [8, 32], strides = [1, 1]} : vector<8x256xf32> to vector<8x32xf32>
    %620 = vector.extract_strided_slice %606 {offsets = [0, 224], sizes = [8, 32], strides = [1, 1]} : vector<8x256xf32> to vector<8x32xf32>
    %621 = arith.mulf %618, %561 : vector<8x32xf32>
    %622 = arith.mulf %617, %619 : vector<8x32xf32>
    %623 = arith.addf %621, %622 : vector<8x32xf32>
    %624 = math.tanh %623 : vector<8x32xf32>
    %625 = arith.mulf %620, %624 : vector<8x32xf32>
    %626 = tpu.concatenate %616, %586, %625, %595 in 1 : vector<8x32xf32>, vector<8x32xf32>, vector<8x32xf32>, vector<8x32xf32> -> vector<8x128xf32>
    %c0_163 = arith.constant 0 : index
    %c0_164 = arith.constant 0 : index
    %c0_165 = arith.constant 0 : index
    %627 = vector.load %arg9[%c0_163, %c0_164, %c0_165] : memref<1x128x256xf32, #tpu.memory_space<vmem>>, vector<1x128x256xf32>
    %628 = vector.shape_cast %627 : vector<1x128x256xf32> to vector<128x256xf32>
    %cst_166 = arith.constant dense<0.000000e+00> : vector<8x256xf32>
    %629 = tpu.matmul %626, %628, %cst_166 {dimension_numbers = #tpu.dot_dimension_numbers<[1], [0], [0], [1], [0, 0, 1, 1], [], []>} : vector<8x128xf32>, vector<128x256xf32>, vector<8x256xf32> -> vector<8x256xf32>
    %c0_167 = arith.constant 0 : index
    %c0_168 = arith.constant 0 : index
    %c0_169 = arith.constant 0 : index
    %630 = vector.load %arg10[%c0_167, %c0_168, %c0_169] : memref<1x1x256xf32, #tpu.memory_space<vmem>>, vector<1x1x256xf32>
    %631 = vector.shape_cast %630 : vector<1x1x256xf32> to vector<1x256xf32>
    %632 = vector.broadcast %631 : vector<1x256xf32> to vector<8x256xf32>
    %633 = arith.addf %629, %632 : vector<8x256xf32>
    %634 = arith.negf %633 : vector<8x256xf32>
    %635 = math.exp %634 : vector<8x256xf32>
    %cst_170 = arith.constant 1.000000e+00 : f32
    %636 = vector.broadcast %cst_170 : f32 to vector<8x256xf32>
    %637 = arith.addf %636, %635 : vector<8x256xf32>
    %638 = arith.divf %636, %637 : vector<8x256xf32>
    %639 = math.tanh %633 : vector<8x256xf32>
    %640 = vector.extract_strided_slice %638 {offsets = [0, 0], sizes = [8, 32], strides = [1, 1]} : vector<8x256xf32> to vector<8x32xf32>
    %641 = vector.extract_strided_slice %638 {offsets = [0, 32], sizes = [8, 32], strides = [1, 1]} : vector<8x256xf32> to vector<8x32xf32>
    %642 = vector.extract_strided_slice %639 {offsets = [0, 64], sizes = [8, 32], strides = [1, 1]} : vector<8x256xf32> to vector<8x32xf32>
    %643 = vector.extract_strided_slice %638 {offsets = [0, 96], sizes = [8, 32], strides = [1, 1]} : vector<8x256xf32> to vector<8x32xf32>
    %644 = arith.mulf %641, %584 : vector<8x32xf32>
    %645 = arith.mulf %640, %642 : vector<8x32xf32>
    %646 = arith.addf %644, %645 : vector<8x32xf32>
    %647 = math.tanh %646 : vector<8x32xf32>
    %648 = arith.mulf %643, %647 : vector<8x32xf32>
    %649 = vector.extract_strided_slice %638 {offsets = [0, 128], sizes = [8, 32], strides = [1, 1]} : vector<8x256xf32> to vector<8x32xf32>
    %650 = vector.extract_strided_slice %638 {offsets = [0, 160], sizes = [8, 32], strides = [1, 1]} : vector<8x256xf32> to vector<8x32xf32>
    %651 = vector.extract_strided_slice %639 {offsets = [0, 192], sizes = [8, 32], strides = [1, 1]} : vector<8x256xf32> to vector<8x32xf32>
    %652 = vector.extract_strided_slice %638 {offsets = [0, 224], sizes = [8, 32], strides = [1, 1]} : vector<8x256xf32> to vector<8x32xf32>
    %653 = arith.mulf %650, %593 : vector<8x32xf32>
    %654 = arith.mulf %649, %651 : vector<8x32xf32>
    %655 = arith.addf %653, %654 : vector<8x32xf32>
    %656 = math.tanh %655 : vector<8x32xf32>
    %657 = arith.mulf %652, %656 : vector<8x32xf32>
    %658 = tpu.concatenate %648, %657 in 1 : vector<8x32xf32>, vector<8x32xf32> -> vector<8x64xf32>
    %c32 = arith.constant 32 : index
    %c0_171 = arith.constant 0 : index
    %659 = vector.load %arg14[%c32, %c0_171] : memref<64x64xf32, #tpu.memory_space<vmem>>, vector<8x64xf32>
    tpu.vector_store %arg14[%c32, %c0_171], %658 {strides = array<i32>} : memref<64x64xf32, #tpu.memory_space<vmem>>, vector<8x64xf32>,
    %660 = tpu.concatenate %616, %625 in 1 : vector<8x32xf32>, vector<8x32xf32> -> vector<8x64xf32>
    %c0_172 = arith.constant 0 : index
    %c0_173 = arith.constant 0 : index
    %661 = vector.load %arg8[%c0_172, %c0_173] : memref<64x256xf32, #tpu.memory_space<vmem>>, vector<64x256xf32>
    %cst_174 = arith.constant dense<0.000000e+00> : vector<8x256xf32>
    %662 = tpu.matmul %660, %661, %cst_174 {dimension_numbers = #tpu.dot_dimension_numbers<[1], [0], [0], [1], [0, 0, 1, 1], [], []>} : vector<8x64xf32>, vector<64x256xf32>, vector<8x256xf32> -> vector<8x256xf32>
    %663 = arith.addf %349, %662 : vector<8x256xf32>
    %664 = arith.negf %663 : vector<8x256xf32>
    %665 = math.exp %664 : vector<8x256xf32>
    %cst_175 = arith.constant 1.000000e+00 : f32
    %666 = vector.broadcast %cst_175 : f32 to vector<8x256xf32>
    %667 = arith.addf %666, %665 : vector<8x256xf32>
    %668 = arith.divf %666, %667 : vector<8x256xf32>
    %669 = math.tanh %663 : vector<8x256xf32>
    %670 = vector.extract_strided_slice %668 {offsets = [0, 0], sizes = [8, 32], strides = [1, 1]} : vector<8x256xf32> to vector<8x32xf32>
    %671 = vector.extract_strided_slice %668 {offsets = [0, 32], sizes = [8, 32], strides = [1, 1]} : vector<8x256xf32> to vector<8x32xf32>
    %672 = vector.extract_strided_slice %669 {offsets = [0, 64], sizes = [8, 32], strides = [1, 1]} : vector<8x256xf32> to vector<8x32xf32>
    %673 = vector.extract_strided_slice %668 {offsets = [0, 96], sizes = [8, 32], strides = [1, 1]} : vector<8x256xf32> to vector<8x32xf32>
    %674 = arith.mulf %671, %614 : vector<8x32xf32>
    %675 = arith.mulf %670, %672 : vector<8x32xf32>
    %676 = arith.addf %674, %675 : vector<8x32xf32>
    %677 = math.tanh %676 : vector<8x32xf32>
    %678 = arith.mulf %673, %677 : vector<8x32xf32>
    %679 = vector.extract_strided_slice %668 {offsets = [0, 128], sizes = [8, 32], strides = [1, 1]} : vector<8x256xf32> to vector<8x32xf32>
    %680 = vector.extract_strided_slice %668 {offsets = [0, 160], sizes = [8, 32], strides = [1, 1]} : vector<8x256xf32> to vector<8x32xf32>
    %681 = vector.extract_strided_slice %669 {offsets = [0, 192], sizes = [8, 32], strides = [1, 1]} : vector<8x256xf32> to vector<8x32xf32>
    %682 = vector.extract_strided_slice %668 {offsets = [0, 224], sizes = [8, 32], strides = [1, 1]} : vector<8x256xf32> to vector<8x32xf32>
    %683 = arith.mulf %680, %623 : vector<8x32xf32>
    %684 = arith.mulf %679, %681 : vector<8x32xf32>
    %685 = arith.addf %683, %684 : vector<8x32xf32>
    %686 = math.tanh %685 : vector<8x32xf32>
    %687 = arith.mulf %682, %686 : vector<8x32xf32>
    %688 = tpu.concatenate %678, %648, %687, %657 in 1 : vector<8x32xf32>, vector<8x32xf32>, vector<8x32xf32>, vector<8x32xf32> -> vector<8x128xf32>
    %c0_176 = arith.constant 0 : index
    %c0_177 = arith.constant 0 : index
    %c0_178 = arith.constant 0 : index
    %689 = vector.load %arg9[%c0_176, %c0_177, %c0_178] : memref<1x128x256xf32, #tpu.memory_space<vmem>>, vector<1x128x256xf32>
    %690 = vector.shape_cast %689 : vector<1x128x256xf32> to vector<128x256xf32>
    %cst_179 = arith.constant dense<0.000000e+00> : vector<8x256xf32>
    %691 = tpu.matmul %688, %690, %cst_179 {dimension_numbers = #tpu.dot_dimension_numbers<[1], [0], [0], [1], [0, 0, 1, 1], [], []>} : vector<8x128xf32>, vector<128x256xf32>, vector<8x256xf32> -> vector<8x256xf32>
    %c0_180 = arith.constant 0 : index
    %c0_181 = arith.constant 0 : index
    %c0_182 = arith.constant 0 : index
    %692 = vector.load %arg10[%c0_180, %c0_181, %c0_182] : memref<1x1x256xf32, #tpu.memory_space<vmem>>, vector<1x1x256xf32>
    %693 = vector.shape_cast %692 : vector<1x1x256xf32> to vector<1x256xf32>
    %694 = vector.broadcast %693 : vector<1x256xf32> to vector<8x256xf32>
    %695 = arith.addf %691, %694 : vector<8x256xf32>
    %696 = arith.negf %695 : vector<8x256xf32>
    %697 = math.exp %696 : vector<8x256xf32>
    %cst_183 = arith.constant 1.000000e+00 : f32
    %698 = vector.broadcast %cst_183 : f32 to vector<8x256xf32>
    %699 = arith.addf %698, %697 : vector<8x256xf32>
    %700 = arith.divf %698, %699 : vector<8x256xf32>
    %701 = math.tanh %695 : vector<8x256xf32>
    %702 = vector.extract_strided_slice %700 {offsets = [0, 0], sizes = [8, 32], strides = [1, 1]} : vector<8x256xf32> to vector<8x32xf32>
    %703 = vector.extract_strided_slice %700 {offsets = [0, 32], sizes = [8, 32], strides = [1, 1]} : vector<8x256xf32> to vector<8x32xf32>
    %704 = vector.extract_strided_slice %701 {offsets = [0, 64], sizes = [8, 32], strides = [1, 1]} : vector<8x256xf32> to vector<8x32xf32>
    %705 = vector.extract_strided_slice %700 {offsets = [0, 96], sizes = [8, 32], strides = [1, 1]} : vector<8x256xf32> to vector<8x32xf32>
    %706 = arith.mulf %703, %646 : vector<8x32xf32>
    %707 = arith.mulf %702, %704 : vector<8x32xf32>
    %708 = arith.addf %706, %707 : vector<8x32xf32>
    %709 = math.tanh %708 : vector<8x32xf32>
    %710 = arith.mulf %705, %709 : vector<8x32xf32>
    %711 = vector.extract_strided_slice %700 {offsets = [0, 128], sizes = [8, 32], strides = [1, 1]} : vector<8x256xf32> to vector<8x32xf32>
    %712 = vector.extract_strided_slice %700 {offsets = [0, 160], sizes = [8, 32], strides = [1, 1]} : vector<8x256xf32> to vector<8x32xf32>
    %713 = vector.extract_strided_slice %701 {offsets = [0, 192], sizes = [8, 32], strides = [1, 1]} : vector<8x256xf32> to vector<8x32xf32>
    %714 = vector.extract_strided_slice %700 {offsets = [0, 224], sizes = [8, 32], strides = [1, 1]} : vector<8x256xf32> to vector<8x32xf32>
    %715 = arith.mulf %712, %655 : vector<8x32xf32>
    %716 = arith.mulf %711, %713 : vector<8x32xf32>
    %717 = arith.addf %715, %716 : vector<8x32xf32>
    %718 = math.tanh %717 : vector<8x32xf32>
    %719 = arith.mulf %714, %718 : vector<8x32xf32>
    %720 = tpu.concatenate %710, %719 in 1 : vector<8x32xf32>, vector<8x32xf32> -> vector<8x64xf32>
    %c40 = arith.constant 40 : index
    %c0_184 = arith.constant 0 : index
    %721 = vector.load %arg14[%c40, %c0_184] : memref<64x64xf32, #tpu.memory_space<vmem>>, vector<8x64xf32>
    tpu.vector_store %arg14[%c40, %c0_184], %720 {strides = array<i32>} : memref<64x64xf32, #tpu.memory_space<vmem>>, vector<8x64xf32>,
    %722 = tpu.concatenate %678, %687 in 1 : vector<8x32xf32>, vector<8x32xf32> -> vector<8x64xf32>
    %c0_185 = arith.constant 0 : index
    %c0_186 = arith.constant 0 : index
    %723 = vector.load %arg8[%c0_185, %c0_186] : memref<64x256xf32, #tpu.memory_space<vmem>>, vector<64x256xf32>
    %cst_187 = arith.constant dense<0.000000e+00> : vector<8x256xf32>
    %724 = tpu.matmul %722, %723, %cst_187 {dimension_numbers = #tpu.dot_dimension_numbers<[1], [0], [0], [1], [0, 0, 1, 1], [], []>} : vector<8x64xf32>, vector<64x256xf32>, vector<8x256xf32> -> vector<8x256xf32>
    %725 = arith.addf %349, %724 : vector<8x256xf32>
    %726 = arith.negf %725 : vector<8x256xf32>
    %727 = math.exp %726 : vector<8x256xf32>
    %cst_188 = arith.constant 1.000000e+00 : f32
    %728 = vector.broadcast %cst_188 : f32 to vector<8x256xf32>
    %729 = arith.addf %728, %727 : vector<8x256xf32>
    %730 = arith.divf %728, %729 : vector<8x256xf32>
    %731 = math.tanh %725 : vector<8x256xf32>
    %732 = vector.extract_strided_slice %730 {offsets = [0, 0], sizes = [8, 32], strides = [1, 1]} : vector<8x256xf32> to vector<8x32xf32>
    %733 = vector.extract_strided_slice %730 {offsets = [0, 32], sizes = [8, 32], strides = [1, 1]} : vector<8x256xf32> to vector<8x32xf32>
    %734 = vector.extract_strided_slice %731 {offsets = [0, 64], sizes = [8, 32], strides = [1, 1]} : vector<8x256xf32> to vector<8x32xf32>
    %735 = vector.extract_strided_slice %730 {offsets = [0, 96], sizes = [8, 32], strides = [1, 1]} : vector<8x256xf32> to vector<8x32xf32>
    %736 = arith.mulf %733, %676 : vector<8x32xf32>
    %737 = arith.mulf %732, %734 : vector<8x32xf32>
    %738 = arith.addf %736, %737 : vector<8x32xf32>
    %739 = math.tanh %738 : vector<8x32xf32>
    %740 = arith.mulf %735, %739 : vector<8x32xf32>
    %741 = vector.extract_strided_slice %730 {offsets = [0, 128], sizes = [8, 32], strides = [1, 1]} : vector<8x256xf32> to vector<8x32xf32>
    %742 = vector.extract_strided_slice %730 {offsets = [0, 160], sizes = [8, 32], strides = [1, 1]} : vector<8x256xf32> to vector<8x32xf32>
    %743 = vector.extract_strided_slice %731 {offsets = [0, 192], sizes = [8, 32], strides = [1, 1]} : vector<8x256xf32> to vector<8x32xf32>
    %744 = vector.extract_strided_slice %730 {offsets = [0, 224], sizes = [8, 32], strides = [1, 1]} : vector<8x256xf32> to vector<8x32xf32>
    %745 = arith.mulf %742, %685 : vector<8x32xf32>
    %746 = arith.mulf %741, %743 : vector<8x32xf32>
    %747 = arith.addf %745, %746 : vector<8x32xf32>
    %748 = math.tanh %747 : vector<8x32xf32>
    %749 = arith.mulf %744, %748 : vector<8x32xf32>
    %750 = tpu.concatenate %740, %710, %749, %719 in 1 : vector<8x32xf32>, vector<8x32xf32>, vector<8x32xf32>, vector<8x32xf32> -> vector<8x128xf32>
    %c0_189 = arith.constant 0 : index
    %c0_190 = arith.constant 0 : index
    %c0_191 = arith.constant 0 : index
    %751 = vector.load %arg9[%c0_189, %c0_190, %c0_191] : memref<1x128x256xf32, #tpu.memory_space<vmem>>, vector<1x128x256xf32>
    %752 = vector.shape_cast %751 : vector<1x128x256xf32> to vector<128x256xf32>
    %cst_192 = arith.constant dense<0.000000e+00> : vector<8x256xf32>
    %753 = tpu.matmul %750, %752, %cst_192 {dimension_numbers = #tpu.dot_dimension_numbers<[1], [0], [0], [1], [0, 0, 1, 1], [], []>} : vector<8x128xf32>, vector<128x256xf32>, vector<8x256xf32> -> vector<8x256xf32>
    %c0_193 = arith.constant 0 : index
    %c0_194 = arith.constant 0 : index
    %c0_195 = arith.constant 0 : index
    %754 = vector.load %arg10[%c0_193, %c0_194, %c0_195] : memref<1x1x256xf32, #tpu.memory_space<vmem>>, vector<1x1x256xf32>
    %755 = vector.shape_cast %754 : vector<1x1x256xf32> to vector<1x256xf32>
    %756 = vector.broadcast %755 : vector<1x256xf32> to vector<8x256xf32>
    %757 = arith.addf %753, %756 : vector<8x256xf32>
    %758 = arith.negf %757 : vector<8x256xf32>
    %759 = math.exp %758 : vector<8x256xf32>
    %cst_196 = arith.constant 1.000000e+00 : f32
    %760 = vector.broadcast %cst_196 : f32 to vector<8x256xf32>
    %761 = arith.addf %760, %759 : vector<8x256xf32>
    %762 = arith.divf %760, %761 : vector<8x256xf32>
    %763 = math.tanh %757 : vector<8x256xf32>
    %764 = vector.extract_strided_slice %762 {offsets = [0, 0], sizes = [8, 32], strides = [1, 1]} : vector<8x256xf32> to vector<8x32xf32>
    %765 = vector.extract_strided_slice %762 {offsets = [0, 32], sizes = [8, 32], strides = [1, 1]} : vector<8x256xf32> to vector<8x32xf32>
    %766 = vector.extract_strided_slice %763 {offsets = [0, 64], sizes = [8, 32], strides = [1, 1]} : vector<8x256xf32> to vector<8x32xf32>
    %767 = vector.extract_strided_slice %762 {offsets = [0, 96], sizes = [8, 32], strides = [1, 1]} : vector<8x256xf32> to vector<8x32xf32>
    %768 = arith.mulf %765, %708 : vector<8x32xf32>
    %769 = arith.mulf %764, %766 : vector<8x32xf32>
    %770 = arith.addf %768, %769 : vector<8x32xf32>
    %771 = math.tanh %770 : vector<8x32xf32>
    %772 = arith.mulf %767, %771 : vector<8x32xf32>
    %773 = vector.extract_strided_slice %762 {offsets = [0, 128], sizes = [8, 32], strides = [1, 1]} : vector<8x256xf32> to vector<8x32xf32>
    %774 = vector.extract_strided_slice %762 {offsets = [0, 160], sizes = [8, 32], strides = [1, 1]} : vector<8x256xf32> to vector<8x32xf32>
    %775 = vector.extract_strided_slice %763 {offsets = [0, 192], sizes = [8, 32], strides = [1, 1]} : vector<8x256xf32> to vector<8x32xf32>
    %776 = vector.extract_strided_slice %762 {offsets = [0, 224], sizes = [8, 32], strides = [1, 1]} : vector<8x256xf32> to vector<8x32xf32>
    %777 = arith.mulf %774, %717 : vector<8x32xf32>
    %778 = arith.mulf %773, %775 : vector<8x32xf32>
    %779 = arith.addf %777, %778 : vector<8x32xf32>
    %780 = math.tanh %779 : vector<8x32xf32>
    %781 = arith.mulf %776, %780 : vector<8x32xf32>
    %782 = tpu.concatenate %772, %781 in 1 : vector<8x32xf32>, vector<8x32xf32> -> vector<8x64xf32>
    %c48 = arith.constant 48 : index
    %c0_197 = arith.constant 0 : index
    %783 = vector.load %arg14[%c48, %c0_197] : memref<64x64xf32, #tpu.memory_space<vmem>>, vector<8x64xf32>
    tpu.vector_store %arg14[%c48, %c0_197], %782 {strides = array<i32>} : memref<64x64xf32, #tpu.memory_space<vmem>>, vector<8x64xf32>,
    %784 = tpu.concatenate %740, %749 in 1 : vector<8x32xf32>, vector<8x32xf32> -> vector<8x64xf32>
    %c0_198 = arith.constant 0 : index
    %c0_199 = arith.constant 0 : index
    %785 = vector.load %arg8[%c0_198, %c0_199] : memref<64x256xf32, #tpu.memory_space<vmem>>, vector<64x256xf32>
    %cst_200 = arith.constant dense<0.000000e+00> : vector<8x256xf32>
    %786 = tpu.matmul %784, %785, %cst_200 {dimension_numbers = #tpu.dot_dimension_numbers<[1], [0], [0], [1], [0, 0, 1, 1], [], []>} : vector<8x64xf32>, vector<64x256xf32>, vector<8x256xf32> -> vector<8x256xf32>
    %787 = arith.addf %349, %786 : vector<8x256xf32>
    %788 = arith.negf %787 : vector<8x256xf32>
    %789 = math.exp %788 : vector<8x256xf32>
    %cst_201 = arith.constant 1.000000e+00 : f32
    %790 = vector.broadcast %cst_201 : f32 to vector<8x256xf32>
    %791 = arith.addf %790, %789 : vector<8x256xf32>
    %792 = arith.divf %790, %791 : vector<8x256xf32>
    %793 = math.tanh %787 : vector<8x256xf32>
    %794 = vector.extract_strided_slice %792 {offsets = [0, 0], sizes = [8, 32], strides = [1, 1]} : vector<8x256xf32> to vector<8x32xf32>
    %795 = vector.extract_strided_slice %792 {offsets = [0, 32], sizes = [8, 32], strides = [1, 1]} : vector<8x256xf32> to vector<8x32xf32>
    %796 = vector.extract_strided_slice %793 {offsets = [0, 64], sizes = [8, 32], strides = [1, 1]} : vector<8x256xf32> to vector<8x32xf32>
    %797 = vector.extract_strided_slice %792 {offsets = [0, 96], sizes = [8, 32], strides = [1, 1]} : vector<8x256xf32> to vector<8x32xf32>
    %798 = arith.mulf %795, %738 : vector<8x32xf32>
    %799 = arith.mulf %794, %796 : vector<8x32xf32>
    %800 = arith.addf %798, %799 : vector<8x32xf32>
    %801 = math.tanh %800 : vector<8x32xf32>
    %802 = arith.mulf %797, %801 : vector<8x32xf32>
    %803 = vector.extract_strided_slice %792 {offsets = [0, 128], sizes = [8, 32], strides = [1, 1]} : vector<8x256xf32> to vector<8x32xf32>
    %804 = vector.extract_strided_slice %792 {offsets = [0, 160], sizes = [8, 32], strides = [1, 1]} : vector<8x256xf32> to vector<8x32xf32>
    %805 = vector.extract_strided_slice %793 {offsets = [0, 192], sizes = [8, 32], strides = [1, 1]} : vector<8x256xf32> to vector<8x32xf32>
    %806 = vector.extract_strided_slice %792 {offsets = [0, 224], sizes = [8, 32], strides = [1, 1]} : vector<8x256xf32> to vector<8x32xf32>
    %807 = arith.mulf %804, %747 : vector<8x32xf32>
    %808 = arith.mulf %803, %805 : vector<8x32xf32>
    %809 = arith.addf %807, %808 : vector<8x32xf32>
    %810 = math.tanh %809 : vector<8x32xf32>
    %811 = arith.mulf %806, %810 : vector<8x32xf32>
    %812 = tpu.concatenate %802, %772, %811, %781 in 1 : vector<8x32xf32>, vector<8x32xf32>, vector<8x32xf32>, vector<8x32xf32> -> vector<8x128xf32>
    %c0_202 = arith.constant 0 : index
    %c0_203 = arith.constant 0 : index
    %c0_204 = arith.constant 0 : index
    %813 = vector.load %arg9[%c0_202, %c0_203, %c0_204] : memref<1x128x256xf32, #tpu.memory_space<vmem>>, vector<1x128x256xf32>
    %814 = vector.shape_cast %813 : vector<1x128x256xf32> to vector<128x256xf32>
    %cst_205 = arith.constant dense<0.000000e+00> : vector<8x256xf32>
    %815 = tpu.matmul %812, %814, %cst_205 {dimension_numbers = #tpu.dot_dimension_numbers<[1], [0], [0], [1], [0, 0, 1, 1], [], []>} : vector<8x128xf32>, vector<128x256xf32>, vector<8x256xf32> -> vector<8x256xf32>
    %c0_206 = arith.constant 0 : index
    %c0_207 = arith.constant 0 : index
    %c0_208 = arith.constant 0 : index
    %816 = vector.load %arg10[%c0_206, %c0_207, %c0_208] : memref<1x1x256xf32, #tpu.memory_space<vmem>>, vector<1x1x256xf32>
    %817 = vector.shape_cast %816 : vector<1x1x256xf32> to vector<1x256xf32>
    %818 = vector.broadcast %817 : vector<1x256xf32> to vector<8x256xf32>
    %819 = arith.addf %815, %818 : vector<8x256xf32>
    %820 = arith.negf %819 : vector<8x256xf32>
    %821 = math.exp %820 : vector<8x256xf32>
    %cst_209 = arith.constant 1.000000e+00 : f32
    %822 = vector.broadcast %cst_209 : f32 to vector<8x256xf32>
    %823 = arith.addf %822, %821 : vector<8x256xf32>
    %824 = arith.divf %822, %823 : vector<8x256xf32>
    %825 = math.tanh %819 : vector<8x256xf32>
    %826 = vector.extract_strided_slice %824 {offsets = [0, 0], sizes = [8, 32], strides = [1, 1]} : vector<8x256xf32> to vector<8x32xf32>
    %827 = vector.extract_strided_slice %824 {offsets = [0, 32], sizes = [8, 32], strides = [1, 1]} : vector<8x256xf32> to vector<8x32xf32>
    %828 = vector.extract_strided_slice %825 {offsets = [0, 64], sizes = [8, 32], strides = [1, 1]} : vector<8x256xf32> to vector<8x32xf32>
    %829 = vector.extract_strided_slice %824 {offsets = [0, 96], sizes = [8, 32], strides = [1, 1]} : vector<8x256xf32> to vector<8x32xf32>
    %830 = arith.mulf %827, %770 : vector<8x32xf32>
    %831 = arith.mulf %826, %828 : vector<8x32xf32>
    %832 = arith.addf %830, %831 : vector<8x32xf32>
    %833 = math.tanh %832 : vector<8x32xf32>
    %834 = arith.mulf %829, %833 : vector<8x32xf32>
    %835 = vector.extract_strided_slice %824 {offsets = [0, 128], sizes = [8, 32], strides = [1, 1]} : vector<8x256xf32> to vector<8x32xf32>
    %836 = vector.extract_strided_slice %824 {offsets = [0, 160], sizes = [8, 32], strides = [1, 1]} : vector<8x256xf32> to vector<8x32xf32>
    %837 = vector.extract_strided_slice %825 {offsets = [0, 192], sizes = [8, 32], strides = [1, 1]} : vector<8x256xf32> to vector<8x32xf32>
    %838 = vector.extract_strided_slice %824 {offsets = [0, 224], sizes = [8, 32], strides = [1, 1]} : vector<8x256xf32> to vector<8x32xf32>
    %839 = arith.mulf %836, %779 : vector<8x32xf32>
    %840 = arith.mulf %835, %837 : vector<8x32xf32>
    %841 = arith.addf %839, %840 : vector<8x32xf32>
    %842 = math.tanh %841 : vector<8x32xf32>
    %843 = arith.mulf %838, %842 : vector<8x32xf32>
    %844 = tpu.concatenate %834, %843 in 1 : vector<8x32xf32>, vector<8x32xf32> -> vector<8x64xf32>
    %c56 = arith.constant 56 : index
    %c0_210 = arith.constant 0 : index
    %845 = vector.load %arg14[%c56, %c0_210] : memref<64x64xf32, #tpu.memory_space<vmem>>, vector<8x64xf32>
    tpu.vector_store %arg14[%c56, %c0_210], %844 {strides = array<i32>} : memref<64x64xf32, #tpu.memory_space<vmem>>, vector<8x64xf32>,
    %c0_211 = arith.constant 0 : index
    %c0_212 = arith.constant 0 : index
    %846 = vector.load %arg14[%c0_211, %c0_212] : memref<64x64xf32, #tpu.memory_space<vmem>>, vector<64x64xf32>
    %c0_213 = arith.constant 0 : index
    %c0_214 = arith.constant 0 : index
    %847 = vector.load %arg11[%c0_213, %c0_214] : memref<64x2xf32, #tpu.memory_space<vmem>>, vector<64x2xf32>
    %cst_215 = arith.constant dense<0.000000e+00> : vector<64x2xf32>
    %848 = tpu.matmul %846, %847, %cst_215 {dimension_numbers = #tpu.dot_dimension_numbers<[1], [0], [0], [1], [0, 0, 1, 1], [], []>} : vector<64x64xf32>, vector<64x2xf32>, vector<64x2xf32> -> vector<64x2xf32>
    %c0_216 = arith.constant 0 : index
    %c0_217 = arith.constant 0 : index
    %849 = vector.load %arg12[%c0_216, %c0_217] : memref<1x2xf32, #tpu.memory_space<vmem>>, vector<1x2xf32>
    %850 = vector.broadcast %849 : vector<1x2xf32> to vector<64x2xf32>
    %851 = arith.addf %848, %850 : vector<64x2xf32>
    %c0_218 = arith.constant 0 : index
    %c0_219 = arith.constant 0 : index
    %852 = vector.load %arg13[%c0_218, %c0_219] : memref<64x2xf32, #tpu.memory_space<vmem>>, vector<64x2xf32>
    tpu.vector_store %arg13[%c0_218, %c0_219], %851 {strides = array<i32>} : memref<64x2xf32, #tpu.memory_space<vmem>>, vector<64x2xf32>,
    return
  }
}

</mosaic_0001>

<llo_original>
// kernel: forward_pallas.1
$region0: #{forward_pallas.1}
  #allocation0 [shape = 'u32[]', space=smem, size = 0x4, offset = 0x4, fixed_abs, tag = 'smem constant byte address 0x4 - core index']
  #allocation1 [shape = 'u32[72,128]{1,0:T(1,128)}', space=vmem, size = 0x9000, scoped, tag = 'internal scratch']
  #allocation2 [shape = 'f32[64,64]{1,0:T(8,128)}', space=vmem, size = 0x8000, scoped, tag = 'scratch operand']
  %s0 = inlined_call_operand.vmem [shape: f32[64,1], index: 0, kind: input, shape index: {}]
  %s1 = inlined_call_operand.hbm [shape: f32[1,128], index: 1, kind: input, shape index: {}]
  %s2 = inlined_call_operand.vmem [shape: f32[32,128], index: 2, kind: input, shape index: {}]
  %s3 = inlined_call_operand.vmem [shape: f32[1,128], index: 3, kind: input, shape index: {}]
  %s4 = inlined_call_operand.hbm [shape: f32[1,64,128], index: 4, kind: input, shape index: {}]
  %s5 = inlined_call_operand.vmem [shape: f32[1,1,128], index: 5, kind: input, shape index: {}]
  %s6 = inlined_call_operand.hbm [shape: f32[32,256], index: 6, kind: input, shape index: {}]
  %s7 = inlined_call_operand.vmem [shape: f32[1,256], index: 7, kind: input, shape index: {}]
  %s8 = inlined_call_operand.vmem [shape: f32[64,256], index: 8, kind: input, shape index: {}]
  %s9 = inlined_call_operand.hbm [shape: f32[1,128,256], index: 9, kind: input, shape index: {}]
  %s10 = inlined_call_operand.vmem [shape: f32[1,1,256], index: 10, kind: input, shape index: {}]
  %s11 = inlined_call_operand.vmem [shape: f32[64,2], index: 11, kind: input, shape index: {}]
  %s12 = inlined_call_operand.vmem [shape: f32[1,2], index: 12, kind: input, shape index: {}]
  %s13 = inlined_call_operand.vmem [shape: f32[64,2], index: 13, kind: output, shape index: {}]
  %s14 = sld [smem:[#allocation0]]
  $region78: #{forward_pallas.1} parent=0
    _
  %s16 = ssub.s32 1, %s14
  %s17 = scalar_select 0, %s16, %s14
  $region1: #{forward_pallas.1} parent=0
    #allocation3 [shape = 'u8[512]{0}', space=vmem, size = 0x400, scoped, tag = 'input window, operand 1, single buffered']
    #allocation4 [shape = 's32[1]{0}', space=sflag, size = 0x4, scoped, tag = 'scoped memory for forward_pallas.1']
    #allocation5 [shape = 'u8[32768]{0}', space=vmem, size = 0x8000, scoped, tag = 'input window, operand 4, single buffered']
    #allocation6 [shape = 's32[1]{0}', space=sflag, size = 0x4, scoped, tag = 'scoped memory for forward_pallas.1']
    #allocation7 [shape = 'u8[32768]{0}', space=vmem, size = 0x8000, scoped, tag = 'input window, operand 6, single buffered']
    #allocation8 [shape = 'u8[131072]{0}', space=vmem, size = 0x20000, scoped, tag = 'input window, operand 9, single buffered']
    #allocation9 [shape = 's32[1]{0}', space=sflag, size = 0x4, scoped, tag = 'scoped memory for forward_pallas.1']
    %18 = vsyncpa [#allocation4], 0
    %19 = vsyncpa [#allocation6], 0
    %20 = vsyncpa [#allocation9], 0
    // Predicated region
    $region2: #{forward_pallas.1} parent=1 // pred_check
      _
    $region3: #{forward_pallas.1} parent=1 // pred_check_branch
      %22 = sbr.rel (0) target = $region5
    $region4: #{forward_pallas.1} parent=1 // pred_region
      _
    $region5: #{forward_pallas.1} parent=1 // pred_fallthru
      _
    // Predicated region
    $region6: #{forward_pallas.1} parent=1 // pred_check
      _
    $region7: #{forward_pallas.1} parent=1 // pred_check_branch
      %24 = sbr.rel (0) target = $region9
    $region8: #{forward_pallas.1} parent=1 // pred_region
      %26 = vsyncadd [#allocation4], 0
      %s28 = sshll.u32 %s1, 4
      %s29 = int_to_ptr.hbm [resolvable:$true] %s28
      %s30 = sshll.u32 [#allocation3], 4
      %s31 = int_to_ptr.vmem [resolvable:$true] %s30
      %33 = dma.hbm_to_vmem [thread:$0]  %s29, 16, %s31, [#allocation4]
    $region9: #{forward_pallas.1} parent=1 // pred_fallthru
      _
    // Predicated region
    $region10: #{forward_pallas.1} parent=1 // pred_check
      _
    $region11: #{forward_pallas.1} parent=1 // pred_check_branch
      %35 = sbr.rel (0) target = $region13
    $region12: #{forward_pallas.1} parent=1 // pred_region
      _
    $region13: #{forward_pallas.1} parent=1 // pred_fallthru
      _
    // Predicated region
    $region14: #{forward_pallas.1} parent=1 // pred_check
      _
    $region15: #{forward_pallas.1} parent=1 // pred_check_branch
      %37 = sbr.rel (0) target = $region17
    $region16: #{forward_pallas.1} parent=1 // pred_region
      _
    $region17: #{forward_pallas.1} parent=1 // pred_fallthru
      _
    // Predicated region
    $region18: #{forward_pallas.1} parent=1 // pred_check
      _
    $region19: #{forward_pallas.1} parent=1 // pred_check_branch
      %39 = sbr.rel (0) target = $region21
    $region20: #{forward_pallas.1} parent=1 // pred_region
      %41 = vsyncadd [#allocation6], 0
      %s42 = sshll.u32 %s4, 4
      %s43 = int_to_ptr.hbm [resolvable:$true] %s42
      %s44 = sshll.u32 [#allocation5], 4
      %s45 = int_to_ptr.vmem [resolvable:$true] %s44
      %50 = dma.hbm_to_vmem [thread:$0]  %s43, 1024, %s45, [#allocation6], 128, 128, 8
    $region21: #{forward_pallas.1} parent=1 // pred_fallthru
      _
    // Predicated region
    $region22: #{forward_pallas.1} parent=1 // pred_check
      _
    $region23: #{forward_pallas.1} parent=1 // pred_check_branch
      %52 = sbr.rel (0) target = $region25
    $region24: #{forward_pallas.1} parent=1 // pred_region
      _
    $region25: #{forward_pallas.1} parent=1 // pred_fallthru
      _
    // Predicated region
    $region26: #{forward_pallas.1} parent=1 // pred_check
      _
    $region27: #{forward_pallas.1} parent=1 // pred_check_branch
      %54 = sbr.rel (0) target = $region29
    $region28: #{forward_pallas.1} parent=1 // pred_region
      %56 = vsyncadd [#allocation6], 0
      %s57 = sshll.u32 %s6, 4
      %s58 = int_to_ptr.hbm [resolvable:$true] %s57
      %s59 = sshll.u32 [#allocation7], 4
      %s60 = int_to_ptr.vmem [resolvable:$true] %s59
      %65 = dma.hbm_to_vmem [thread:$0]  %s58, 1024, %s60, [#allocation6], 256, 256, 16
    $region29: #{forward_pallas.1} parent=1 // pred_fallthru
      _
    // Predicated region
    $region30: #{forward_pallas.1} parent=1 // pred_check
      _
    $region31: #{forward_pallas.1} parent=1 // pred_check_branch
      %67 = sbr.rel (0) target = $region33
    $region32: #{forward_pallas.1} parent=1 // pred_region
      _
    $region33: #{forward_pallas.1} parent=1 // pred_fallthru
      _
    // Predicated region
    $region34: #{forward_pallas.1} parent=1 // pred_check
      _
    $region35: #{forward_pallas.1} parent=1 // pred_check_branch
      %69 = sbr.rel (0) target = $region37
    $region36: #{forward_pallas.1} parent=1 // pred_region
      _
    $region37: #{forward_pallas.1} parent=1 // pred_fallthru
      _
    // Predicated region
    $region38: #{forward_pallas.1} parent=1 // pred_check
      _
    $region39: #{forward_pallas.1} parent=1 // pred_check_branch
      %71 = sbr.rel (0) target = $region41
    $region40: #{forward_pallas.1} parent=1 // pred_region
      %73 = vsyncadd [#allocation9], 0
      %s74 = sshll.u32 %s9, 4
      %s75 = int_to_ptr.hbm [resolvable:$true] %s74
      %s76 = sshll.u32 [#allocation8], 4
      %s77 = int_to_ptr.vmem [resolvable:$true] %s76
      %82 = dma.hbm_to_vmem [thread:$0]  %s75, 4096, %s77, [#allocation9], 256, 256, 16
    $region41: #{forward_pallas.1} parent=1 // pred_fallthru
      _
    // Predicated region
    $region42: #{forward_pallas.1} parent=1 // pred_check
      _
    $region43: #{forward_pallas.1} parent=1 // pred_check_branch
      %84 = sbr.rel (0) target = $region45
    $region44: #{forward_pallas.1} parent=1 // pred_region
      _
    $region45: #{forward_pallas.1} parent=1 // pred_fallthru
      _
    // Predicated region
    $region46: #{forward_pallas.1} parent=1 // pred_check
      _
    $region47: #{forward_pallas.1} parent=1 // pred_check_branch
      %86 = sbr.rel (0) target = $region49
    $region48: #{forward_pallas.1} parent=1 // pred_region
      _
    $region49: #{forward_pallas.1} parent=1 // pred_fallthru
      _
    // Predicated region
    $region50: #{forward_pallas.1} parent=1 // pred_check
      _
    $region51: #{forward_pallas.1} parent=1 // pred_check_branch
      %88 = sbr.rel (0) target = $region53
    $region52: #{forward_pallas.1} parent=1 // pred_region
      _
    $region53: #{forward_pallas.1} parent=1 // pred_fallthru
      _
    // Predicated region
    $region54: #{forward_pallas.1} parent=1 // pred_check
      _
    $region55: #{forward_pallas.1} parent=1 // pred_check_branch
      %90 = sbr.rel (0) target = $region57
    $region56: #{forward_pallas.1} parent=1 // pred_region
      %92 = dma.done [#allocation4], 16
    $region57: #{forward_pallas.1} parent=1 // pred_fallthru
      _
    // Predicated region
    $region58: #{forward_pallas.1} parent=1 // pred_check
      _
    $region59: #{forward_pallas.1} parent=1 // pred_check_branch
      %94 = sbr.rel (0) target = $region61
    $region60: #{forward_pallas.1} parent=1 // pred_region
      %96 = dma.done [#allocation6], 1024
    $region61: #{forward_pallas.1} parent=1 // pred_fallthru
      _
    // Predicated region
    $region62: #{forward_pallas.1} parent=1 // pred_check
      _
    $region63: #{forward_pallas.1} parent=1 // pred_check_branch
      %98 = sbr.rel (0) target = $region65
    $region64: #{forward_pallas.1} parent=1 // pred_region
      %100 = dma.done [#allocation6], 1024
    $region65: #{forward_pallas.1} parent=1 // pred_fallthru
      _
    // Predicated region
    $region66: #{forward_pallas.1} parent=1 // pred_check
      _
    $region67: #{forward_pallas.1} parent=1 // pred_check_branch
      %102 = sbr.rel (0) target = $region69
    $region68: #{forward_pallas.1} parent=1 // pred_region
      %104 = dma.done [#allocation9], 4096
    $region69: #{forward_pallas.1} parent=1 // pred_fallthru
      _
    %v105 = vld [vmem:[%s0] sm:$0xff]
    %v106 = vld [vmem:[%s0 + $0x8] sm:$0xff]
    %v107 = vld [vmem:[%s0 + $0x10] sm:$0xff]
    %v108 = vld [vmem:[%s0 + $0x18] sm:$0xff]
    %v109 = vld [vmem:[%s0 + $0x20] sm:$0xff]
    %v110 = vld [vmem:[%s0 + $0x28] sm:$0xff]
    %v111 = vld [vmem:[%s0 + $0x30] sm:$0xff]
    %v112 = vld [vmem:[%s0 + $0x38] sm:$0xff]
    %v113 = vld [vmem:[#allocation3] sm:$0x1]
    %115 = vset.pattern.permute.xlu0 0
    %116 = vperm.xlu0 %115, %v105
    %v117 = vpop.permute.xlu0 %116
    %120 = vset.pattern.permute.xlu0 0
    %121 = vperm.xlu0 %120, %v106
    %v122 = vpop.permute.xlu0 %121
    %125 = vset.pattern.permute.xlu0 0
    %126 = vperm.xlu0 %125, %v107
    %v127 = vpop.permute.xlu0 %126
    %130 = vset.pattern.permute.xlu0 0
    %131 = vperm.xlu0 %130, %v108
    %v132 = vpop.permute.xlu0 %131
    %135 = vset.pattern.permute.xlu0 0
    %136 = vperm.xlu0 %135, %v109
    %v137 = vpop.permute.xlu0 %136
    %140 = vset.pattern.permute.xlu0 0
    %141 = vperm.xlu0 %140, %v110
    %v142 = vpop.permute.xlu0 %141
    %145 = vset.pattern.permute.xlu0 0
    %146 = vperm.xlu0 %145, %v111
    %v147 = vpop.permute.xlu0 %146
    %150 = vset.pattern.permute.xlu0 0
    %151 = vperm.xlu0 %150, %v112
    %v152 = vpop.permute.xlu0 %151
    %v155 = vperm.slane %v113, 0
    %v157 = vmul.f32 %v117, %v155
    %v158 = vmul.f32 %v122, %v155
    %v159 = vmul.f32 %v127, %v155
    %v160 = vmul.f32 %v132, %v155
    %v161 = vmul.f32 %v137, %v155
    %v162 = vmul.f32 %v142, %v155
    %v163 = vmul.f32 %v147, %v155
    %v164 = vmul.f32 %v152, %v155
    %v165 = vld [vmem:[%s3] sm:$0x1]
    %v167 = vperm.slane %v165, 0
    %v169 = vadd.f32 %v157, %v167
    %v170 = vadd.f32 %v158, %v167
    %v171 = vadd.f32 %v159, %v167
    %v172 = vadd.f32 %v160, %v167
    %v173 = vadd.f32 %v161, %v167
    %v174 = vadd.f32 %v162, %v167
    %v175 = vadd.f32 %v163, %v167
    %v176 = vadd.f32 %v164, %v167
    %v177 = vld [vmem:[%s2] sm:$0xff]
    %v178 = vld [vmem:[%s2 + $0x8] sm:$0xff]
    %v179 = vld [vmem:[%s2 + $0x10] sm:$0xff]
    %v180 = vld [vmem:[%s2 + $0x18] sm:$0xff]
    %vm181 = vcmask 261120
    %v183 = vsel %vm181, 0.0, 0
    %185 = vmatpush.msra.mxu0 0.0
    %186 = vmatpush.msra.mxu0 0.0
    %187 = vmatpush.msra.mxu0 0.0
    %188 = vmatpush.msra.mxu0 0.0
    %189 = vmatpush.msra.mxu0 0.0
    %190 = vmatpush.msra.mxu0 0.0
    %191 = vmatpush.msra.mxu0 0.0
    %192 = vmatpush.msra.mxu0 0.0
    %193 = vmatpush.msra.mxu0 0.0
    %194 = vmatpush.msra.mxu0 0.0
    %195 = vmatpush.msra.mxu0 0.0
    %196 = vmatpush.msra.mxu0 0.0
    %197 = vmatpush.msra.mxu0 %v180
    %198 = vmatpush.msra.mxu0 %v179
    %199 = vmatpush.msra.mxu0 %v178
    %200 = vmatpush.msra.mxu0 %v177
    %201 = vmatmul.f32.gmra.mxu0 %v183
    %v202 = vpop.f32.mrf.mxu0
    %v203 = vadd.f32 0.0, %v202
    %204 = vdwg.mxu0
    %v205 = vadd.f32 %v169, %v203
    %v206 = vxor.u32 %v205, 2147483648
    %v207 = vmul.f32 %v206, 1.442695
    %v208 = vpow.pop %v207
    %v209 = vadd.f32 %v208, 1.0
    %v210 = vrcp.pop %v209
    %v211 = vmul.f32 %v209, %v210
    %v212 = vsub.f32 1.0, %v211
    %v213 = vmul.f32 %v210, %v212
    %v214 = vadd.f32 %v210, %v213
    %vm215 = vweird.f32 %v209
    %vm216 = vweird.f32 %v210
    %vm217 = vmor %vm215, %vm216
    %v218 = vsel %vm217, %v210, %v214
    %v219 = vand.u32 2147483647, %v209
    %vm220 = vcmp.eq.f32.partialorder %v219, 8.507059e+37
    %v221 = vand.u32 %v209, 2147483648
    %v222 = vor.u32 1.1754944e-38, %v221
    %v223 = vsel %vm220, %v222, %v218
    %v224 = vmul.f32 1.0, %v223
    %v225 = vtanh.pop %v205
    %v226 = vmul.f32 %v224, 0.0
    %228 = vrot.lane.b32.xlu0 %v225, 64
    %v229 = vpop.permute.xlu0 %228
    %v231 = vmul.f32 %v224, %v229
    %233 = vrot.lane.b32.xlu0 %v231, 32
    %v234 = vpop.permute.xlu0 %233
    %v236 = vadd.f32 %v226, %v234
    %v237 = vtanh.pop %v236
    %239 = vrot.lane.b32.xlu0 %v237, 64
    %v240 = vpop.permute.xlu0 %239
    %v242 = vmul.f32 %v224, %v240
    %244 = vrot.lane.b32.xlu0 %v242, 32
    %v245 = vpop.permute.xlu0 %244
    %v247 = vsel %vm181, %v245, 0.0
    %v248 = vld [vmem:[#allocation5] sm:$0xff]
    %v249 = vld [vmem:[#allocation5 + $0x8] sm:$0xff]
    %v250 = vld [vmem:[#allocation5 + $0x10] sm:$0xff]
    %v251 = vld [vmem:[#allocation5 + $0x18] sm:$0xff]
    %v252 = vld [vmem:[#allocation5 + $0x20] sm:$0xff]
    %v253 = vld [vmem:[#allocation5 + $0x28] sm:$0xff]
    %v254 = vld [vmem:[#allocation5 + $0x30] sm:$0xff]
    %v255 = vld [vmem:[#allocation5 + $0x38] sm:$0xff]
    %v256 = vld [vmem:[%s5] sm:$0x1]
    %v258 = vperm.slane %v256, 0
    %vm260 = vcmask 523264
    %v262 = vsel %vm260, %v247, 0
    %264 = vmatpush.msra.mxu0 0.0
    %265 = vmatpush.msra.mxu0 0.0
    %266 = vmatpush.msra.mxu0 0.0
    %267 = vmatpush.msra.mxu0 0.0
    %268 = vmatpush.msra.mxu0 0.0
    %269 = vmatpush.msra.mxu0 0.0
    %270 = vmatpush.msra.mxu0 0.0
    %271 = vmatpush.msra.mxu0 0.0
    %272 = vmatpush.msra.mxu0 %v255
    %273 = vmatpush.msra.mxu0 %v254
    %274 = vmatpush.msra.mxu0 %v253
    %275 = vmatpush.msra.mxu0 %v252
    %276 = vmatpush.msra.mxu0 %v251
    %277 = vmatpush.msra.mxu0 %v250
    %278 = vmatpush.msra.mxu0 %v249
    %279 = vmatpush.msra.mxu0 %v248
    %280 = vmatmul.f32.gmra.mxu0 %v262
    %v281 = vpop.f32.mrf.mxu0
    %v282 = vadd.f32 %v258, %v281
    %283 = vdwg.mxu0
    %v284 = vxor.u32 %v282, 2147483648
    %v285 = vmul.f32 %v284, 1.442695
    %v286 = vpow.pop %v285
    %v287 = vadd.f32 %v286, 1.0
    %v288 = vrcp.pop %v287
    %v289 = vmul.f32 %v287, %v288
    %v290 = vsub.f32 1.0, %v289
    %v291 = vmul.f32 %v288, %v290
    %v292 = vadd.f32 %v288, %v291
    %vm293 = vweird.f32 %v287
    %vm294 = vweird.f32 %v288
    %vm295 = vmor %vm293, %vm294
    %v296 = vsel %vm295, %v288, %v292
    %v297 = vand.u32 2147483647, %v287
    %vm298 = vcmp.eq.f32.partialorder %v297, 8.507059e+37
    %v299 = vand.u32 %v287, 2147483648
    %v300 = vor.u32 1.1754944e-38, %v299
    %v301 = vsel %vm298, %v300, %v296
    %v302 = vmul.f32 1.0, %v301
    %v303 = vtanh.pop %v282
    %v304 = vmul.f32 %v302, 0.0
    %306 = vrot.lane.b32.xlu0 %v303, 64
    %v307 = vpop.permute.xlu0 %306
    %v309 = vmul.f32 %v302, %v307
    %311 = vrot.lane.b32.xlu0 %v309, 32
    %v312 = vpop.permute.xlu0 %311
    %v314 = vadd.f32 %v304, %v312
    %v315 = vtanh.pop %v314
    %317 = vrot.lane.b32.xlu0 %v315, 64
    %v318 = vpop.permute.xlu0 %317
    %v320 = vmul.f32 %v302, %v318
    %v321 = vsel %vm181, %v245, 0
    %323 = vmatpush.msra.mxu0 0.0
    %324 = vmatpush.msra.mxu0 0.0
    %325 = vmatpush.msra.mxu0 0.0
    %326 = vmatpush.msra.mxu0 0.0
    %327 = vmatpush.msra.mxu0 0.0
    %328 = vmatpush.msra.mxu0 0.0
    %329 = vmatpush.msra.mxu0 0.0
    %330 = vmatpush.msra.mxu0 0.0
    %331 = vmatpush.msra.mxu0 0.0
    %332 = vmatpush.msra.mxu0 0.0
    %333 = vmatpush.msra.mxu0 0.0
    %334 = vmatpush.msra.mxu0 0.0
    %335 = vmatpush.msra.mxu0 %v180
    %336 = vmatpush.msra.mxu0 %v179
    %337 = vmatpush.msra.mxu0 %v178
    %338 = vmatpush.msra.mxu0 %v177
    %339 = vmatmul.f32.gmra.mxu0 %v321
    %v340 = vpop.f32.mrf.mxu0
    %v341 = vadd.f32 0.0, %v340
    %342 = vdwg.mxu0
    %v343 = vadd.f32 %v170, %v341
    %v344 = vxor.u32 %v343, 2147483648
    %v345 = vmul.f32 %v344, 1.442695
    %v346 = vpow.pop %v345
    %v347 = vadd.f32 %v346, 1.0
    %v348 = vrcp.pop %v347
    %v349 = vmul.f32 %v347, %v348
    %v350 = vsub.f32 1.0, %v349
    %v351 = vmul.f32 %v348, %v350
    %v352 = vadd.f32 %v348, %v351
    %vm353 = vweird.f32 %v347
    %vm354 = vweird.f32 %v348
    %vm355 = vmor %vm353, %vm354
    %v356 = vsel %vm355, %v348, %v352
    %v357 = vand.u32 2147483647, %v347
    %vm358 = vcmp.eq.f32.partialorder %v357, 8.507059e+37
    %v359 = vand.u32 %v347, 2147483648
    %v360 = vor.u32 1.1754944e-38, %v359
    %v361 = vsel %vm358, %v360, %v356
    %v362 = vmul.f32 1.0, %v361
    %v363 = vtanh.pop %v343
    %v364 = vmul.f32 %v362, %v236
    %366 = vrot.lane.b32.xlu0 %v363, 64
    %v367 = vpop.permute.xlu0 %366
    %v369 = vmul.f32 %v362, %v367
    %371 = vrot.lane.b32.xlu0 %v369, 32
    %v372 = vpop.permute.xlu0 %371
    %v374 = vadd.f32 %v364, %v372
    %v375 = vtanh.pop %v374
    %377 = vrot.lane.b32.xlu0 %v375, 64
    %v378 = vpop.permute.xlu0 %377
    %v380 = vmul.f32 %v362, %v378
    %382 = vrot.lane.b32.xlu0 %v380, 32
    %v383 = vpop.permute.xlu0 %382
    %386 = vrot.lane.b32.xlu0 %v320, 64
    %v387 = vpop.permute.xlu0 %386
    %v389 = vsel %vm181, %v383, %v387
    %v391 = vsel %vm260, %v389, 0
    %393 = vmatpush.msra.mxu0 0.0
    %394 = vmatpush.msra.mxu0 0.0
    %395 = vmatpush.msra.mxu0 0.0
    %396 = vmatpush.msra.mxu0 0.0
    %397 = vmatpush.msra.mxu0 0.0
    %398 = vmatpush.msra.mxu0 0.0
    %399 = vmatpush.msra.mxu0 0.0
    %400 = vmatpush.msra.mxu0 0.0
    %401 = vmatpush.msra.mxu0 %v255
    %402 = vmatpush.msra.mxu0 %v254
    %403 = vmatpush.msra.mxu0 %v253
    %404 = vmatpush.msra.mxu0 %v252
    %405 = vmatpush.msra.mxu0 %v251
    %406 = vmatpush.msra.mxu0 %v250
    %407 = vmatpush.msra.mxu0 %v249
    %408 = vmatpush.msra.mxu0 %v248
    %409 = vmatmul.f32.gmra.mxu0 %v391
    %v410 = vpop.f32.mrf.mxu0
    %v411 = vadd.f32 %v258, %v410
    %412 = vdwg.mxu0
    %v413 = vxor.u32 %v411, 2147483648
    %v414 = vmul.f32 %v413, 1.442695
    %v415 = vpow.pop %v414
    %v416 = vadd.f32 %v415, 1.0
    %v417 = vrcp.pop %v416
    %v418 = vmul.f32 %v416, %v417
    %v419 = vsub.f32 1.0, %v418
    %v420 = vmul.f32 %v417, %v419
    %v421 = vadd.f32 %v417, %v420
    %vm422 = vweird.f32 %v416
    %vm423 = vweird.f32 %v417
    %vm424 = vmor %vm422, %vm423
    %v425 = vsel %vm424, %v417, %v421
    %v426 = vand.u32 2147483647, %v416
    %vm427 = vcmp.eq.f32.partialorder %v426, 8.507059e+37
    %v428 = vand.u32 %v416, 2147483648
    %v429 = vor.u32 1.1754944e-38, %v428
    %v430 = vsel %vm427, %v429, %v425
    %v431 = vmul.f32 1.0, %v430
    %v432 = vtanh.pop %v411
    %v433 = vmul.f32 %v431, %v314
    %435 = vrot.lane.b32.xlu0 %v432, 64
    %v436 = vpop.permute.xlu0 %435
    %v438 = vmul.f32 %v431, %v436
    %440 = vrot.lane.b32.xlu0 %v438, 32
    %v441 = vpop.permute.xlu0 %440
    %v443 = vadd.f32 %v433, %v441
    %v444 = vtanh.pop %v443
    %446 = vrot.lane.b32.xlu0 %v444, 64
    %v447 = vpop.permute.xlu0 %446
    %v449 = vmul.f32 %v431, %v447
    %v450 = vsel %vm181, %v383, 0
    %452 = vmatpush.msra.mxu0 0.0
    %453 = vmatpush.msra.mxu0 0.0
    %454 = vmatpush.msra.mxu0 0.0
    %455 = vmatpush.msra.mxu0 0.0
    %456 = vmatpush.msra.mxu0 0.0
    %457 = vmatpush.msra.mxu0 0.0
    %458 = vmatpush.msra.mxu0 0.0
    %459 = vmatpush.msra.mxu0 0.0
    %460 = vmatpush.msra.mxu0 0.0
    %461 = vmatpush.msra.mxu0 0.0
    %462 = vmatpush.msra.mxu0 0.0
    %463 = vmatpush.msra.mxu0 0.0
    %464 = vmatpush.msra.mxu0 %v180
    %465 = vmatpush.msra.mxu0 %v179
    %466 = vmatpush.msra.mxu0 %v178
    %467 = vmatpush.msra.mxu0 %v177
    %468 = vmatmul.f32.gmra.mxu0 %v450
    %v469 = vpop.f32.mrf.mxu0
    %v470 = vadd.f32 0.0, %v469
    %471 = vdwg.mxu0
    %v472 = vadd.f32 %v171, %v470
    %v473 = vxor.u32 %v472, 2147483648
    %v474 = vmul.f32 %v473, 1.442695
    %v475 = vpow.pop %v474
    %v476 = vadd.f32 %v475, 1.0
    %v477 = vrcp.pop %v476
    %v478 = vmul.f32 %v476, %v477
    %v479 = vsub.f32 1.0, %v478
    %v480 = vmul.f32 %v477, %v479
    %v481 = vadd.f32 %v477, %v480
    %vm482 = vweird.f32 %v476
    %vm483 = vweird.f32 %v477
    %vm484 = vmor %vm482, %vm483
    %v485 = vsel %vm484, %v477, %v481
    %v486 = vand.u32 2147483647, %v476
    %vm487 = vcmp.eq.f32.partialorder %v486, 8.507059e+37
    %v488 = vand.u32 %v476, 2147483648
    %v489 = vor.u32 1.1754944e-38, %v488
    %v490 = vsel %vm487, %v489, %v485
    %v491 = vmul.f32 1.0, %v490
    %v492 = vtanh.pop %v472
    %v493 = vmul.f32 %v491, %v374
    %495 = vrot.lane.b32.xlu0 %v492, 64
    %v496 = vpop.permute.xlu0 %495
    %v498 = vmul.f32 %v491, %v496
    %500 = vrot.lane.b32.xlu0 %v498, 32
    %v501 = vpop.permute.xlu0 %500
    %v503 = vadd.f32 %v493, %v501
    %v504 = vtanh.pop %v503
    %506 = vrot.lane.b32.xlu0 %v504, 64
    %v507 = vpop.permute.xlu0 %506
    %v509 = vmul.f32 %v491, %v507
    %511 = vrot.lane.b32.xlu0 %v509, 32
    %v512 = vpop.permute.xlu0 %511
    %515 = vrot.lane.b32.xlu0 %v449, 64
    %v516 = vpop.permute.xlu0 %515
    %v518 = vsel %vm181, %v512, %v516
    %v520 = vsel %vm260, %v518, 0
    %522 = vmatpush.msra.mxu0 0.0
    %523 = vmatpush.msra.mxu0 0.0
    %524 = vmatpush.msra.mxu0 0.0
    %525 = vmatpush.msra.mxu0 0.0
    %526 = vmatpush.msra.mxu0 0.0
    %527 = vmatpush.msra.mxu0 0.0
    %528 = vmatpush.msra.mxu0 0.0
    %529 = vmatpush.msra.mxu0 0.0
    %530 = vmatpush.msra.mxu0 %v255
    %531 = vmatpush.msra.mxu0 %v254
    %532 = vmatpush.msra.mxu0 %v253
    %533 = vmatpush.msra.mxu0 %v252
    %534 = vmatpush.msra.mxu0 %v251
    %535 = vmatpush.msra.mxu0 %v250
    %536 = vmatpush.msra.mxu0 %v249
    %537 = vmatpush.msra.mxu0 %v248
    %538 = vmatmul.f32.gmra.mxu0 %v520
    %v539 = vpop.f32.mrf.mxu0
    %v540 = vadd.f32 %v258, %v539
    %541 = vdwg.mxu0
    %v542 = vxor.u32 %v540, 2147483648
    %v543 = vmul.f32 %v542, 1.442695
    %v544 = vpow.pop %v543
    %v545 = vadd.f32 %v544, 1.0
    %v546 = vrcp.pop %v545
    %v547 = vmul.f32 %v545, %v546
    %v548 = vsub.f32 1.0, %v547
    %v549 = vmul.f32 %v546, %v548
    %v550 = vadd.f32 %v546, %v549
    %vm551 = vweird.f32 %v545
    %vm552 = vweird.f32 %v546
    %vm553 = vmor %vm551, %vm552
    %v554 = vsel %vm553, %v546, %v550
    %v555 = vand.u32 2147483647, %v545
    %vm556 = vcmp.eq.f32.partialorder %v555, 8.507059e+37
    %v557 = vand.u32 %v545, 2147483648
    %v558 = vor.u32 1.1754944e-38, %v557
    %v559 = vsel %vm556, %v558, %v554
    %v560 = vmul.f32 1.0, %v559
    %v561 = vtanh.pop %v540
    %v562 = vmul.f32 %v560, %v443
    %564 = vrot.lane.b32.xlu0 %v561, 64
    %v565 = vpop.permute.xlu0 %564
    %v567 = vmul.f32 %v560, %v565
    %569 = vrot.lane.b32.xlu0 %v567, 32
    %v570 = vpop.permute.xlu0 %569
    %v572 = vadd.f32 %v562, %v570
    %v573 = vtanh.pop %v572
    %575 = vrot.lane.b32.xlu0 %v573, 64
    %v576 = vpop.permute.xlu0 %575
    %v578 = vmul.f32 %v560, %v576
    %v579 = vsel %vm181, %v512, 0
    %581 = vmatpush.msra.mxu0 0.0
    %582 = vmatpush.msra.mxu0 0.0
    %583 = vmatpush.msra.mxu0 0.0
    %584 = vmatpush.msra.mxu0 0.0
    %585 = vmatpush.msra.mxu0 0.0
    %586 = vmatpush.msra.mxu0 0.0
    %587 = vmatpush.msra.mxu0 0.0
    %588 = vmatpush.msra.mxu0 0.0
    %589 = vmatpush.msra.mxu0 0.0
    %590 = vmatpush.msra.mxu0 0.0
    %591 = vmatpush.msra.mxu0 0.0
    %592 = vmatpush.msra.mxu0 0.0
    %593 = vmatpush.msra.mxu0 %v180
    %594 = vmatpush.msra.mxu0 %v179
    %595 = vmatpush.msra.mxu0 %v178
    %596 = vmatpush.msra.mxu0 %v177
    %597 = vmatmul.f32.gmra.mxu0 %v579
    %v598 = vpop.f32.mrf.mxu0
    %v599 = vadd.f32 0.0, %v598
    %600 = vdwg.mxu0
    %v601 = vadd.f32 %v172, %v599
    %v602 = vxor.u32 %v601, 2147483648
    %v603 = vmul.f32 %v602, 1.442695
    %v604 = vpow.pop %v603
    %v605 = vadd.f32 %v604, 1.0
    %v606 = vrcp.pop %v605
    %v607 = vmul.f32 %v605, %v606
    %v608 = vsub.f32 1.0, %v607
    %v609 = vmul.f32 %v606, %v608
    %v610 = vadd.f32 %v606, %v609
    %vm611 = vweird.f32 %v605
    %vm612 = vweird.f32 %v606
    %vm613 = vmor %vm611, %vm612
    %v614 = vsel %vm613, %v606, %v610
    %v615 = vand.u32 2147483647, %v605
    %vm616 = vcmp.eq.f32.partialorder %v615, 8.507059e+37
    %v617 = vand.u32 %v605, 2147483648
    %v618 = vor.u32 1.1754944e-38, %v617
    %v619 = vsel %vm616, %v618, %v614
    %v620 = vmul.f32 1.0, %v619
    %v621 = vtanh.pop %v601
    %v622 = vmul.f32 %v620, %v503
    %624 = vrot.lane.b32.xlu0 %v621, 64
    %v625 = vpop.permute.xlu0 %624
    %v627 = vmul.f32 %v620, %v625
    %629 = vrot.lane.b32.xlu0 %v627, 32
    %v630 = vpop.permute.xlu0 %629
    %v632 = vadd.f32 %v622, %v630
    %v633 = vtanh.pop %v632
    %635 = vrot.lane.b32.xlu0 %v633, 64
    %v636 = vpop.permute.xlu0 %635
    %v638 = vmul.f32 %v620, %v636
    %640 = vrot.lane.b32.xlu0 %v638, 32
    %v641 = vpop.permute.xlu0 %640
    %644 = vrot.lane.b32.xlu0 %v578, 64
    %v645 = vpop.permute.xlu0 %644
    %v647 = vsel %vm181, %v641, %v645
    %v649 = vsel %vm260, %v647, 0
    %651 = vmatpush.msra.mxu0 0.0
    %652 = vmatpush.msra.mxu0 0.0
    %653 = vmatpush.msra.mxu0 0.0
    %654 = vmatpush.msra.mxu0 0.0
    %655 = vmatpush.msra.mxu0 0.0
    %656 = vmatpush.msra.mxu0 0.0
    %657 = vmatpush.msra.mxu0 0.0
    %658 = vmatpush.msra.mxu0 0.0
    %659 = vmatpush.msra.mxu0 %v255
    %660 = vmatpush.msra.mxu0 %v254
    %661 = vmatpush.msra.mxu0 %v253
    %662 = vmatpush.msra.mxu0 %v252
    %663 = vmatpush.msra.mxu0 %v251
    %664 = vmatpush.msra.mxu0 %v250
    %665 = vmatpush.msra.mxu0 %v249
    %666 = vmatpush.msra.mxu0 %v248
    %667 = vmatmul.f32.gmra.mxu0 %v649
    %v668 = vpop.f32.mrf.mxu0
    %v669 = vadd.f32 %v258, %v668
    %670 = vdwg.mxu0
    %v671 = vxor.u32 %v669, 2147483648
    %v672 = vmul.f32 %v671, 1.442695
    %v673 = vpow.pop %v672
    %v674 = vadd.f32 %v673, 1.0
    %v675 = vrcp.pop %v674
    %v676 = vmul.f32 %v674, %v675
    %v677 = vsub.f32 1.0, %v676
    %v678 = vmul.f32 %v675, %v677
    %v679 = vadd.f32 %v675, %v678
    %vm680 = vweird.f32 %v674
    %vm681 = vweird.f32 %v675
    %vm682 = vmor %vm680, %vm681
    %v683 = vsel %vm682, %v675, %v679
    %v684 = vand.u32 2147483647, %v674
    %vm685 = vcmp.eq.f32.partialorder %v684, 8.507059e+37
    %v686 = vand.u32 %v674, 2147483648
    %v687 = vor.u32 1.1754944e-38, %v686
    %v688 = vsel %vm685, %v687, %v683
    %v689 = vmul.f32 1.0, %v688
    %v690 = vtanh.pop %v669
    %v691 = vmul.f32 %v689, %v572
    %693 = vrot.lane.b32.xlu0 %v690, 64
    %v694 = vpop.permute.xlu0 %693
    %v696 = vmul.f32 %v689, %v694
    %698 = vrot.lane.b32.xlu0 %v696, 32
    %v699 = vpop.permute.xlu0 %698
    %v701 = vadd.f32 %v691, %v699
    %v702 = vtanh.pop %v701
    %704 = vrot.lane.b32.xlu0 %v702, 64
    %v705 = vpop.permute.xlu0 %704
    %v707 = vmul.f32 %v689, %v705
    %v708 = vsel %vm181, %v641, 0
    %710 = vmatpush.msra.mxu0 0.0
    %711 = vmatpush.msra.mxu0 0.0
    %712 = vmatpush.msra.mxu0 0.0
    %713 = vmatpush.msra.mxu0 0.0
    %714 = vmatpush.msra.mxu0 0.0
    %715 = vmatpush.msra.mxu0 0.0
    %716 = vmatpush.msra.mxu0 0.0
    %717 = vmatpush.msra.mxu0 0.0
    %718 = vmatpush.msra.mxu0 0.0
    %719 = vmatpush.msra.mxu0 0.0
    %720 = vmatpush.msra.mxu0 0.0
    %721 = vmatpush.msra.mxu0 0.0
    %722 = vmatpush.msra.mxu0 %v180
    %723 = vmatpush.msra.mxu0 %v179
    %724 = vmatpush.msra.mxu0 %v178
    %725 = vmatpush.msra.mxu0 %v177
    %726 = vmatmul.f32.gmra.mxu0 %v708
    %v727 = vpop.f32.mrf.mxu0
    %v728 = vadd.f32 0.0, %v727
    %729 = vdwg.mxu0
    %v730 = vadd.f32 %v173, %v728
    %v731 = vxor.u32 %v730, 2147483648
    %v732 = vmul.f32 %v731, 1.442695
    %v733 = vpow.pop %v732
    %v734 = vadd.f32 %v733, 1.0
    %v735 = vrcp.pop %v734
    %v736 = vmul.f32 %v734, %v735
    %v737 = vsub.f32 1.0, %v736
    %v738 = vmul.f32 %v735, %v737
    %v739 = vadd.f32 %v735, %v738
    %vm740 = vweird.f32 %v734
    %vm741 = vweird.f32 %v735
    %vm742 = vmor %vm740, %vm741
    %v743 = vsel %vm742, %v735, %v739
    %v744 = vand.u32 2147483647, %v734
    %vm745 = vcmp.eq.f32.partialorder %v744, 8.507059e+37
    %v746 = vand.u32 %v734, 2147483648
    %v747 = vor.u32 1.1754944e-38, %v746
    %v748 = vsel %vm745, %v747, %v743
    %v749 = vmul.f32 1.0, %v748
    %v750 = vtanh.pop %v730
    %v751 = vmul.f32 %v749, %v632
    %753 = vrot.lane.b32.xlu0 %v750, 64
    %v754 = vpop.permute.xlu0 %753
    %v756 = vmul.f32 %v749, %v754
    %758 = vrot.lane.b32.xlu0 %v756, 32
    %v759 = vpop.permute.xlu0 %758
    %v761 = vadd.f32 %v751, %v759
    %v762 = vtanh.pop %v761
    %764 = vrot.lane.b32.xlu0 %v762, 64
    %v765 = vpop.permute.xlu0 %764
    %v767 = vmul.f32 %v749, %v765
    %769 = vrot.lane.b32.xlu0 %v767, 32
    %v770 = vpop.permute.xlu0 %769
    %773 = vrot.lane.b32.xlu0 %v707, 64
    %v774 = vpop.permute.xlu0 %773
    %v776 = vsel %vm181, %v770, %v774
    %v778 = vsel %vm260, %v776, 0
    %780 = vmatpush.msra.mxu0 0.0
    %781 = vmatpush.msra.mxu0 0.0
    %782 = vmatpush.msra.mxu0 0.0
    %783 = vmatpush.msra.mxu0 0.0
    %784 = vmatpush.msra.mxu0 0.0
    %785 = vmatpush.msra.mxu0 0.0
    %786 = vmatpush.msra.mxu0 0.0
    %787 = vmatpush.msra.mxu0 0.0
    %788 = vmatpush.msra.mxu0 %v255
    %789 = vmatpush.msra.mxu0 %v254
    %790 = vmatpush.msra.mxu0 %v253
    %791 = vmatpush.msra.mxu0 %v252
    %792 = vmatpush.msra.mxu0 %v251
    %793 = vmatpush.msra.mxu0 %v250
    %794 = vmatpush.msra.mxu0 %v249
    %795 = vmatpush.msra.mxu0 %v248
    %796 = vmatmul.f32.gmra.mxu0 %v778
    %v797 = vpop.f32.mrf.mxu0
    %v798 = vadd.f32 %v258, %v797
    %799 = vdwg.mxu0
    %v800 = vxor.u32 %v798, 2147483648
    %v801 = vmul.f32 %v800, 1.442695
    %v802 = vpow.pop %v801
    %v803 = vadd.f32 %v802, 1.0
    %v804 = vrcp.pop %v803
    %v805 = vmul.f32 %v803, %v804
    %v806 = vsub.f32 1.0, %v805
    %v807 = vmul.f32 %v804, %v806
    %v808 = vadd.f32 %v804, %v807
    %vm809 = vweird.f32 %v803
    %vm810 = vweird.f32 %v804
    %vm811 = vmor %vm809, %vm810
    %v812 = vsel %vm811, %v804, %v808
    %v813 = vand.u32 2147483647, %v803
    %vm814 = vcmp.eq.f32.partialorder %v813, 8.507059e+37
    %v815 = vand.u32 %v803, 2147483648
    %v816 = vor.u32 1.1754944e-38, %v815
    %v817 = vsel %vm814, %v816, %v812
    %v818 = vmul.f32 1.0, %v817
    %v819 = vtanh.pop %v798
    %v820 = vmul.f32 %v818, %v701
    %822 = vrot.lane.b32.xlu0 %v819, 64
    %v823 = vpop.permute.xlu0 %822
    %v825 = vmul.f32 %v818, %v823
    %827 = vrot.lane.b32.xlu0 %v825, 32
    %v828 = vpop.permute.xlu0 %827
    %v830 = vadd.f32 %v820, %v828
    %v831 = vtanh.pop %v830
    %833 = vrot.lane.b32.xlu0 %v831, 64
    %v834 = vpop.permute.xlu0 %833
    %v836 = vmul.f32 %v818, %v834
    %v837 = vsel %vm181, %v770, 0
    %839 = vmatpush.msra.mxu0 0.0
    %840 = vmatpush.msra.mxu0 0.0
    %841 = vmatpush.msra.mxu0 0.0
    %842 = vmatpush.msra.mxu0 0.0
    %843 = vmatpush.msra.mxu0 0.0
    %844 = vmatpush.msra.mxu0 0.0
    %845 = vmatpush.msra.mxu0 0.0
    %846 = vmatpush.msra.mxu0 0.0
    %847 = vmatpush.msra.mxu0 0.0
    %848 = vmatpush.msra.mxu0 0.0
    %849 = vmatpush.msra.mxu0 0.0
    %850 = vmatpush.msra.mxu0 0.0
    %851 = vmatpush.msra.mxu0 %v180
    %852 = vmatpush.msra.mxu0 %v179
    %853 = vmatpush.msra.mxu0 %v178
    %854 = vmatpush.msra.mxu0 %v177
    %855 = vmatmul.f32.gmra.mxu0 %v837
    %v856 = vpop.f32.mrf.mxu0
    %v857 = vadd.f32 0.0, %v856
    %858 = vdwg.mxu0
    %v859 = vadd.f32 %v174, %v857
    %v860 = vxor.u32 %v859, 2147483648
    %v861 = vmul.f32 %v860, 1.442695
    %v862 = vpow.pop %v861
    %v863 = vadd.f32 %v862, 1.0
    %v864 = vrcp.pop %v863
    %v865 = vmul.f32 %v863, %v864
    %v866 = vsub.f32 1.0, %v865
    %v867 = vmul.f32 %v864, %v866
    %v868 = vadd.f32 %v864, %v867
    %vm869 = vweird.f32 %v863
    %vm870 = vweird.f32 %v864
    %vm871 = vmor %vm869, %vm870
    %v872 = vsel %vm871, %v864, %v868
    %v873 = vand.u32 2147483647, %v863
    %vm874 = vcmp.eq.f32.partialorder %v873, 8.507059e+37
    %v875 = vand.u32 %v863, 2147483648
    %v876 = vor.u32 1.1754944e-38, %v875
    %v877 = vsel %vm874, %v876, %v872
    %v878 = vmul.f32 1.0, %v877
    %v879 = vtanh.pop %v859
    %v880 = vmul.f32 %v878, %v761
    %882 = vrot.lane.b32.xlu0 %v879, 64
    %v883 = vpop.permute.xlu0 %882
    %v885 = vmul.f32 %v878, %v883
    %887 = vrot.lane.b32.xlu0 %v885, 32
    %v888 = vpop.permute.xlu0 %887
    %v890 = vadd.f32 %v880, %v888
    %v891 = vtanh.pop %v890
    %893 = vrot.lane.b32.xlu0 %v891, 64
    %v894 = vpop.permute.xlu0 %893
    %v896 = vmul.f32 %v878, %v894
    %898 = vrot.lane.b32.xlu0 %v896, 32
    %v899 = vpop.permute.xlu0 %898
    %902 = vrot.lane.b32.xlu0 %v836, 64
    %v903 = vpop.permute.xlu0 %902
    %v905 = vsel %vm181, %v899, %v903
    %v907 = vsel %vm260, %v905, 0
    %909 = vmatpush.msra.mxu0 0.0
    %910 = vmatpush.msra.mxu0 0.0
    %911 = vmatpush.msra.mxu0 0.0
    %912 = vmatpush.msra.mxu0 0.0
    %913 = vmatpush.msra.mxu0 0.0
    %914 = vmatpush.msra.mxu0 0.0
    %915 = vmatpush.msra.mxu0 0.0
    %916 = vmatpush.msra.mxu0 0.0
    %917 = vmatpush.msra.mxu0 %v255
    %918 = vmatpush.msra.mxu0 %v254
    %919 = vmatpush.msra.mxu0 %v253
    %920 = vmatpush.msra.mxu0 %v252
    %921 = vmatpush.msra.mxu0 %v251
    %922 = vmatpush.msra.mxu0 %v250
    %923 = vmatpush.msra.mxu0 %v249
    %924 = vmatpush.msra.mxu0 %v248
    %925 = vmatmul.f32.gmra.mxu0 %v907
    %v926 = vpop.f32.mrf.mxu0
    %v927 = vadd.f32 %v258, %v926
    %928 = vdwg.mxu0
    %v929 = vxor.u32 %v927, 2147483648
    %v930 = vmul.f32 %v929, 1.442695
    %v931 = vpow.pop %v930
    %v932 = vadd.f32 %v931, 1.0
    %v933 = vrcp.pop %v932
    %v934 = vmul.f32 %v932, %v933
    %v935 = vsub.f32 1.0, %v934
    %v936 = vmul.f32 %v933, %v935
    %v937 = vadd.f32 %v933, %v936
    %vm938 = vweird.f32 %v932
    %vm939 = vweird.f32 %v933
    %vm940 = vmor %vm938, %vm939
    %v941 = vsel %vm940, %v933, %v937
    %v942 = vand.u32 2147483647, %v932
    %vm943 = vcmp.eq.f32.partialorder %v942, 8.507059e+37
    %v944 = vand.u32 %v932, 2147483648
    %v945 = vor.u32 1.1754944e-38, %v944
    %v946 = vsel %vm943, %v945, %v941
    %v947 = vmul.f32 1.0, %v946
    %v948 = vtanh.pop %v927
    %v949 = vmul.f32 %v947, %v830
    %951 = vrot.lane.b32.xlu0 %v948, 64
    %v952 = vpop.permute.xlu0 %951
    %v954 = vmul.f32 %v947, %v952
    %956 = vrot.lane.b32.xlu0 %v954, 32
    %v957 = vpop.permute.xlu0 %956
    %v959 = vadd.f32 %v949, %v957
    %v960 = vtanh.pop %v959
    %962 = vrot.lane.b32.xlu0 %v960, 64
    %v963 = vpop.permute.xlu0 %962
    %v965 = vmul.f32 %v947, %v963
    %v966 = vsel %vm181, %v899, 0
    %968 = vmatpush.msra.mxu0 0.0
    %969 = vmatpush.msra.mxu0 0.0
    %970 = vmatpush.msra.mxu0 0.0
    %971 = vmatpush.msra.mxu0 0.0
    %972 = vmatpush.msra.mxu0 0.0
    %973 = vmatpush.msra.mxu0 0.0
    %974 = vmatpush.msra.mxu0 0.0
    %975 = vmatpush.msra.mxu0 0.0
    %976 = vmatpush.msra.mxu0 0.0
    %977 = vmatpush.msra.mxu0 0.0
    %978 = vmatpush.msra.mxu0 0.0
    %979 = vmatpush.msra.mxu0 0.0
    %980 = vmatpush.msra.mxu0 %v180
    %981 = vmatpush.msra.mxu0 %v179
    %982 = vmatpush.msra.mxu0 %v178
    %983 = vmatpush.msra.mxu0 %v177
    %984 = vmatmul.f32.gmra.mxu0 %v966
    %v985 = vpop.f32.mrf.mxu0
    %v986 = vadd.f32 0.0, %v985
    %987 = vdwg.mxu0
    %v988 = vadd.f32 %v175, %v986
    %v989 = vxor.u32 %v988, 2147483648
    %v990 = vmul.f32 %v989, 1.442695
    %v991 = vpow.pop %v990
    %v992 = vadd.f32 %v991, 1.0
    %v993 = vrcp.pop %v992
    %v994 = vmul.f32 %v992, %v993
    %v995 = vsub.f32 1.0, %v994
    %v996 = vmul.f32 %v993, %v995
    %v997 = vadd.f32 %v993, %v996
    %vm998 = vweird.f32 %v992
    %vm999 = vweird.f32 %v993
    %vm1000 = vmor %vm998, %vm999
    %v1001 = vsel %vm1000, %v993, %v997
    %v1002 = vand.u32 2147483647, %v992
    %vm1003 = vcmp.eq.f32.partialorder %v1002, 8.507059e+37
    %v1004 = vand.u32 %v992, 2147483648
    %v1005 = vor.u32 1.1754944e-38, %v1004
    %v1006 = vsel %vm1003, %v1005, %v1001
    %v1007 = vmul.f32 1.0, %v1006
    %v1008 = vtanh.pop %v988
    %v1009 = vmul.f32 %v1007, %v890
    %1011 = vrot.lane.b32.xlu0 %v1008, 64
    %v1012 = vpop.permute.xlu0 %1011
    %v1014 = vmul.f32 %v1007, %v1012
    %1016 = vrot.lane.b32.xlu0 %v1014, 32
    %v1017 = vpop.permute.xlu0 %1016
    %v1019 = vadd.f32 %v1009, %v1017
    %v1020 = vtanh.pop %v1019
    %1022 = vrot.lane.b32.xlu0 %v1020, 64
    %v1023 = vpop.permute.xlu0 %1022
    %v1025 = vmul.f32 %v1007, %v1023
    %1027 = vrot.lane.b32.xlu0 %v1025, 32
    %v1028 = vpop.permute.xlu0 %1027
    %1031 = vrot.lane.b32.xlu0 %v965, 64
    %v1032 = vpop.permute.xlu0 %1031
    %v1034 = vsel %vm181, %v1028, %v1032
    %v1036 = vsel %vm260, %v1034, 0
    %1038 = vmatpush.msra.mxu0 0.0
    %1039 = vmatpush.msra.mxu0 0.0
    %1040 = vmatpush.msra.mxu0 0.0
    %1041 = vmatpush.msra.mxu0 0.0
    %1042 = vmatpush.msra.mxu0 0.0
    %1043 = vmatpush.msra.mxu0 0.0
    %1044 = vmatpush.msra.mxu0 0.0
    %1045 = vmatpush.msra.mxu0 0.0
    %1046 = vmatpush.msra.mxu0 %v255
    %1047 = vmatpush.msra.mxu0 %v254
    %1048 = vmatpush.msra.mxu0 %v253
    %1049 = vmatpush.msra.mxu0 %v252
    %1050 = vmatpush.msra.mxu0 %v251
    %1051 = vmatpush.msra.mxu0 %v250
    %1052 = vmatpush.msra.mxu0 %v249
    %1053 = vmatpush.msra.mxu0 %v248
    %1054 = vmatmul.f32.gmra.mxu0 %v1036
    %v1055 = vpop.f32.mrf.mxu0
    %v1056 = vadd.f32 %v258, %v1055
    %1057 = vdwg.mxu0
    %v1058 = vxor.u32 %v1056, 2147483648
    %v1059 = vmul.f32 %v1058, 1.442695
    %v1060 = vpow.pop %v1059
    %v1061 = vadd.f32 %v1060, 1.0
    %v1062 = vrcp.pop %v1061
    %v1063 = vmul.f32 %v1061, %v1062
    %v1064 = vsub.f32 1.0, %v1063
    %v1065 = vmul.f32 %v1062, %v1064
    %v1066 = vadd.f32 %v1062, %v1065
    %vm1067 = vweird.f32 %v1061
    %vm1068 = vweird.f32 %v1062
    %vm1069 = vmor %vm1067, %vm1068
    %v1070 = vsel %vm1069, %v1062, %v1066
    %v1071 = vand.u32 2147483647, %v1061
    %vm1072 = vcmp.eq.f32.partialorder %v1071, 8.507059e+37
    %v1073 = vand.u32 %v1061, 2147483648
    %v1074 = vor.u32 1.1754944e-38, %v1073
    %v1075 = vsel %vm1072, %v1074, %v1070
    %v1076 = vmul.f32 1.0, %v1075
    %v1077 = vtanh.pop %v1056
    %v1078 = vmul.f32 %v1076, %v959
    %1080 = vrot.lane.b32.xlu0 %v1077, 64
    %v1081 = vpop.permute.xlu0 %1080
    %v1083 = vmul.f32 %v1076, %v1081
    %1085 = vrot.lane.b32.xlu0 %v1083, 32
    %v1086 = vpop.permute.xlu0 %1085
    %v1088 = vadd.f32 %v1078, %v1086
    %v1089 = vtanh.pop %v1088
    %1091 = vrot.lane.b32.xlu0 %v1089, 64
    %v1092 = vpop.permute.xlu0 %1091
    %v1094 = vmul.f32 %v1076, %v1092
    %v1095 = vsel %vm181, %v1028, 0
    %1097 = vmatpush.msra.mxu0 0.0
    %1098 = vmatpush.msra.mxu0 0.0
    %1099 = vmatpush.msra.mxu0 0.0
    %1100 = vmatpush.msra.mxu0 0.0
    %1101 = vmatpush.msra.mxu0 0.0
    %1102 = vmatpush.msra.mxu0 0.0
    %1103 = vmatpush.msra.mxu0 0.0
    %1104 = vmatpush.msra.mxu0 0.0
    %1105 = vmatpush.msra.mxu0 0.0
    %1106 = vmatpush.msra.mxu0 0.0
    %1107 = vmatpush.msra.mxu0 0.0
    %1108 = vmatpush.msra.mxu0 0.0
    %1109 = vmatpush.msra.mxu0 %v180
    %1110 = vmatpush.msra.mxu0 %v179
    %1111 = vmatpush.msra.mxu0 %v178
    %1112 = vmatpush.msra.mxu0 %v177
    %1113 = vmatmul.f32.gmra.mxu0 %v1095
    %v1114 = vpop.f32.mrf.mxu0
    %v1115 = vadd.f32 0.0, %v1114
    %1116 = vdwg.mxu0
    %v1117 = vadd.f32 %v176, %v1115
    %v1118 = vxor.u32 %v1117, 2147483648
    %v1119 = vmul.f32 %v1118, 1.442695
    %v1120 = vpow.pop %v1119
    %v1121 = vadd.f32 %v1120, 1.0
    %v1122 = vrcp.pop %v1121
    %v1123 = vmul.f32 %v1121, %v1122
    %v1124 = vsub.f32 1.0, %v1123
    %v1125 = vmul.f32 %v1122, %v1124
    %v1126 = vadd.f32 %v1122, %v1125
    %vm1127 = vweird.f32 %v1121
    %vm1128 = vweird.f32 %v1122
    %vm1129 = vmor %vm1127, %vm1128
    %v1130 = vsel %vm1129, %v1122, %v1126
    %v1131 = vand.u32 2147483647, %v1121
    %vm1132 = vcmp.eq.f32.partialorder %v1131, 8.507059e+37
    %v1133 = vand.u32 %v1121, 2147483648
    %v1134 = vor.u32 1.1754944e-38, %v1133
    %v1135 = vsel %vm1132, %v1134, %v1130
    %v1136 = vmul.f32 1.0, %v1135
    %v1137 = vtanh.pop %v1117
    %v1138 = vmul.f32 %v1136, %v1019
    %1140 = vrot.lane.b32.xlu0 %v1137, 64
    %v1141 = vpop.permute.xlu0 %1140
    %v1143 = vmul.f32 %v1136, %v1141
    %1145 = vrot.lane.b32.xlu0 %v1143, 32
    %v1146 = vpop.permute.xlu0 %1145
    %v1148 = vadd.f32 %v1138, %v1146
    %v1149 = vtanh.pop %v1148
    %1151 = vrot.lane.b32.xlu0 %v1149, 64
    %v1152 = vpop.permute.xlu0 %1151
    %v1154 = vmul.f32 %v1136, %v1152
    %1156 = vrot.lane.b32.xlu0 %v1154, 32
    %v1157 = vpop.permute.xlu0 %1156
    %1160 = vrot.lane.b32.xlu0 %v1094, 64
    %v1161 = vpop.permute.xlu0 %1160
    %v1163 = vsel %vm181, %v1157, %v1161
    %v1165 = vsel %vm260, %v1163, 0
    %1167 = vmatpush.msra.mxu0 0.0
    %1168 = vmatpush.msra.mxu0 0.0
    %1169 = vmatpush.msra.mxu0 0.0
    %1170 = vmatpush.msra.mxu0 0.0
    %1171 = vmatpush.msra.mxu0 0.0
    %1172 = vmatpush.msra.mxu0 0.0
    %1173 = vmatpush.msra.mxu0 0.0
    %1174 = vmatpush.msra.mxu0 0.0
    %1175 = vmatpush.msra.mxu0 %v255
    %1176 = vmatpush.msra.mxu0 %v254
    %1177 = vmatpush.msra.mxu0 %v253
    %1178 = vmatpush.msra.mxu0 %v252
    %1179 = vmatpush.msra.mxu0 %v251
    %1180 = vmatpush.msra.mxu0 %v250
    %1181 = vmatpush.msra.mxu0 %v249
    %1182 = vmatpush.msra.mxu0 %v248
    %1183 = vmatmul.f32.gmra.mxu0 %v1165
    %v1184 = vpop.f32.mrf.mxu0
    %v1185 = vadd.f32 %v258, %v1184
    %1186 = vdwg.mxu0
    %v1187 = vxor.u32 %v1185, 2147483648
    %v1188 = vmul.f32 %v1187, 1.442695
    %v1189 = vpow.pop %v1188
    %v1190 = vadd.f32 %v1189, 1.0
    %v1191 = vrcp.pop %v1190
    %v1192 = vmul.f32 %v1190, %v1191
    %v1193 = vsub.f32 1.0, %v1192
    %v1194 = vmul.f32 %v1191, %v1193
    %v1195 = vadd.f32 %v1191, %v1194
    %vm1196 = vweird.f32 %v1190
    %vm1197 = vweird.f32 %v1191
    %vm1198 = vmor %vm1196, %vm1197
    %v1199 = vsel %vm1198, %v1191, %v1195
    %v1200 = vand.u32 2147483647, %v1190
    %vm1201 = vcmp.eq.f32.partialorder %v1200, 8.507059e+37
    %v1202 = vand.u32 %v1190, 2147483648
    %v1203 = vor.u32 1.1754944e-38, %v1202
    %v1204 = vsel %vm1201, %v1203, %v1199
    %v1205 = vmul.f32 1.0, %v1204
    %v1206 = vtanh.pop %v1185
    %v1207 = vmul.f32 %v1205, %v1088
    %1209 = vrot.lane.b32.xlu0 %v1206, 64
    %v1210 = vpop.permute.xlu0 %1209
    %v1212 = vmul.f32 %v1205, %v1210
    %1214 = vrot.lane.b32.xlu0 %v1212, 32
    %v1215 = vpop.permute.xlu0 %1214
    %v1217 = vadd.f32 %v1207, %v1215
    %v1218 = vtanh.pop %v1217
    %1220 = vrot.lane.b32.xlu0 %v1218, 64
    %v1221 = vpop.permute.xlu0 %1220
    %v1223 = vmul.f32 %v1205, %v1221
    %v1224 = vld [vmem:[#allocation7] sm:$0xff]
    %v1225 = vld [vmem:[#allocation7 + $0x8] sm:$0xff]
    %v1226 = vld [vmem:[#allocation7 + $0x10] sm:$0xff]
    %v1227 = vld [vmem:[#allocation7 + $0x18] sm:$0xff]
    %v1228 = vld [vmem:[#allocation7 + $0x20] sm:$0xff]
    %v1229 = vld [vmem:[#allocation7 + $0x28] sm:$0xff]
    %v1230 = vld [vmem:[#allocation7 + $0x30] sm:$0xff]
    %v1231 = vld [vmem:[#allocation7 + $0x38] sm:$0xff]
    %v1232 = vld [vmem:[%s7] sm:$0x3]
    %v1234 = vperm.slane %v1232, 0
    %v1235 = vperm.slane %v1232, 1
    %1239 = vrot.lane.b32.xlu0 %v1223, 32
    %v1240 = vpop.permute.xlu0 %1239
    %v1241 = vsel %vm181, %v1240, 0
    %1243 = vmatpush.msra.mxu0 0.0
    %1244 = vmatpush.msra.mxu0 0.0
    %1245 = vmatpush.msra.mxu0 0.0
    %1246 = vmatpush.msra.mxu0 0.0
    %1247 = vmatpush.msra.mxu0 0.0
    %1248 = vmatpush.msra.mxu0 0.0
    %1249 = vmatpush.msra.mxu0 0.0
    %1250 = vmatpush.msra.mxu0 0.0
    %1251 = vmatpush.msra.mxu0 0.0
    %1252 = vmatpush.msra.mxu0 0.0
    %1253 = vmatpush.msra.mxu0 0.0
    %1254 = vmatpush.msra.mxu0 0.0
    %1255 = vmatpush.msra.mxu0 %v1230
    %1256 = vmatpush.msra.mxu0 %v1228
    %1257 = vmatpush.msra.mxu0 %v1226
    %1258 = vmatpush.msra.mxu0 %v1224
    %1259 = vmatmul.f32.gmra.mxu0 %v1241
    %v1260 = vpop.f32.mrf.mxu0
    %v1261 = vadd.f32 %v1234, %v1260
    %1262 = vdwg.mxu0
    %1263 = vmatpush.msra.mxu0 0.0
    %1264 = vmatpush.msra.mxu0 0.0
    %1265 = vmatpush.msra.mxu0 0.0
    %1266 = vmatpush.msra.mxu0 0.0
    %1267 = vmatpush.msra.mxu0 0.0
    %1268 = vmatpush.msra.mxu0 0.0
    %1269 = vmatpush.msra.mxu0 0.0
    %1270 = vmatpush.msra.mxu0 0.0
    %1271 = vmatpush.msra.mxu0 0.0
    %1272 = vmatpush.msra.mxu0 0.0
    %1273 = vmatpush.msra.mxu0 0.0
    %1274 = vmatpush.msra.mxu0 0.0
    %1275 = vmatpush.msra.mxu0 %v1231
    %1276 = vmatpush.msra.mxu0 %v1229
    %1277 = vmatpush.msra.mxu0 %v1227
    %1278 = vmatpush.msra.mxu0 %v1225
    %1279 = vmatmul.f32.gmra.mxu0 %v1241
    %v1280 = vpop.f32.mrf.mxu0
    %v1281 = vadd.f32 %v1235, %v1280
    %1282 = vdwg.mxu0
    %1283 = vrot.lane.b32.xlu0 %v1154, 64
    %v1284 = vpop.permute.xlu0 %1283
    %v1286 = vsel %vm181, %v1157, %v1284
    %v1287 = vld [vmem:[%s8] sm:$0xff]
    %v1288 = vld [vmem:[%s8 + $0x8] sm:$0xff]
    %v1289 = vld [vmem:[%s8 + $0x10] sm:$0xff]
    %v1290 = vld [vmem:[%s8 + $0x18] sm:$0xff]
    %v1291 = vld [vmem:[%s8 + $0x20] sm:$0xff]
    %v1292 = vld [vmem:[%s8 + $0x28] sm:$0xff]
    %v1293 = vld [vmem:[%s8 + $0x30] sm:$0xff]
    %v1294 = vld [vmem:[%s8 + $0x38] sm:$0xff]
    %v1295 = vld [vmem:[%s8 + $0x40] sm:$0xff]
    %v1296 = vld [vmem:[%s8 + $0x48] sm:$0xff]
    %v1297 = vld [vmem:[%s8 + $0x50] sm:$0xff]
    %v1298 = vld [vmem:[%s8 + $0x58] sm:$0xff]
    %v1299 = vld [vmem:[%s8 + $0x60] sm:$0xff]
    %v1300 = vld [vmem:[%s8 + $0x68] sm:$0xff]
    %v1301 = vld [vmem:[%s8 + $0x70] sm:$0xff]
    %v1302 = vld [vmem:[%s8 + $0x78] sm:$0xff]
    %v1304 = vsel %vm260, %v1286, 0
    %1306 = vmatpush.msra.mxu0 0.0
    %1307 = vmatpush.msra.mxu0 0.0
    %1308 = vmatpush.msra.mxu0 0.0
    %1309 = vmatpush.msra.mxu0 0.0
    %1310 = vmatpush.msra.mxu0 0.0
    %1311 = vmatpush.msra.mxu0 0.0
    %1312 = vmatpush.msra.mxu0 0.0
    %1313 = vmatpush.msra.mxu0 0.0
    %1314 = vmatpush.msra.mxu0 %v1301
    %1315 = vmatpush.msra.mxu0 %v1299
    %1316 = vmatpush.msra.mxu0 %v1297
    %1317 = vmatpush.msra.mxu0 %v1295
    %1318 = vmatpush.msra.mxu0 %v1293
    %1319 = vmatpush.msra.mxu0 %v1291
    %1320 = vmatpush.msra.mxu0 %v1289
    %1321 = vmatpush.msra.mxu0 %v1287
    %1322 = vmatmul.f32.gmra.mxu0 %v1304
    %v1323 = vpop.f32.mrf.mxu0
    %v1324 = vadd.f32 0.0, %v1323
    %1325 = vdwg.mxu0
    %1326 = vmatpush.msra.mxu0 0.0
    %1327 = vmatpush.msra.mxu0 0.0
    %1328 = vmatpush.msra.mxu0 0.0
    %1329 = vmatpush.msra.mxu0 0.0
    %1330 = vmatpush.msra.mxu0 0.0
    %1331 = vmatpush.msra.mxu0 0.0
    %1332 = vmatpush.msra.mxu0 0.0
    %1333 = vmatpush.msra.mxu0 0.0
    %1334 = vmatpush.msra.mxu0 %v1302
    %1335 = vmatpush.msra.mxu0 %v1300
    %1336 = vmatpush.msra.mxu0 %v1298
    %1337 = vmatpush.msra.mxu0 %v1296
    %1338 = vmatpush.msra.mxu0 %v1294
    %1339 = vmatpush.msra.mxu0 %v1292
    %1340 = vmatpush.msra.mxu0 %v1290
    %1341 = vmatpush.msra.mxu0 %v1288
    %1342 = vmatmul.f32.gmra.mxu0 %v1304
    %v1343 = vpop.f32.mrf.mxu0
    %v1344 = vadd.f32 0.0, %v1343
    %1345 = vdwg.mxu0
    %v1346 = vadd.f32 %v1261, %v1324
    %v1347 = vadd.f32 %v1281, %v1344
    %v1348 = vxor.u32 %v1346, 2147483648
    %v1349 = vxor.u32 %v1347, 2147483648
    %v1350 = vmul.f32 %v1348, 1.442695
    %v1351 = vpow.pop %v1350
    %v1352 = vmul.f32 %v1349, 1.442695
    %v1353 = vpow.pop %v1352
    %v1354 = vadd.f32 %v1351, 1.0
    %v1355 = vadd.f32 %v1353, 1.0
    %v1356 = vrcp.pop %v1354
    %v1357 = vmul.f32 %v1354, %v1356
    %v1358 = vsub.f32 1.0, %v1357
    %v1359 = vmul.f32 %v1356, %v1358
    %v1360 = vadd.f32 %v1356, %v1359
    %vm1361 = vweird.f32 %v1354
    %vm1362 = vweird.f32 %v1356
    %vm1363 = vmor %vm1361, %vm1362
    %v1364 = vsel %vm1363, %v1356, %v1360
    %v1365 = vand.u32 2147483647, %v1354
    %vm1366 = vcmp.eq.f32.partialorder %v1365, 8.507059e+37
    %v1367 = vand.u32 %v1354, 2147483648
    %v1368 = vor.u32 1.1754944e-38, %v1367
    %v1369 = vsel %vm1366, %v1368, %v1364
    %v1370 = vmul.f32 1.0, %v1369
    %v1371 = vrcp.pop %v1355
    %v1372 = vmul.f32 %v1355, %v1371
    %v1373 = vsub.f32 1.0, %v1372
    %v1374 = vmul.f32 %v1371, %v1373
    %v1375 = vadd.f32 %v1371, %v1374
    %vm1376 = vweird.f32 %v1355
    %vm1377 = vweird.f32 %v1371
    %vm1378 = vmor %vm1376, %vm1377
    %v1379 = vsel %vm1378, %v1371, %v1375
    %v1380 = vand.u32 2147483647, %v1355
    %vm1381 = vcmp.eq.f32.partialorder %v1380, 8.507059e+37
    %v1382 = vand.u32 %v1355, 2147483648
    %v1383 = vor.u32 1.1754944e-38, %v1382
    %v1384 = vsel %vm1381, %v1383, %v1379
    %v1385 = vmul.f32 1.0, %v1384
    %v1386 = vtanh.pop %v1346
    %v1387 = vtanh.pop %v1347
    %v1388 = vmul.f32 %v1370, %v1148
    %1390 = vrot.lane.b32.xlu0 %v1386, 64
    %v1391 = vpop.permute.xlu0 %1390
    %v1393 = vmul.f32 %v1370, %v1391
    %1395 = vrot.lane.b32.xlu0 %v1393, 32
    %v1396 = vpop.permute.xlu0 %1395
    %v1398 = vadd.f32 %v1388, %v1396
    %v1399 = vtanh.pop %v1398
    %1401 = vrot.lane.b32.xlu0 %v1399, 64
    %v1402 = vpop.permute.xlu0 %1401
    %v1404 = vmul.f32 %v1370, %v1402
    %v1405 = vmul.f32 %v1385, %v1148
    %1407 = vrot.lane.b32.xlu0 %v1387, 64
    %v1408 = vpop.permute.xlu0 %1407
    %v1410 = vmul.f32 %v1385, %v1408
    %1412 = vrot.lane.b32.xlu0 %v1410, 32
    %v1413 = vpop.permute.xlu0 %1412
    %v1415 = vadd.f32 %v1405, %v1413
    %v1416 = vtanh.pop %v1415
    %1418 = vrot.lane.b32.xlu0 %v1416, 64
    %v1419 = vpop.permute.xlu0 %1418
    %v1421 = vmul.f32 %v1385, %v1419
    %1423 = vrot.lane.b32.xlu0 %v1404, 32
    %v1424 = vpop.permute.xlu0 %1423
    %1426 = vrot.lane.b32.xlu0 %v1223, 64
    %v1427 = vpop.permute.xlu0 %1426
    %1430 = vrot.lane.b32.xlu0 %v1421, 96
    %v1431 = vpop.permute.xlu0 %1430
    %v1433 = vsel %vm181, %v1424, %v1427
    %v1434 = vsel %vm260, %v1433, %v1431
    %vm1435 = vcmask 785408
    %v1436 = vsel %vm1435, %v1434, %v1223
    %v1437 = vld [vmem:[#allocation8] sm:$0xff]
    %v1438 = vld [vmem:[#allocation8 + $0x8] sm:$0xff]
    %v1439 = vld [vmem:[#allocation8 + $0x10] sm:$0xff]
    %v1440 = vld [vmem:[#allocation8 + $0x18] sm:$0xff]
    %v1441 = vld [vmem:[#allocation8 + $0x20] sm:$0xff]
    %v1442 = vld [vmem:[#allocation8 + $0x28] sm:$0xff]
    %v1443 = vld [vmem:[#allocation8 + $0x30] sm:$0xff]
    %v1444 = vld [vmem:[#allocation8 + $0x38] sm:$0xff]
    %v1445 = vld [vmem:[#allocation8 + $0x40] sm:$0xff]
    %v1446 = vld [vmem:[#allocation8 + $0x48] sm:$0xff]
    %v1447 = vld [vmem:[#allocation8 + $0x50] sm:$0xff]
    %v1448 = vld [vmem:[#allocation8 + $0x58] sm:$0xff]
    %v1449 = vld [vmem:[#allocation8 + $0x60] sm:$0xff]
    %v1450 = vld [vmem:[#allocation8 + $0x68] sm:$0xff]
    %v1451 = vld [vmem:[#allocation8 + $0x70] sm:$0xff]
    %v1452 = vld [vmem:[#allocation8 + $0x78] sm:$0xff]
    %v1453 = vld [vmem:[#allocation8 + $0x80] sm:$0xff]
    %v1454 = vld [vmem:[#allocation8 + $0x88] sm:$0xff]
    %v1455 = vld [vmem:[#allocation8 + $0x90] sm:$0xff]
    %v1456 = vld [vmem:[#allocation8 + $0x98] sm:$0xff]
    %v1457 = vld [vmem:[#allocation8 + $0xa0] sm:$0xff]
    %v1458 = vld [vmem:[#allocation8 + $0xa8] sm:$0xff]
    %v1459 = vld [vmem:[#allocation8 + $0xb0] sm:$0xff]
    %v1460 = vld [vmem:[#allocation8 + $0xb8] sm:$0xff]
    %v1461 = vld [vmem:[#allocation8 + $0xc0] sm:$0xff]
    %v1462 = vld [vmem:[#allocation8 + $0xc8] sm:$0xff]
    %v1463 = vld [vmem:[#allocation8 + $0xd0] sm:$0xff]
    %v1464 = vld [vmem:[#allocation8 + $0xd8] sm:$0xff]
    %v1465 = vld [vmem:[#allocation8 + $0xe0] sm:$0xff]
    %v1466 = vld [vmem:[#allocation8 + $0xe8] sm:$0xff]
    %v1467 = vld [vmem:[#allocation8 + $0xf0] sm:$0xff]
    %v1468 = vld [vmem:[#allocation8 + $0xf8] sm:$0xff]
    %v1469 = vld [vmem:[%s10] sm:$0x3]
    %v1471 = vperm.slane %v1469, 0
    %v1472 = vperm.slane %v1469, 1
    %1475 = vmatpush.msra.mxu0 %v1467
    %1476 = vmatpush.msra.mxu0 %v1465
    %1477 = vmatpush.msra.mxu0 %v1463
    %1478 = vmatpush.msra.mxu0 %v1461
    %1479 = vmatpush.msra.mxu0 %v1459
    %1480 = vmatpush.msra.mxu0 %v1457
    %1481 = vmatpush.msra.mxu0 %v1455
    %1482 = vmatpush.msra.mxu0 %v1453
    %1483 = vmatpush.msra.mxu0 %v1451
    %1484 = vmatpush.msra.mxu0 %v1449
    %1485 = vmatpush.msra.mxu0 %v1447
    %1486 = vmatpush.msra.mxu0 %v1445
    %1487 = vmatpush.msra.mxu0 %v1443
    %1488 = vmatpush.msra.mxu0 %v1441
    %1489 = vmatpush.msra.mxu0 %v1439
    %1490 = vmatpush.msra.mxu0 %v1437
    %1491 = vmatmul.f32.gmra.mxu0 %v1436
    %v1492 = vpop.f32.mrf.mxu0
    %v1493 = vadd.f32 %v1471, %v1492
    %1494 = vdwg.mxu0
    %1495 = vmatpush.msra.mxu0 %v1468
    %1496 = vmatpush.msra.mxu0 %v1466
    %1497 = vmatpush.msra.mxu0 %v1464
    %1498 = vmatpush.msra.mxu0 %v1462
    %1499 = vmatpush.msra.mxu0 %v1460
    %1500 = vmatpush.msra.mxu0 %v1458
    %1501 = vmatpush.msra.mxu0 %v1456
    %1502 = vmatpush.msra.mxu0 %v1454
    %1503 = vmatpush.msra.mxu0 %v1452
    %1504 = vmatpush.msra.mxu0 %v1450
    %1505 = vmatpush.msra.mxu0 %v1448
    %1506 = vmatpush.msra.mxu0 %v1446
    %1507 = vmatpush.msra.mxu0 %v1444
    %1508 = vmatpush.msra.mxu0 %v1442
    %1509 = vmatpush.msra.mxu0 %v1440
    %1510 = vmatpush.msra.mxu0 %v1438
    %1511 = vmatmul.f32.gmra.mxu0 %v1436
    %v1512 = vpop.f32.mrf.mxu0
    %v1513 = vadd.f32 %v1472, %v1512
    %1514 = vdwg.mxu0
    %v1515 = vxor.u32 %v1493, 2147483648
    %v1516 = vxor.u32 %v1513, 2147483648
    %v1517 = vmul.f32 %v1515, 1.442695
    %v1518 = vpow.pop %v1517
    %v1519 = vmul.f32 %v1516, 1.442695
    %v1520 = vpow.pop %v1519
    %v1521 = vadd.f32 %v1518, 1.0
    %v1522 = vadd.f32 %v1520, 1.0
    %v1523 = vrcp.pop %v1521
    %v1524 = vmul.f32 %v1521, %v1523
    %v1525 = vsub.f32 1.0, %v1524
    %v1526 = vmul.f32 %v1523, %v1525
    %v1527 = vadd.f32 %v1523, %v1526
    %vm1528 = vweird.f32 %v1521
    %vm1529 = vweird.f32 %v1523
    %vm1530 = vmor %vm1528, %vm1529
    %v1531 = vsel %vm1530, %v1523, %v1527
    %v1532 = vand.u32 2147483647, %v1521
    %vm1533 = vcmp.eq.f32.partialorder %v1532, 8.507059e+37
    %v1534 = vand.u32 %v1521, 2147483648
    %v1535 = vor.u32 1.1754944e-38, %v1534
    %v1536 = vsel %vm1533, %v1535, %v1531
    %v1537 = vmul.f32 1.0, %v1536
    %v1538 = vrcp.pop %v1522
    %v1539 = vmul.f32 %v1522, %v1538
    %v1540 = vsub.f32 1.0, %v1539
    %v1541 = vmul.f32 %v1538, %v1540
    %v1542 = vadd.f32 %v1538, %v1541
    %vm1543 = vweird.f32 %v1522
    %vm1544 = vweird.f32 %v1538
    %vm1545 = vmor %vm1543, %vm1544
    %v1546 = vsel %vm1545, %v1538, %v1542
    %v1547 = vand.u32 2147483647, %v1522
    %vm1548 = vcmp.eq.f32.partialorder %v1547, 8.507059e+37
    %v1549 = vand.u32 %v1522, 2147483648
    %v1550 = vor.u32 1.1754944e-38, %v1549
    %v1551 = vsel %vm1548, %v1550, %v1546
    %v1552 = vmul.f32 1.0, %v1551
    %v1553 = vtanh.pop %v1493
    %v1554 = vtanh.pop %v1513
    %v1555 = vmul.f32 %v1537, %v1217
    %1557 = vrot.lane.b32.xlu0 %v1553, 64
    %v1558 = vpop.permute.xlu0 %1557
    %v1560 = vmul.f32 %v1537, %v1558
    %1562 = vrot.lane.b32.xlu0 %v1560, 32
    %v1563 = vpop.permute.xlu0 %1562
    %v1565 = vadd.f32 %v1555, %v1563
    %v1566 = vtanh.pop %v1565
    %1568 = vrot.lane.b32.xlu0 %v1566, 64
    %v1569 = vpop.permute.xlu0 %1568
    %v1571 = vmul.f32 %v1537, %v1569
    %v1572 = vmul.f32 %v1552, %v1217
    %1574 = vrot.lane.b32.xlu0 %v1554, 64
    %v1575 = vpop.permute.xlu0 %1574
    %v1577 = vmul.f32 %v1552, %v1575
    %1579 = vrot.lane.b32.xlu0 %v1577, 32
    %v1580 = vpop.permute.xlu0 %1579
    %v1582 = vadd.f32 %v1572, %v1580
    %v1583 = vtanh.pop %v1582
    %1585 = vrot.lane.b32.xlu0 %v1583, 64
    %v1586 = vpop.permute.xlu0 %1585
    %v1588 = vmul.f32 %v1552, %v1586
    %1590 = vrot.lane.b32.xlu0 %v1571, 32
    %v1591 = vpop.permute.xlu0 %1590
    %1594 = vrot.lane.b32.xlu0 %v1588, 64
    %v1595 = vpop.permute.xlu0 %1594
    %v1597 = vsel %vm181, %v1591, %v1595
    %1598 = vst.msk [vmem:[#allocation2] sm:$0xff] %vm260, %v1597
    %1599 = vrot.lane.b32.xlu0 %v1421, 64
    %v1600 = vpop.permute.xlu0 %1599
    %v1602 = vsel %vm181, %v1424, %v1600
    %v1603 = vld [vmem:[%s8] sm:$0xff]
    %v1604 = vld [vmem:[%s8 + $0x8] sm:$0xff]
    %v1605 = vld [vmem:[%s8 + $0x10] sm:$0xff]
    %v1606 = vld [vmem:[%s8 + $0x18] sm:$0xff]
    %v1607 = vld [vmem:[%s8 + $0x20] sm:$0xff]
    %v1608 = vld [vmem:[%s8 + $0x28] sm:$0xff]
    %v1609 = vld [vmem:[%s8 + $0x30] sm:$0xff]
    %v1610 = vld [vmem:[%s8 + $0x38] sm:$0xff]
    %v1611 = vld [vmem:[%s8 + $0x40] sm:$0xff]
    %v1612 = vld [vmem:[%s8 + $0x48] sm:$0xff]
    %v1613 = vld [vmem:[%s8 + $0x50] sm:$0xff]
    %v1614 = vld [vmem:[%s8 + $0x58] sm:$0xff]
    %v1615 = vld [vmem:[%s8 + $0x60] sm:$0xff]
    %v1616 = vld [vmem:[%s8 + $0x68] sm:$0xff]
    %v1617 = vld [vmem:[%s8 + $0x70] sm:$0xff]
    %v1618 = vld [vmem:[%s8 + $0x78] sm:$0xff]
    %v1620 = vsel %vm260, %v1602, 0
    %1622 = vmatpush.msra.mxu0 0.0
    %1623 = vmatpush.msra.mxu0 0.0
    %1624 = vmatpush.msra.mxu0 0.0
    %1625 = vmatpush.msra.mxu0 0.0
    %1626 = vmatpush.msra.mxu0 0.0
    %1627 = vmatpush.msra.mxu0 0.0
    %1628 = vmatpush.msra.mxu0 0.0
    %1629 = vmatpush.msra.mxu0 0.0
    %1630 = vmatpush.msra.mxu0 %v1617
    %1631 = vmatpush.msra.mxu0 %v1615
    %1632 = vmatpush.msra.mxu0 %v1613
    %1633 = vmatpush.msra.mxu0 %v1611
    %1634 = vmatpush.msra.mxu0 %v1609
    %1635 = vmatpush.msra.mxu0 %v1607
    %1636 = vmatpush.msra.mxu0 %v1605
    %1637 = vmatpush.msra.mxu0 %v1603
    %1638 = vmatmul.f32.gmra.mxu0 %v1620
    %v1639 = vpop.f32.mrf.mxu0
    %v1640 = vadd.f32 0.0, %v1639
    %1641 = vdwg.mxu0
    %1642 = vmatpush.msra.mxu0 0.0
    %1643 = vmatpush.msra.mxu0 0.0
    %1644 = vmatpush.msra.mxu0 0.0
    %1645 = vmatpush.msra.mxu0 0.0
    %1646 = vmatpush.msra.mxu0 0.0
    %1647 = vmatpush.msra.mxu0 0.0
    %1648 = vmatpush.msra.mxu0 0.0
    %1649 = vmatpush.msra.mxu0 0.0
    %1650 = vmatpush.msra.mxu0 %v1618
    %1651 = vmatpush.msra.mxu0 %v1616
    %1652 = vmatpush.msra.mxu0 %v1614
    %1653 = vmatpush.msra.mxu0 %v1612
    %1654 = vmatpush.msra.mxu0 %v1610
    %1655 = vmatpush.msra.mxu0 %v1608
    %1656 = vmatpush.msra.mxu0 %v1606
    %1657 = vmatpush.msra.mxu0 %v1604
    %1658 = vmatmul.f32.gmra.mxu0 %v1620
    %v1659 = vpop.f32.mrf.mxu0
    %v1660 = vadd.f32 0.0, %v1659
    %1661 = vdwg.mxu0
    %v1662 = vadd.f32 %v1261, %v1640
    %v1663 = vadd.f32 %v1281, %v1660
    %v1664 = vxor.u32 %v1662, 2147483648
    %v1665 = vxor.u32 %v1663, 2147483648
    %v1666 = vmul.f32 %v1664, 1.442695
    %v1667 = vpow.pop %v1666
    %v1668 = vmul.f32 %v1665, 1.442695
    %v1669 = vpow.pop %v1668
    %v1670 = vadd.f32 %v1667, 1.0
    %v1671 = vadd.f32 %v1669, 1.0
    %v1672 = vrcp.pop %v1670
    %v1673 = vmul.f32 %v1670, %v1672
    %v1674 = vsub.f32 1.0, %v1673
    %v1675 = vmul.f32 %v1672, %v1674
    %v1676 = vadd.f32 %v1672, %v1675
    %vm1677 = vweird.f32 %v1670
    %vm1678 = vweird.f32 %v1672
    %vm1679 = vmor %vm1677, %vm1678
    %v1680 = vsel %vm1679, %v1672, %v1676
    %v1681 = vand.u32 2147483647, %v1670
    %vm1682 = vcmp.eq.f32.partialorder %v1681, 8.507059e+37
    %v1683 = vand.u32 %v1670, 2147483648
    %v1684 = vor.u32 1.1754944e-38, %v1683
    %v1685 = vsel %vm1682, %v1684, %v1680
    %v1686 = vmul.f32 1.0, %v1685
    %v1687 = vrcp.pop %v1671
    %v1688 = vmul.f32 %v1671, %v1687
    %v1689 = vsub.f32 1.0, %v1688
    %v1690 = vmul.f32 %v1687, %v1689
    %v1691 = vadd.f32 %v1687, %v1690
    %vm1692 = vweird.f32 %v1671
    %vm1693 = vweird.f32 %v1687
    %vm1694 = vmor %vm1692, %vm1693
    %v1695 = vsel %vm1694, %v1687, %v1691
    %v1696 = vand.u32 2147483647, %v1671
    %vm1697 = vcmp.eq.f32.partialorder %v1696, 8.507059e+37
    %v1698 = vand.u32 %v1671, 2147483648
    %v1699 = vor.u32 1.1754944e-38, %v1698
    %v1700 = vsel %vm1697, %v1699, %v1695
    %v1701 = vmul.f32 1.0, %v1700
    %v1702 = vtanh.pop %v1662
    %v1703 = vtanh.pop %v1663
    %v1704 = vmul.f32 %v1686, %v1398
    %1706 = vrot.lane.b32.xlu0 %v1702, 64
    %v1707 = vpop.permute.xlu0 %1706
    %v1709 = vmul.f32 %v1686, %v1707
    %1711 = vrot.lane.b32.xlu0 %v1709, 32
    %v1712 = vpop.permute.xlu0 %1711
    %v1714 = vadd.f32 %v1704, %v1712
    %v1715 = vtanh.pop %v1714
    %1717 = vrot.lane.b32.xlu0 %v1715, 64
    %v1718 = vpop.permute.xlu0 %1717
    %v1720 = vmul.f32 %v1686, %v1718
    %v1721 = vmul.f32 %v1701, %v1415
    %1723 = vrot.lane.b32.xlu0 %v1703, 64
    %v1724 = vpop.permute.xlu0 %1723
    %v1726 = vmul.f32 %v1701, %v1724
    %1728 = vrot.lane.b32.xlu0 %v1726, 32
    %v1729 = vpop.permute.xlu0 %1728
    %v1731 = vadd.f32 %v1721, %v1729
    %v1732 = vtanh.pop %v1731
    %1734 = vrot.lane.b32.xlu0 %v1732, 64
    %v1735 = vpop.permute.xlu0 %1734
    %v1737 = vmul.f32 %v1701, %v1735
    %1739 = vrot.lane.b32.xlu0 %v1720, 32
    %v1740 = vpop.permute.xlu0 %1739
    %1742 = vrot.lane.b32.xlu0 %v1571, 64
    %v1743 = vpop.permute.xlu0 %1742
    %1746 = vrot.lane.b32.xlu0 %v1737, 96
    %v1747 = vpop.permute.xlu0 %1746
    %v1749 = vsel %vm181, %v1740, %v1743
    %v1750 = vsel %vm260, %v1749, %v1747
    %v1751 = vsel %vm1435, %v1750, %v1588
    %v1752 = vld [vmem:[#allocation8] sm:$0xff]
    %v1753 = vld [vmem:[#allocation8 + $0x8] sm:$0xff]
    %v1754 = vld [vmem:[#allocation8 + $0x10] sm:$0xff]
    %v1755 = vld [vmem:[#allocation8 + $0x18] sm:$0xff]
    %v1756 = vld [vmem:[#allocation8 + $0x20] sm:$0xff]
    %v1757 = vld [vmem:[#allocation8 + $0x28] sm:$0xff]
    %v1758 = vld [vmem:[#allocation8 + $0x30] sm:$0xff]
    %v1759 = vld [vmem:[#allocation8 + $0x38] sm:$0xff]
    %v1760 = vld [vmem:[#allocation8 + $0x40] sm:$0xff]
    %v1761 = vld [vmem:[#allocation8 + $0x48] sm:$0xff]
    %v1762 = vld [vmem:[#allocation8 + $0x50] sm:$0xff]
    %v1763 = vld [vmem:[#allocation8 + $0x58] sm:$0xff]
    %v1764 = vld [vmem:[#allocation8 + $0x60] sm:$0xff]
    %v1765 = vld [vmem:[#allocation8 + $0x68] sm:$0xff]
    %v1766 = vld [vmem:[#allocation8 + $0x70] sm:$0xff]
    %v1767 = vld [vmem:[#allocation8 + $0x78] sm:$0xff]
    %v1768 = vld [vmem:[#allocation8 + $0x80] sm:$0xff]
    %v1769 = vld [vmem:[#allocation8 + $0x88] sm:$0xff]
    %v1770 = vld [vmem:[#allocation8 + $0x90] sm:$0xff]
    %v1771 = vld [vmem:[#allocation8 + $0x98] sm:$0xff]
    %v1772 = vld [vmem:[#allocation8 + $0xa0] sm:$0xff]
    %v1773 = vld [vmem:[#allocation8 + $0xa8] sm:$0xff]
    %v1774 = vld [vmem:[#allocation8 + $0xb0] sm:$0xff]
    %v1775 = vld [vmem:[#allocation8 + $0xb8] sm:$0xff]
    %v1776 = vld [vmem:[#allocation8 + $0xc0] sm:$0xff]
    %v1777 = vld [vmem:[#allocation8 + $0xc8] sm:$0xff]
    %v1778 = vld [vmem:[#allocation8 + $0xd0] sm:$0xff]
    %v1779 = vld [vmem:[#allocation8 + $0xd8] sm:$0xff]
    %v1780 = vld [vmem:[#allocation8 + $0xe0] sm:$0xff]
    %v1781 = vld [vmem:[#allocation8 + $0xe8] sm:$0xff]
    %v1782 = vld [vmem:[#allocation8 + $0xf0] sm:$0xff]
    %v1783 = vld [vmem:[#allocation8 + $0xf8] sm:$0xff]
    %v1784 = vld [vmem:[%s10] sm:$0x3]
    %v1786 = vperm.slane %v1784, 0
    %v1787 = vperm.slane %v1784, 1
    %1790 = vmatpush.msra.mxu0 %v1782
    %1791 = vmatpush.msra.mxu0 %v1780
    %1792 = vmatpush.msra.mxu0 %v1778
    %1793 = vmatpush.msra.mxu0 %v1776
    %1794 = vmatpush.msra.mxu0 %v1774
    %1795 = vmatpush.msra.mxu0 %v1772
    %1796 = vmatpush.msra.mxu0 %v1770
    %1797 = vmatpush.msra.mxu0 %v1768
    %1798 = vmatpush.msra.mxu0 %v1766
    %1799 = vmatpush.msra.mxu0 %v1764
    %1800 = vmatpush.msra.mxu0 %v1762
    %1801 = vmatpush.msra.mxu0 %v1760
    %1802 = vmatpush.msra.mxu0 %v1758
    %1803 = vmatpush.msra.mxu0 %v1756
    %1804 = vmatpush.msra.mxu0 %v1754
    %1805 = vmatpush.msra.mxu0 %v1752
    %1806 = vmatmul.f32.gmra.mxu0 %v1751
    %v1807 = vpop.f32.mrf.mxu0
    %v1808 = vadd.f32 %v1786, %v1807
    %1809 = vdwg.mxu0
    %1810 = vmatpush.msra.mxu0 %v1783
    %1811 = vmatpush.msra.mxu0 %v1781
    %1812 = vmatpush.msra.mxu0 %v1779
    %1813 = vmatpush.msra.mxu0 %v1777
    %1814 = vmatpush.msra.mxu0 %v1775
    %1815 = vmatpush.msra.mxu0 %v1773
    %1816 = vmatpush.msra.mxu0 %v1771
    %1817 = vmatpush.msra.mxu0 %v1769
    %1818 = vmatpush.msra.mxu0 %v1767
    %1819 = vmatpush.msra.mxu0 %v1765
    %1820 = vmatpush.msra.mxu0 %v1763
    %1821 = vmatpush.msra.mxu0 %v1761
    %1822 = vmatpush.msra.mxu0 %v1759
    %1823 = vmatpush.msra.mxu0 %v1757
    %1824 = vmatpush.msra.mxu0 %v1755
    %1825 = vmatpush.msra.mxu0 %v1753
    %1826 = vmatmul.f32.gmra.mxu0 %v1751
    %v1827 = vpop.f32.mrf.mxu0
    %v1828 = vadd.f32 %v1787, %v1827
    %1829 = vdwg.mxu0
    %v1830 = vxor.u32 %v1808, 2147483648
    %v1831 = vxor.u32 %v1828, 2147483648
    %v1832 = vmul.f32 %v1830, 1.442695
    %v1833 = vpow.pop %v1832
    %v1834 = vmul.f32 %v1831, 1.442695
    %v1835 = vpow.pop %v1834
    %v1836 = vadd.f32 %v1833, 1.0
    %v1837 = vadd.f32 %v1835, 1.0
    %v1838 = vrcp.pop %v1836
    %v1839 = vmul.f32 %v1836, %v1838
    %v1840 = vsub.f32 1.0, %v1839
    %v1841 = vmul.f32 %v1838, %v1840
    %v1842 = vadd.f32 %v1838, %v1841
    %vm1843 = vweird.f32 %v1836
    %vm1844 = vweird.f32 %v1838
    %vm1845 = vmor %vm1843, %vm1844
    %v1846 = vsel %vm1845, %v1838, %v1842
    %v1847 = vand.u32 2147483647, %v1836
    %vm1848 = vcmp.eq.f32.partialorder %v1847, 8.507059e+37
    %v1849 = vand.u32 %v1836, 2147483648
    %v1850 = vor.u32 1.1754944e-38, %v1849
    %v1851 = vsel %vm1848, %v1850, %v1846
    %v1852 = vmul.f32 1.0, %v1851
    %v1853 = vrcp.pop %v1837
    %v1854 = vmul.f32 %v1837, %v1853
    %v1855 = vsub.f32 1.0, %v1854
    %v1856 = vmul.f32 %v1853, %v1855
    %v1857 = vadd.f32 %v1853, %v1856
    %vm1858 = vweird.f32 %v1837
    %vm1859 = vweird.f32 %v1853
    %vm1860 = vmor %vm1858, %vm1859
    %v1861 = vsel %vm1860, %v1853, %v1857
    %v1862 = vand.u32 2147483647, %v1837
    %vm1863 = vcmp.eq.f32.partialorder %v1862, 8.507059e+37
    %v1864 = vand.u32 %v1837, 2147483648
    %v1865 = vor.u32 1.1754944e-38, %v1864
    %v1866 = vsel %vm1863, %v1865, %v1861
    %v1867 = vmul.f32 1.0, %v1866
    %v1868 = vtanh.pop %v1808
    %v1869 = vtanh.pop %v1828
    %v1870 = vmul.f32 %v1852, %v1565
    %1872 = vrot.lane.b32.xlu0 %v1868, 64
    %v1873 = vpop.permute.xlu0 %1872
    %v1875 = vmul.f32 %v1852, %v1873
    %1877 = vrot.lane.b32.xlu0 %v1875, 32
    %v1878 = vpop.permute.xlu0 %1877
    %v1880 = vadd.f32 %v1870, %v1878
    %v1881 = vtanh.pop %v1880
    %1883 = vrot.lane.b32.xlu0 %v1881, 64
    %v1884 = vpop.permute.xlu0 %1883
    %v1886 = vmul.f32 %v1852, %v1884
    %v1887 = vmul.f32 %v1867, %v1582
    %1889 = vrot.lane.b32.xlu0 %v1869, 64
    %v1890 = vpop.permute.xlu0 %1889
    %v1892 = vmul.f32 %v1867, %v1890
    %1894 = vrot.lane.b32.xlu0 %v1892, 32
    %v1895 = vpop.permute.xlu0 %1894
    %v1897 = vadd.f32 %v1887, %v1895
    %v1898 = vtanh.pop %v1897
    %1900 = vrot.lane.b32.xlu0 %v1898, 64
    %v1901 = vpop.permute.xlu0 %1900
    %v1903 = vmul.f32 %v1867, %v1901
    %1905 = vrot.lane.b32.xlu0 %v1886, 32
    %v1906 = vpop.permute.xlu0 %1905
    %1909 = vrot.lane.b32.xlu0 %v1903, 64
    %v1910 = vpop.permute.xlu0 %1909
    %v1912 = vsel %vm181, %v1906, %v1910
    %1913 = vst.msk [vmem:[#allocation2 + $0x8] sm:$0xff] %vm260, %v1912
    %1914 = vrot.lane.b32.xlu0 %v1737, 64
    %v1915 = vpop.permute.xlu0 %1914
    %v1917 = vsel %vm181, %v1740, %v1915
    %v1918 = vld [vmem:[%s8] sm:$0xff]
    %v1919 = vld [vmem:[%s8 + $0x8] sm:$0xff]
    %v1920 = vld [vmem:[%s8 + $0x10] sm:$0xff]
    %v1921 = vld [vmem:[%s8 + $0x18] sm:$0xff]
    %v1922 = vld [vmem:[%s8 + $0x20] sm:$0xff]
    %v1923 = vld [vmem:[%s8 + $0x28] sm:$0xff]
    %v1924 = vld [vmem:[%s8 + $0x30] sm:$0xff]
    %v1925 = vld [vmem:[%s8 + $0x38] sm:$0xff]
    %v1926 = vld [vmem:[%s8 + $0x40] sm:$0xff]
    %v1927 = vld [vmem:[%s8 + $0x48] sm:$0xff]
    %v1928 = vld [vmem:[%s8 + $0x50] sm:$0xff]
    %v1929 = vld [vmem:[%s8 + $0x58] sm:$0xff]
    %v1930 = vld [vmem:[%s8 + $0x60] sm:$0xff]
    %v1931 = vld [vmem:[%s8 + $0x68] sm:$0xff]
    %v1932 = vld [vmem:[%s8 + $0x70] sm:$0xff]
    %v1933 = vld [vmem:[%s8 + $0x78] sm:$0xff]
    %v1935 = vsel %vm260, %v1917, 0
    %1937 = vmatpush.msra.mxu0 0.0
    %1938 = vmatpush.msra.mxu0 0.0
    %1939 = vmatpush.msra.mxu0 0.0
    %1940 = vmatpush.msra.mxu0 0.0
    %1941 = vmatpush.msra.mxu0 0.0
    %1942 = vmatpush.msra.mxu0 0.0
    %1943 = vmatpush.msra.mxu0 0.0
    %1944 = vmatpush.msra.mxu0 0.0
    %1945 = vmatpush.msra.mxu0 %v1932
    %1946 = vmatpush.msra.mxu0 %v1930
    %1947 = vmatpush.msra.mxu0 %v1928
    %1948 = vmatpush.msra.mxu0 %v1926
    %1949 = vmatpush.msra.mxu0 %v1924
    %1950 = vmatpush.msra.mxu0 %v1922
    %1951 = vmatpush.msra.mxu0 %v1920
    %1952 = vmatpush.msra.mxu0 %v1918
    %1953 = vmatmul.f32.gmra.mxu0 %v1935
    %v1954 = vpop.f32.mrf.mxu0
    %v1955 = vadd.f32 0.0, %v1954
    %1956 = vdwg.mxu0
    %1957 = vmatpush.msra.mxu0 0.0
    %1958 = vmatpush.msra.mxu0 0.0
    %1959 = vmatpush.msra.mxu0 0.0
    %1960 = vmatpush.msra.mxu0 0.0
    %1961 = vmatpush.msra.mxu0 0.0
    %1962 = vmatpush.msra.mxu0 0.0
    %1963 = vmatpush.msra.mxu0 0.0
    %1964 = vmatpush.msra.mxu0 0.0
    %1965 = vmatpush.msra.mxu0 %v1933
    %1966 = vmatpush.msra.mxu0 %v1931
    %1967 = vmatpush.msra.mxu0 %v1929
    %1968 = vmatpush.msra.mxu0 %v1927
    %1969 = vmatpush.msra.mxu0 %v1925
    %1970 = vmatpush.msra.mxu0 %v1923
    %1971 = vmatpush.msra.mxu0 %v1921
    %1972 = vmatpush.msra.mxu0 %v1919
    %1973 = vmatmul.f32.gmra.mxu0 %v1935
    %v1974 = vpop.f32.mrf.mxu0
    %v1975 = vadd.f32 0.0, %v1974
    %1976 = vdwg.mxu0
    %v1977 = vadd.f32 %v1261, %v1955
    %v1978 = vadd.f32 %v1281, %v1975
    %v1979 = vxor.u32 %v1977, 2147483648
    %v1980 = vxor.u32 %v1978, 2147483648
    %v1981 = vmul.f32 %v1979, 1.442695
    %v1982 = vpow.pop %v1981
    %v1983 = vmul.f32 %v1980, 1.442695
    %v1984 = vpow.pop %v1983
    %v1985 = vadd.f32 %v1982, 1.0
    %v1986 = vadd.f32 %v1984, 1.0
    %v1987 = vrcp.pop %v1985
    %v1988 = vmul.f32 %v1985, %v1987
    %v1989 = vsub.f32 1.0, %v1988
    %v1990 = vmul.f32 %v1987, %v1989
    %v1991 = vadd.f32 %v1987, %v1990
    %vm1992 = vweird.f32 %v1985
    %vm1993 = vweird.f32 %v1987
    %vm1994 = vmor %vm1992, %vm1993
    %v1995 = vsel %vm1994, %v1987, %v1991
    %v1996 = vand.u32 2147483647, %v1985
    %vm1997 = vcmp.eq.f32.partialorder %v1996, 8.507059e+37
    %v1998 = vand.u32 %v1985, 2147483648
    %v1999 = vor.u32 1.1754944e-38, %v1998
    %v2000 = vsel %vm1997, %v1999, %v1995
    %v2001 = vmul.f32 1.0, %v2000
    %v2002 = vrcp.pop %v1986
    %v2003 = vmul.f32 %v1986, %v2002
    %v2004 = vsub.f32 1.0, %v2003
    %v2005 = vmul.f32 %v2002, %v2004
    %v2006 = vadd.f32 %v2002, %v2005
    %vm2007 = vweird.f32 %v1986
    %vm2008 = vweird.f32 %v2002
    %vm2009 = vmor %vm2007, %vm2008
    %v2010 = vsel %vm2009, %v2002, %v2006
    %v2011 = vand.u32 2147483647, %v1986
    %vm2012 = vcmp.eq.f32.partialorder %v2011, 8.507059e+37
    %v2013 = vand.u32 %v1986, 2147483648
    %v2014 = vor.u32 1.1754944e-38, %v2013
    %v2015 = vsel %vm2012, %v2014, %v2010
    %v2016 = vmul.f32 1.0, %v2015
    %v2017 = vtanh.pop %v1977
    %v2018 = vtanh.pop %v1978
    %v2019 = vmul.f32 %v2001, %v1714
    %2021 = vrot.lane.b32.xlu0 %v2017, 64
    %v2022 = vpop.permute.xlu0 %2021
    %v2024 = vmul.f32 %v2001, %v2022
    %2026 = vrot.lane.b32.xlu0 %v2024, 32
    %v2027 = vpop.permute.xlu0 %2026
    %v2029 = vadd.f32 %v2019, %v2027
    %v2030 = vtanh.pop %v2029
    %2032 = vrot.lane.b32.xlu0 %v2030, 64
    %v2033 = vpop.permute.xlu0 %2032
    %v2035 = vmul.f32 %v2001, %v2033
    %v2036 = vmul.f32 %v2016, %v1731
    %2038 = vrot.lane.b32.xlu0 %v2018, 64
    %v2039 = vpop.permute.xlu0 %2038
    %v2041 = vmul.f32 %v2016, %v2039
    %2043 = vrot.lane.b32.xlu0 %v2041, 32
    %v2044 = vpop.permute.xlu0 %2043
    %v2046 = vadd.f32 %v2036, %v2044
    %v2047 = vtanh.pop %v2046
    %2049 = vrot.lane.b32.xlu0 %v2047, 64
    %v2050 = vpop.permute.xlu0 %2049
    %v2052 = vmul.f32 %v2016, %v2050
    %2054 = vrot.lane.b32.xlu0 %v2035, 32
    %v2055 = vpop.permute.xlu0 %2054
    %2057 = vrot.lane.b32.xlu0 %v1886, 64
    %v2058 = vpop.permute.xlu0 %2057
    %2061 = vrot.lane.b32.xlu0 %v2052, 96
    %v2062 = vpop.permute.xlu0 %2061
    %v2064 = vsel %vm181, %v2055, %v2058
    %v2065 = vsel %vm260, %v2064, %v2062
    %v2066 = vsel %vm1435, %v2065, %v1903
    %v2067 = vld [vmem:[#allocation8] sm:$0xff]
    %v2068 = vld [vmem:[#allocation8 + $0x8] sm:$0xff]
    %v2069 = vld [vmem:[#allocation8 + $0x10] sm:$0xff]
    %v2070 = vld [vmem:[#allocation8 + $0x18] sm:$0xff]
    %v2071 = vld [vmem:[#allocation8 + $0x20] sm:$0xff]
    %v2072 = vld [vmem:[#allocation8 + $0x28] sm:$0xff]
    %v2073 = vld [vmem:[#allocation8 + $0x30] sm:$0xff]
    %v2074 = vld [vmem:[#allocation8 + $0x38] sm:$0xff]
    %v2075 = vld [vmem:[#allocation8 + $0x40] sm:$0xff]
    %v2076 = vld [vmem:[#allocation8 + $0x48] sm:$0xff]
    %v2077 = vld [vmem:[#allocation8 + $0x50] sm:$0xff]
    %v2078 = vld [vmem:[#allocation8 + $0x58] sm:$0xff]
    %v2079 = vld [vmem:[#allocation8 + $0x60] sm:$0xff]
    %v2080 = vld [vmem:[#allocation8 + $0x68] sm:$0xff]
    %v2081 = vld [vmem:[#allocation8 + $0x70] sm:$0xff]
    %v2082 = vld [vmem:[#allocation8 + $0x78] sm:$0xff]
    %v2083 = vld [vmem:[#allocation8 + $0x80] sm:$0xff]
    %v2084 = vld [vmem:[#allocation8 + $0x88] sm:$0xff]
    %v2085 = vld [vmem:[#allocation8 + $0x90] sm:$0xff]
    %v2086 = vld [vmem:[#allocation8 + $0x98] sm:$0xff]
    %v2087 = vld [vmem:[#allocation8 + $0xa0] sm:$0xff]
    %v2088 = vld [vmem:[#allocation8 + $0xa8] sm:$0xff]
    %v2089 = vld [vmem:[#allocation8 + $0xb0] sm:$0xff]
    %v2090 = vld [vmem:[#allocation8 + $0xb8] sm:$0xff]
    %v2091 = vld [vmem:[#allocation8 + $0xc0] sm:$0xff]
    %v2092 = vld [vmem:[#allocation8 + $0xc8] sm:$0xff]
    %v2093 = vld [vmem:[#allocation8 + $0xd0] sm:$0xff]
    %v2094 = vld [vmem:[#allocation8 + $0xd8] sm:$0xff]
    %v2095 = vld [vmem:[#allocation8 + $0xe0] sm:$0xff]
    %v2096 = vld [vmem:[#allocation8 + $0xe8] sm:$0xff]
    %v2097 = vld [vmem:[#allocation8 + $0xf0] sm:$0xff]
    %v2098 = vld [vmem:[#allocation8 + $0xf8] sm:$0xff]
    %v2099 = vld [vmem:[%s10] sm:$0x3]
    %v2101 = vperm.slane %v2099, 0
    %v2102 = vperm.slane %v2099, 1
    %2105 = vmatpush.msra.mxu0 %v2097
    %2106 = vmatpush.msra.mxu0 %v2095
    %2107 = vmatpush.msra.mxu0 %v2093
    %2108 = vmatpush.msra.mxu0 %v2091
    %2109 = vmatpush.msra.mxu0 %v2089
    %2110 = vmatpush.msra.mxu0 %v2087
    %2111 = vmatpush.msra.mxu0 %v2085
    %2112 = vmatpush.msra.mxu0 %v2083
    %2113 = vmatpush.msra.mxu0 %v2081
    %2114 = vmatpush.msra.mxu0 %v2079
    %2115 = vmatpush.msra.mxu0 %v2077
    %2116 = vmatpush.msra.mxu0 %v2075
    %2117 = vmatpush.msra.mxu0 %v2073
    %2118 = vmatpush.msra.mxu0 %v2071
    %2119 = vmatpush.msra.mxu0 %v2069
    %2120 = vmatpush.msra.mxu0 %v2067
    %2121 = vmatmul.f32.gmra.mxu0 %v2066
    %v2122 = vpop.f32.mrf.mxu0
    %v2123 = vadd.f32 %v2101, %v2122
    %2124 = vdwg.mxu0
    %2125 = vmatpush.msra.mxu0 %v2098
    %2126 = vmatpush.msra.mxu0 %v2096
    %2127 = vmatpush.msra.mxu0 %v2094
    %2128 = vmatpush.msra.mxu0 %v2092
    %2129 = vmatpush.msra.mxu0 %v2090
    %2130 = vmatpush.msra.mxu0 %v2088
    %2131 = vmatpush.msra.mxu0 %v2086
    %2132 = vmatpush.msra.mxu0 %v2084
    %2133 = vmatpush.msra.mxu0 %v2082
    %2134 = vmatpush.msra.mxu0 %v2080
    %2135 = vmatpush.msra.mxu0 %v2078
    %2136 = vmatpush.msra.mxu0 %v2076
    %2137 = vmatpush.msra.mxu0 %v2074
    %2138 = vmatpush.msra.mxu0 %v2072
    %2139 = vmatpush.msra.mxu0 %v2070
    %2140 = vmatpush.msra.mxu0 %v2068
    %2141 = vmatmul.f32.gmra.mxu0 %v2066
    %v2142 = vpop.f32.mrf.mxu0
    %v2143 = vadd.f32 %v2102, %v2142
    %2144 = vdwg.mxu0
    %v2145 = vxor.u32 %v2123, 2147483648
    %v2146 = vxor.u32 %v2143, 2147483648
    %v2147 = vmul.f32 %v2145, 1.442695
    %v2148 = vpow.pop %v2147
    %v2149 = vmul.f32 %v2146, 1.442695
    %v2150 = vpow.pop %v2149
    %v2151 = vadd.f32 %v2148, 1.0
    %v2152 = vadd.f32 %v2150, 1.0
    %v2153 = vrcp.pop %v2151
    %v2154 = vmul.f32 %v2151, %v2153
    %v2155 = vsub.f32 1.0, %v2154
    %v2156 = vmul.f32 %v2153, %v2155
    %v2157 = vadd.f32 %v2153, %v2156
    %vm2158 = vweird.f32 %v2151
    %vm2159 = vweird.f32 %v2153
    %vm2160 = vmor %vm2158, %vm2159
    %v2161 = vsel %vm2160, %v2153, %v2157
    %v2162 = vand.u32 2147483647, %v2151
    %vm2163 = vcmp.eq.f32.partialorder %v2162, 8.507059e+37
    %v2164 = vand.u32 %v2151, 2147483648
    %v2165 = vor.u32 1.1754944e-38, %v2164
    %v2166 = vsel %vm2163, %v2165, %v2161
    %v2167 = vmul.f32 1.0, %v2166
    %v2168 = vrcp.pop %v2152
    %v2169 = vmul.f32 %v2152, %v2168
    %v2170 = vsub.f32 1.0, %v2169
    %v2171 = vmul.f32 %v2168, %v2170
    %v2172 = vadd.f32 %v2168, %v2171
    %vm2173 = vweird.f32 %v2152
    %vm2174 = vweird.f32 %v2168
    %vm2175 = vmor %vm2173, %vm2174
    %v2176 = vsel %vm2175, %v2168, %v2172
    %v2177 = vand.u32 2147483647, %v2152
    %vm2178 = vcmp.eq.f32.partialorder %v2177, 8.507059e+37
    %v2179 = vand.u32 %v2152, 2147483648
    %v2180 = vor.u32 1.1754944e-38, %v2179
    %v2181 = vsel %vm2178, %v2180, %v2176
    %v2182 = vmul.f32 1.0, %v2181
    %v2183 = vtanh.pop %v2123
    %v2184 = vtanh.pop %v2143
    %v2185 = vmul.f32 %v2167, %v1880
    %2187 = vrot.lane.b32.xlu0 %v2183, 64
    %v2188 = vpop.permute.xlu0 %2187
    %v2190 = vmul.f32 %v2167, %v2188
    %2192 = vrot.lane.b32.xlu0 %v2190, 32
    %v2193 = vpop.permute.xlu0 %2192
    %v2195 = vadd.f32 %v2185, %v2193
    %v2196 = vtanh.pop %v2195
    %2198 = vrot.lane.b32.xlu0 %v2196, 64
    %v2199 = vpop.permute.xlu0 %2198
    %v2201 = vmul.f32 %v2167, %v2199
    %v2202 = vmul.f32 %v2182, %v1897
    %2204 = vrot.lane.b32.xlu0 %v2184, 64
    %v2205 = vpop.permute.xlu0 %2204
    %v2207 = vmul.f32 %v2182, %v2205
    %2209 = vrot.lane.b32.xlu0 %v2207, 32
    %v2210 = vpop.permute.xlu0 %2209
    %v2212 = vadd.f32 %v2202, %v2210
    %v2213 = vtanh.pop %v2212
    %2215 = vrot.lane.b32.xlu0 %v2213, 64
    %v2216 = vpop.permute.xlu0 %2215
    %v2218 = vmul.f32 %v2182, %v2216
    %2220 = vrot.lane.b32.xlu0 %v2201, 32
    %v2221 = vpop.permute.xlu0 %2220
    %2224 = vrot.lane.b32.xlu0 %v2218, 64
    %v2225 = vpop.permute.xlu0 %2224
    %v2227 = vsel %vm181, %v2221, %v2225
    %2228 = vst.msk [vmem:[#allocation2 + $0x10] sm:$0xff] %vm260, %v2227
    %2229 = vrot.lane.b32.xlu0 %v2052, 64
    %v2230 = vpop.permute.xlu0 %2229
    %v2232 = vsel %vm181, %v2055, %v2230
    %v2233 = vld [vmem:[%s8] sm:$0xff]
    %v2234 = vld [vmem:[%s8 + $0x8] sm:$0xff]
    %v2235 = vld [vmem:[%s8 + $0x10] sm:$0xff]
    %v2236 = vld [vmem:[%s8 + $0x18] sm:$0xff]
    %v2237 = vld [vmem:[%s8 + $0x20] sm:$0xff]
    %v2238 = vld [vmem:[%s8 + $0x28] sm:$0xff]
    %v2239 = vld [vmem:[%s8 + $0x30] sm:$0xff]
    %v2240 = vld [vmem:[%s8 + $0x38] sm:$0xff]
    %v2241 = vld [vmem:[%s8 + $0x40] sm:$0xff]
    %v2242 = vld [vmem:[%s8 + $0x48] sm:$0xff]
    %v2243 = vld [vmem:[%s8 + $0x50] sm:$0xff]
    %v2244 = vld [vmem:[%s8 + $0x58] sm:$0xff]
    %v2245 = vld [vmem:[%s8 + $0x60] sm:$0xff]
    %v2246 = vld [vmem:[%s8 + $0x68] sm:$0xff]
    %v2247 = vld [vmem:[%s8 + $0x70] sm:$0xff]
    %v2248 = vld [vmem:[%s8 + $0x78] sm:$0xff]
    %v2250 = vsel %vm260, %v2232, 0
    %2252 = vmatpush.msra.mxu0 0.0
    %2253 = vmatpush.msra.mxu0 0.0
    %2254 = vmatpush.msra.mxu0 0.0
    %2255 = vmatpush.msra.mxu0 0.0
    %2256 = vmatpush.msra.mxu0 0.0
    %2257 = vmatpush.msra.mxu0 0.0
    %2258 = vmatpush.msra.mxu0 0.0
    %2259 = vmatpush.msra.mxu0 0.0
    %2260 = vmatpush.msra.mxu0 %v2247
    %2261 = vmatpush.msra.mxu0 %v2245
    %2262 = vmatpush.msra.mxu0 %v2243
    %2263 = vmatpush.msra.mxu0 %v2241
    %2264 = vmatpush.msra.mxu0 %v2239
    %2265 = vmatpush.msra.mxu0 %v2237
    %2266 = vmatpush.msra.mxu0 %v2235
    %2267 = vmatpush.msra.mxu0 %v2233
    %2268 = vmatmul.f32.gmra.mxu0 %v2250
    %v2269 = vpop.f32.mrf.mxu0
    %v2270 = vadd.f32 0.0, %v2269
    %2271 = vdwg.mxu0
    %2272 = vmatpush.msra.mxu0 0.0
    %2273 = vmatpush.msra.mxu0 0.0
    %2274 = vmatpush.msra.mxu0 0.0
    %2275 = vmatpush.msra.mxu0 0.0
    %2276 = vmatpush.msra.mxu0 0.0
    %2277 = vmatpush.msra.mxu0 0.0
    %2278 = vmatpush.msra.mxu0 0.0
    %2279 = vmatpush.msra.mxu0 0.0
    %2280 = vmatpush.msra.mxu0 %v2248
    %2281 = vmatpush.msra.mxu0 %v2246
    %2282 = vmatpush.msra.mxu0 %v2244
    %2283 = vmatpush.msra.mxu0 %v2242
    %2284 = vmatpush.msra.mxu0 %v2240
    %2285 = vmatpush.msra.mxu0 %v2238
    %2286 = vmatpush.msra.mxu0 %v2236
    %2287 = vmatpush.msra.mxu0 %v2234
    %2288 = vmatmul.f32.gmra.mxu0 %v2250
    %v2289 = vpop.f32.mrf.mxu0
    %v2290 = vadd.f32 0.0, %v2289
    %2291 = vdwg.mxu0
    %v2292 = vadd.f32 %v1261, %v2270
    %v2293 = vadd.f32 %v1281, %v2290
    %v2294 = vxor.u32 %v2292, 2147483648
    %v2295 = vxor.u32 %v2293, 2147483648
    %v2296 = vmul.f32 %v2294, 1.442695
    %v2297 = vpow.pop %v2296
    %v2298 = vmul.f32 %v2295, 1.442695
    %v2299 = vpow.pop %v2298
    %v2300 = vadd.f32 %v2297, 1.0
    %v2301 = vadd.f32 %v2299, 1.0
    %v2302 = vrcp.pop %v2300
    %v2303 = vmul.f32 %v2300, %v2302
    %v2304 = vsub.f32 1.0, %v2303
    %v2305 = vmul.f32 %v2302, %v2304
    %v2306 = vadd.f32 %v2302, %v2305
    %vm2307 = vweird.f32 %v2300
    %vm2308 = vweird.f32 %v2302
    %vm2309 = vmor %vm2307, %vm2308
    %v2310 = vsel %vm2309, %v2302, %v2306
    %v2311 = vand.u32 2147483647, %v2300
    %vm2312 = vcmp.eq.f32.partialorder %v2311, 8.507059e+37
    %v2313 = vand.u32 %v2300, 2147483648
    %v2314 = vor.u32 1.1754944e-38, %v2313
    %v2315 = vsel %vm2312, %v2314, %v2310
    %v2316 = vmul.f32 1.0, %v2315
    %v2317 = vrcp.pop %v2301
    %v2318 = vmul.f32 %v2301, %v2317
    %v2319 = vsub.f32 1.0, %v2318
    %v2320 = vmul.f32 %v2317, %v2319
    %v2321 = vadd.f32 %v2317, %v2320
    %vm2322 = vweird.f32 %v2301
    %vm2323 = vweird.f32 %v2317
    %vm2324 = vmor %vm2322, %vm2323
    %v2325 = vsel %vm2324, %v2317, %v2321
    %v2326 = vand.u32 2147483647, %v2301
    %vm2327 = vcmp.eq.f32.partialorder %v2326, 8.507059e+37
    %v2328 = vand.u32 %v2301, 2147483648
    %v2329 = vor.u32 1.1754944e-38, %v2328
    %v2330 = vsel %vm2327, %v2329, %v2325
    %v2331 = vmul.f32 1.0, %v2330
    %v2332 = vtanh.pop %v2292
    %v2333 = vtanh.pop %v2293
    %v2334 = vmul.f32 %v2316, %v2029
    %2336 = vrot.lane.b32.xlu0 %v2332, 64
    %v2337 = vpop.permute.xlu0 %2336
    %v2339 = vmul.f32 %v2316, %v2337
    %2341 = vrot.lane.b32.xlu0 %v2339, 32
    %v2342 = vpop.permute.xlu0 %2341
    %v2344 = vadd.f32 %v2334, %v2342
    %v2345 = vtanh.pop %v2344
    %2347 = vrot.lane.b32.xlu0 %v2345, 64
    %v2348 = vpop.permute.xlu0 %2347
    %v2350 = vmul.f32 %v2316, %v2348
    %v2351 = vmul.f32 %v2331, %v2046
    %2353 = vrot.lane.b32.xlu0 %v2333, 64
    %v2354 = vpop.permute.xlu0 %2353
    %v2356 = vmul.f32 %v2331, %v2354
    %2358 = vrot.lane.b32.xlu0 %v2356, 32
    %v2359 = vpop.permute.xlu0 %2358
    %v2361 = vadd.f32 %v2351, %v2359
    %v2362 = vtanh.pop %v2361
    %2364 = vrot.lane.b32.xlu0 %v2362, 64
    %v2365 = vpop.permute.xlu0 %2364
    %v2367 = vmul.f32 %v2331, %v2365
    %2369 = vrot.lane.b32.xlu0 %v2350, 32
    %v2370 = vpop.permute.xlu0 %2369
    %2372 = vrot.lane.b32.xlu0 %v2201, 64
    %v2373 = vpop.permute.xlu0 %2372
    %2376 = vrot.lane.b32.xlu0 %v2367, 96
    %v2377 = vpop.permute.xlu0 %2376
    %v2379 = vsel %vm181, %v2370, %v2373
    %v2380 = vsel %vm260, %v2379, %v2377
    %v2381 = vsel %vm1435, %v2380, %v2218
    %v2382 = vld [vmem:[#allocation8] sm:$0xff]
    %v2383 = vld [vmem:[#allocation8 + $0x8] sm:$0xff]
    %v2384 = vld [vmem:[#allocation8 + $0x10] sm:$0xff]
    %v2385 = vld [vmem:[#allocation8 + $0x18] sm:$0xff]
    %v2386 = vld [vmem:[#allocation8 + $0x20] sm:$0xff]
    %v2387 = vld [vmem:[#allocation8 + $0x28] sm:$0xff]
    %v2388 = vld [vmem:[#allocation8 + $0x30] sm:$0xff]
    %v2389 = vld [vmem:[#allocation8 + $0x38] sm:$0xff]
    %v2390 = vld [vmem:[#allocation8 + $0x40] sm:$0xff]
    %v2391 = vld [vmem:[#allocation8 + $0x48] sm:$0xff]
    %v2392 = vld [vmem:[#allocation8 + $0x50] sm:$0xff]
    %v2393 = vld [vmem:[#allocation8 + $0x58] sm:$0xff]
    %v2394 = vld [vmem:[#allocation8 + $0x60] sm:$0xff]
    %v2395 = vld [vmem:[#allocation8 + $0x68] sm:$0xff]
    %v2396 = vld [vmem:[#allocation8 + $0x70] sm:$0xff]
    %v2397 = vld [vmem:[#allocation8 + $0x78] sm:$0xff]
    %v2398 = vld [vmem:[#allocation8 + $0x80] sm:$0xff]
    %v2399 = vld [vmem:[#allocation8 + $0x88] sm:$0xff]
    %v2400 = vld [vmem:[#allocation8 + $0x90] sm:$0xff]
    %v2401 = vld [vmem:[#allocation8 + $0x98] sm:$0xff]
    %v2402 = vld [vmem:[#allocation8 + $0xa0] sm:$0xff]
    %v2403 = vld [vmem:[#allocation8 + $0xa8] sm:$0xff]
    %v2404 = vld [vmem:[#allocation8 + $0xb0] sm:$0xff]
    %v2405 = vld [vmem:[#allocation8 + $0xb8] sm:$0xff]
    %v2406 = vld [vmem:[#allocation8 + $0xc0] sm:$0xff]
    %v2407 = vld [vmem:[#allocation8 + $0xc8] sm:$0xff]
    %v2408 = vld [vmem:[#allocation8 + $0xd0] sm:$0xff]
    %v2409 = vld [vmem:[#allocation8 + $0xd8] sm:$0xff]
    %v2410 = vld [vmem:[#allocation8 + $0xe0] sm:$0xff]
    %v2411 = vld [vmem:[#allocation8 + $0xe8] sm:$0xff]
    %v2412 = vld [vmem:[#allocation8 + $0xf0] sm:$0xff]
    %v2413 = vld [vmem:[#allocation8 + $0xf8] sm:$0xff]
    %v2414 = vld [vmem:[%s10] sm:$0x3]
    %v2416 = vperm.slane %v2414, 0
    %v2417 = vperm.slane %v2414, 1
    %2420 = vmatpush.msra.mxu0 %v2412
    %2421 = vmatpush.msra.mxu0 %v2410
    %2422 = vmatpush.msra.mxu0 %v2408
    %2423 = vmatpush.msra.mxu0 %v2406
    %2424 = vmatpush.msra.mxu0 %v2404
    %2425 = vmatpush.msra.mxu0 %v2402
    %2426 = vmatpush.msra.mxu0 %v2400
    %2427 = vmatpush.msra.mxu0 %v2398
    %2428 = vmatpush.msra.mxu0 %v2396
    %2429 = vmatpush.msra.mxu0 %v2394
    %2430 = vmatpush.msra.mxu0 %v2392
    %2431 = vmatpush.msra.mxu0 %v2390
    %2432 = vmatpush.msra.mxu0 %v2388
    %2433 = vmatpush.msra.mxu0 %v2386
    %2434 = vmatpush.msra.mxu0 %v2384
    %2435 = vmatpush.msra.mxu0 %v2382
    %2436 = vmatmul.f32.gmra.mxu0 %v2381
    %v2437 = vpop.f32.mrf.mxu0
    %v2438 = vadd.f32 %v2416, %v2437
    %2439 = vdwg.mxu0
    %2440 = vmatpush.msra.mxu0 %v2413
    %2441 = vmatpush.msra.mxu0 %v2411
    %2442 = vmatpush.msra.mxu0 %v2409
    %2443 = vmatpush.msra.mxu0 %v2407
    %2444 = vmatpush.msra.mxu0 %v2405
    %2445 = vmatpush.msra.mxu0 %v2403
    %2446 = vmatpush.msra.mxu0 %v2401
    %2447 = vmatpush.msra.mxu0 %v2399
    %2448 = vmatpush.msra.mxu0 %v2397
    %2449 = vmatpush.msra.mxu0 %v2395
    %2450 = vmatpush.msra.mxu0 %v2393
    %2451 = vmatpush.msra.mxu0 %v2391
    %2452 = vmatpush.msra.mxu0 %v2389
    %2453 = vmatpush.msra.mxu0 %v2387
    %2454 = vmatpush.msra.mxu0 %v2385
    %2455 = vmatpush.msra.mxu0 %v2383
    %2456 = vmatmul.f32.gmra.mxu0 %v2381
    %v2457 = vpop.f32.mrf.mxu0
    %v2458 = vadd.f32 %v2417, %v2457
    %2459 = vdwg.mxu0
    %v2460 = vxor.u32 %v2438, 2147483648
    %v2461 = vxor.u32 %v2458, 2147483648
    %v2462 = vmul.f32 %v2460, 1.442695
    %v2463 = vpow.pop %v2462
    %v2464 = vmul.f32 %v2461, 1.442695
    %v2465 = vpow.pop %v2464
    %v2466 = vadd.f32 %v2463, 1.0
    %v2467 = vadd.f32 %v2465, 1.0
    %v2468 = vrcp.pop %v2466
    %v2469 = vmul.f32 %v2466, %v2468
    %v2470 = vsub.f32 1.0, %v2469
    %v2471 = vmul.f32 %v2468, %v2470
    %v2472 = vadd.f32 %v2468, %v2471
    %vm2473 = vweird.f32 %v2466
    %vm2474 = vweird.f32 %v2468
    %vm2475 = vmor %vm2473, %vm2474
    %v2476 = vsel %vm2475, %v2468, %v2472
    %v2477 = vand.u32 2147483647, %v2466
    %vm2478 = vcmp.eq.f32.partialorder %v2477, 8.507059e+37
    %v2479 = vand.u32 %v2466, 2147483648
    %v2480 = vor.u32 1.1754944e-38, %v2479
    %v2481 = vsel %vm2478, %v2480, %v2476
    %v2482 = vmul.f32 1.0, %v2481
    %v2483 = vrcp.pop %v2467
    %v2484 = vmul.f32 %v2467, %v2483
    %v2485 = vsub.f32 1.0, %v2484
    %v2486 = vmul.f32 %v2483, %v2485
    %v2487 = vadd.f32 %v2483, %v2486
    %vm2488 = vweird.f32 %v2467
    %vm2489 = vweird.f32 %v2483
    %vm2490 = vmor %vm2488, %vm2489
    %v2491 = vsel %vm2490, %v2483, %v2487
    %v2492 = vand.u32 2147483647, %v2467
    %vm2493 = vcmp.eq.f32.partialorder %v2492, 8.507059e+37
    %v2494 = vand.u32 %v2467, 2147483648
    %v2495 = vor.u32 1.1754944e-38, %v2494
    %v2496 = vsel %vm2493, %v2495, %v2491
    %v2497 = vmul.f32 1.0, %v2496
    %v2498 = vtanh.pop %v2438
    %v2499 = vtanh.pop %v2458
    %v2500 = vmul.f32 %v2482, %v2195
    %2502 = vrot.lane.b32.xlu0 %v2498, 64
    %v2503 = vpop.permute.xlu0 %2502
    %v2505 = vmul.f32 %v2482, %v2503
    %2507 = vrot.lane.b32.xlu0 %v2505, 32
    %v2508 = vpop.permute.xlu0 %2507
    %v2510 = vadd.f32 %v2500, %v2508
    %v2511 = vtanh.pop %v2510
    %2513 = vrot.lane.b32.xlu0 %v2511, 64
    %v2514 = vpop.permute.xlu0 %2513
    %v2516 = vmul.f32 %v2482, %v2514
    %v2517 = vmul.f32 %v2497, %v2212
    %2519 = vrot.lane.b32.xlu0 %v2499, 64
    %v2520 = vpop.permute.xlu0 %2519
    %v2522 = vmul.f32 %v2497, %v2520
    %2524 = vrot.lane.b32.xlu0 %v2522, 32
    %v2525 = vpop.permute.xlu0 %2524
    %v2527 = vadd.f32 %v2517, %v2525
    %v2528 = vtanh.pop %v2527
    %2530 = vrot.lane.b32.xlu0 %v2528, 64
    %v2531 = vpop.permute.xlu0 %2530
    %v2533 = vmul.f32 %v2497, %v2531
    %2535 = vrot.lane.b32.xlu0 %v2516, 32
    %v2536 = vpop.permute.xlu0 %2535
    %2539 = vrot.lane.b32.xlu0 %v2533, 64
    %v2540 = vpop.permute.xlu0 %2539
    %v2542 = vsel %vm181, %v2536, %v2540
    %2543 = vst.msk [vmem:[#allocation2 + $0x18] sm:$0xff] %vm260, %v2542
    %2544 = vrot.lane.b32.xlu0 %v2367, 64
    %v2545 = vpop.permute.xlu0 %2544
    %v2547 = vsel %vm181, %v2370, %v2545
    %v2548 = vld [vmem:[%s8] sm:$0xff]
    %v2549 = vld [vmem:[%s8 + $0x8] sm:$0xff]
    %v2550 = vld [vmem:[%s8 + $0x10] sm:$0xff]
    %v2551 = vld [vmem:[%s8 + $0x18] sm:$0xff]
    %v2552 = vld [vmem:[%s8 + $0x20] sm:$0xff]
    %v2553 = vld [vmem:[%s8 + $0x28] sm:$0xff]
    %v2554 = vld [vmem:[%s8 + $0x30] sm:$0xff]
    %v2555 = vld [vmem:[%s8 + $0x38] sm:$0xff]
    %v2556 = vld [vmem:[%s8 + $0x40] sm:$0xff]
    %v2557 = vld [vmem:[%s8 + $0x48] sm:$0xff]
    %v2558 = vld [vmem:[%s8 + $0x50] sm:$0xff]
    %v2559 = vld [vmem:[%s8 + $0x58] sm:$0xff]
    %v2560 = vld [vmem:[%s8 + $0x60] sm:$0xff]
    %v2561 = vld [vmem:[%s8 + $0x68] sm:$0xff]
    %v2562 = vld [vmem:[%s8 + $0x70] sm:$0xff]
    %v2563 = vld [vmem:[%s8 + $0x78] sm:$0xff]
    %v2565 = vsel %vm260, %v2547, 0
    %2567 = vmatpush.msra.mxu0 0.0
    %2568 = vmatpush.msra.mxu0 0.0
    %2569 = vmatpush.msra.mxu0 0.0
    %2570 = vmatpush.msra.mxu0 0.0
    %2571 = vmatpush.msra.mxu0 0.0
    %2572 = vmatpush.msra.mxu0 0.0
    %2573 = vmatpush.msra.mxu0 0.0
    %2574 = vmatpush.msra.mxu0 0.0
    %2575 = vmatpush.msra.mxu0 %v2562
    %2576 = vmatpush.msra.mxu0 %v2560
    %2577 = vmatpush.msra.mxu0 %v2558
    %2578 = vmatpush.msra.mxu0 %v2556
    %2579 = vmatpush.msra.mxu0 %v2554
    %2580 = vmatpush.msra.mxu0 %v2552
    %2581 = vmatpush.msra.mxu0 %v2550
    %2582 = vmatpush.msra.mxu0 %v2548
    %2583 = vmatmul.f32.gmra.mxu0 %v2565
    %v2584 = vpop.f32.mrf.mxu0
    %v2585 = vadd.f32 0.0, %v2584
    %2586 = vdwg.mxu0
    %2587 = vmatpush.msra.mxu0 0.0
    %2588 = vmatpush.msra.mxu0 0.0
    %2589 = vmatpush.msra.mxu0 0.0
    %2590 = vmatpush.msra.mxu0 0.0
    %2591 = vmatpush.msra.mxu0 0.0
    %2592 = vmatpush.msra.mxu0 0.0
    %2593 = vmatpush.msra.mxu0 0.0
    %2594 = vmatpush.msra.mxu0 0.0
    %2595 = vmatpush.msra.mxu0 %v2563
    %2596 = vmatpush.msra.mxu0 %v2561
    %2597 = vmatpush.msra.mxu0 %v2559
    %2598 = vmatpush.msra.mxu0 %v2557
    %2599 = vmatpush.msra.mxu0 %v2555
    %2600 = vmatpush.msra.mxu0 %v2553
    %2601 = vmatpush.msra.mxu0 %v2551
    %2602 = vmatpush.msra.mxu0 %v2549
    %2603 = vmatmul.f32.gmra.mxu0 %v2565
    %v2604 = vpop.f32.mrf.mxu0
    %v2605 = vadd.f32 0.0, %v2604
    %2606 = vdwg.mxu0
    %v2607 = vadd.f32 %v1261, %v2585
    %v2608 = vadd.f32 %v1281, %v2605
    %v2609 = vxor.u32 %v2607, 2147483648
    %v2610 = vxor.u32 %v2608, 2147483648
    %v2611 = vmul.f32 %v2609, 1.442695
    %v2612 = vpow.pop %v2611
    %v2613 = vmul.f32 %v2610, 1.442695
    %v2614 = vpow.pop %v2613
    %v2615 = vadd.f32 %v2612, 1.0
    %v2616 = vadd.f32 %v2614, 1.0
    %v2617 = vrcp.pop %v2615
    %v2618 = vmul.f32 %v2615, %v2617
    %v2619 = vsub.f32 1.0, %v2618
    %v2620 = vmul.f32 %v2617, %v2619
    %v2621 = vadd.f32 %v2617, %v2620
    %vm2622 = vweird.f32 %v2615
    %vm2623 = vweird.f32 %v2617
    %vm2624 = vmor %vm2622, %vm2623
    %v2625 = vsel %vm2624, %v2617, %v2621
    %v2626 = vand.u32 2147483647, %v2615
    %vm2627 = vcmp.eq.f32.partialorder %v2626, 8.507059e+37
    %v2628 = vand.u32 %v2615, 2147483648
    %v2629 = vor.u32 1.1754944e-38, %v2628
    %v2630 = vsel %vm2627, %v2629, %v2625
    %v2631 = vmul.f32 1.0, %v2630
    %v2632 = vrcp.pop %v2616
    %v2633 = vmul.f32 %v2616, %v2632
    %v2634 = vsub.f32 1.0, %v2633
    %v2635 = vmul.f32 %v2632, %v2634
    %v2636 = vadd.f32 %v2632, %v2635
    %vm2637 = vweird.f32 %v2616
    %vm2638 = vweird.f32 %v2632
    %vm2639 = vmor %vm2637, %vm2638
    %v2640 = vsel %vm2639, %v2632, %v2636
    %v2641 = vand.u32 2147483647, %v2616
    %vm2642 = vcmp.eq.f32.partialorder %v2641, 8.507059e+37
    %v2643 = vand.u32 %v2616, 2147483648
    %v2644 = vor.u32 1.1754944e-38, %v2643
    %v2645 = vsel %vm2642, %v2644, %v2640
    %v2646 = vmul.f32 1.0, %v2645
    %v2647 = vtanh.pop %v2607
    %v2648 = vtanh.pop %v2608
    %v2649 = vmul.f32 %v2631, %v2344
    %2651 = vrot.lane.b32.xlu0 %v2647, 64
    %v2652 = vpop.permute.xlu0 %2651
    %v2654 = vmul.f32 %v2631, %v2652
    %2656 = vrot.lane.b32.xlu0 %v2654, 32
    %v2657 = vpop.permute.xlu0 %2656
    %v2659 = vadd.f32 %v2649, %v2657
    %v2660 = vtanh.pop %v2659
    %2662 = vrot.lane.b32.xlu0 %v2660, 64
    %v2663 = vpop.permute.xlu0 %2662
    %v2665 = vmul.f32 %v2631, %v2663
    %v2666 = vmul.f32 %v2646, %v2361
    %2668 = vrot.lane.b32.xlu0 %v2648, 64
    %v2669 = vpop.permute.xlu0 %2668
    %v2671 = vmul.f32 %v2646, %v2669
    %2673 = vrot.lane.b32.xlu0 %v2671, 32
    %v2674 = vpop.permute.xlu0 %2673
    %v2676 = vadd.f32 %v2666, %v2674
    %v2677 = vtanh.pop %v2676
    %2679 = vrot.lane.b32.xlu0 %v2677, 64
    %v2680 = vpop.permute.xlu0 %2679
    %v2682 = vmul.f32 %v2646, %v2680
    %2684 = vrot.lane.b32.xlu0 %v2665, 32
    %v2685 = vpop.permute.xlu0 %2684
    %2687 = vrot.lane.b32.xlu0 %v2516, 64
    %v2688 = vpop.permute.xlu0 %2687
    %2691 = vrot.lane.b32.xlu0 %v2682, 96
    %v2692 = vpop.permute.xlu0 %2691
    %v2694 = vsel %vm181, %v2685, %v2688
    %v2695 = vsel %vm260, %v2694, %v2692
    %v2696 = vsel %vm1435, %v2695, %v2533
    %v2697 = vld [vmem:[#allocation8] sm:$0xff]
    %v2698 = vld [vmem:[#allocation8 + $0x8] sm:$0xff]
    %v2699 = vld [vmem:[#allocation8 + $0x10] sm:$0xff]
    %v2700 = vld [vmem:[#allocation8 + $0x18] sm:$0xff]
    %v2701 = vld [vmem:[#allocation8 + $0x20] sm:$0xff]
    %v2702 = vld [vmem:[#allocation8 + $0x28] sm:$0xff]
    %v2703 = vld [vmem:[#allocation8 + $0x30] sm:$0xff]
    %v2704 = vld [vmem:[#allocation8 + $0x38] sm:$0xff]
    %v2705 = vld [vmem:[#allocation8 + $0x40] sm:$0xff]
    %v2706 = vld [vmem:[#allocation8 + $0x48] sm:$0xff]
    %v2707 = vld [vmem:[#allocation8 + $0x50] sm:$0xff]
    %v2708 = vld [vmem:[#allocation8 + $0x58] sm:$0xff]
    %v2709 = vld [vmem:[#allocation8 + $0x60] sm:$0xff]
    %v2710 = vld [vmem:[#allocation8 + $0x68] sm:$0xff]
    %v2711 = vld [vmem:[#allocation8 + $0x70] sm:$0xff]
    %v2712 = vld [vmem:[#allocation8 + $0x78] sm:$0xff]
    %v2713 = vld [vmem:[#allocation8 + $0x80] sm:$0xff]
    %v2714 = vld [vmem:[#allocation8 + $0x88] sm:$0xff]
    %v2715 = vld [vmem:[#allocation8 + $0x90] sm:$0xff]
    %v2716 = vld [vmem:[#allocation8 + $0x98] sm:$0xff]
    %v2717 = vld [vmem:[#allocation8 + $0xa0] sm:$0xff]
    %v2718 = vld [vmem:[#allocation8 + $0xa8] sm:$0xff]
    %v2719 = vld [vmem:[#allocation8 + $0xb0] sm:$0xff]
    %v2720 = vld [vmem:[#allocation8 + $0xb8] sm:$0xff]
    %v2721 = vld [vmem:[#allocation8 + $0xc0] sm:$0xff]
    %v2722 = vld [vmem:[#allocation8 + $0xc8] sm:$0xff]
    %v2723 = vld [vmem:[#allocation8 + $0xd0] sm:$0xff]
    %v2724 = vld [vmem:[#allocation8 + $0xd8] sm:$0xff]
    %v2725 = vld [vmem:[#allocation8 + $0xe0] sm:$0xff]
    %v2726 = vld [vmem:[#allocation8 + $0xe8] sm:$0xff]
    %v2727 = vld [vmem:[#allocation8 + $0xf0] sm:$0xff]
    %v2728 = vld [vmem:[#allocation8 + $0xf8] sm:$0xff]
    %v2729 = vld [vmem:[%s10] sm:$0x3]
    %v2731 = vperm.slane %v2729, 0
    %v2732 = vperm.slane %v2729, 1
    %2735 = vmatpush.msra.mxu0 %v2727
    %2736 = vmatpush.msra.mxu0 %v2725
    %2737 = vmatpush.msra.mxu0 %v2723
    %2738 = vmatpush.msra.mxu0 %v2721
    %2739 = vmatpush.msra.mxu0 %v2719
    %2740 = vmatpush.msra.mxu0 %v2717
    %2741 = vmatpush.msra.mxu0 %v2715
    %2742 = vmatpush.msra.mxu0 %v2713
    %2743 = vmatpush.msra.mxu0 %v2711
    %2744 = vmatpush.msra.mxu0 %v2709
    %2745 = vmatpush.msra.mxu0 %v2707
    %2746 = vmatpush.msra.mxu0 %v2705
    %2747 = vmatpush.msra.mxu0 %v2703
    %2748 = vmatpush.msra.mxu0 %v2701
    %2749 = vmatpush.msra.mxu0 %v2699
    %2750 = vmatpush.msra.mxu0 %v2697
    %2751 = vmatmul.f32.gmra.mxu0 %v2696
    %v2752 = vpop.f32.mrf.mxu0
    %v2753 = vadd.f32 %v2731, %v2752
    %2754 = vdwg.mxu0
    %2755 = vmatpush.msra.mxu0 %v2728
    %2756 = vmatpush.msra.mxu0 %v2726
    %2757 = vmatpush.msra.mxu0 %v2724
    %2758 = vmatpush.msra.mxu0 %v2722
    %2759 = vmatpush.msra.mxu0 %v2720
    %2760 = vmatpush.msra.mxu0 %v2718
    %2761 = vmatpush.msra.mxu0 %v2716
    %2762 = vmatpush.msra.mxu0 %v2714
    %2763 = vmatpush.msra.mxu0 %v2712
    %2764 = vmatpush.msra.mxu0 %v2710
    %2765 = vmatpush.msra.mxu0 %v2708
    %2766 = vmatpush.msra.mxu0 %v2706
    %2767 = vmatpush.msra.mxu0 %v2704
    %2768 = vmatpush.msra.mxu0 %v2702
    %2769 = vmatpush.msra.mxu0 %v2700
    %2770 = vmatpush.msra.mxu0 %v2698
    %2771 = vmatmul.f32.gmra.mxu0 %v2696
    %v2772 = vpop.f32.mrf.mxu0
    %v2773 = vadd.f32 %v2732, %v2772
    %2774 = vdwg.mxu0
    %v2775 = vxor.u32 %v2753, 2147483648
    %v2776 = vxor.u32 %v2773, 2147483648
    %v2777 = vmul.f32 %v2775, 1.442695
    %v2778 = vpow.pop %v2777
    %v2779 = vmul.f32 %v2776, 1.442695
    %v2780 = vpow.pop %v2779
    %v2781 = vadd.f32 %v2778, 1.0
    %v2782 = vadd.f32 %v2780, 1.0
    %v2783 = vrcp.pop %v2781
    %v2784 = vmul.f32 %v2781, %v2783
    %v2785 = vsub.f32 1.0, %v2784
    %v2786 = vmul.f32 %v2783, %v2785
    %v2787 = vadd.f32 %v2783, %v2786
    %vm2788 = vweird.f32 %v2781
    %vm2789 = vweird.f32 %v2783
    %vm2790 = vmor %vm2788, %vm2789
    %v2791 = vsel %vm2790, %v2783, %v2787
    %v2792 = vand.u32 2147483647, %v2781
    %vm2793 = vcmp.eq.f32.partialorder %v2792, 8.507059e+37
    %v2794 = vand.u32 %v2781, 2147483648
    %v2795 = vor.u32 1.1754944e-38, %v2794
    %v2796 = vsel %vm2793, %v2795, %v2791
    %v2797 = vmul.f32 1.0, %v2796
    %v2798 = vrcp.pop %v2782
    %v2799 = vmul.f32 %v2782, %v2798
    %v2800 = vsub.f32 1.0, %v2799
    %v2801 = vmul.f32 %v2798, %v2800
    %v2802 = vadd.f32 %v2798, %v2801
    %vm2803 = vweird.f32 %v2782
    %vm2804 = vweird.f32 %v2798
    %vm2805 = vmor %vm2803, %vm2804
    %v2806 = vsel %vm2805, %v2798, %v2802
    %v2807 = vand.u32 2147483647, %v2782
    %vm2808 = vcmp.eq.f32.partialorder %v2807, 8.507059e+37
    %v2809 = vand.u32 %v2782, 2147483648
    %v2810 = vor.u32 1.1754944e-38, %v2809
    %v2811 = vsel %vm2808, %v2810, %v2806
    %v2812 = vmul.f32 1.0, %v2811
    %v2813 = vtanh.pop %v2753
    %v2814 = vtanh.pop %v2773
    %v2815 = vmul.f32 %v2797, %v2510
    %2817 = vrot.lane.b32.xlu0 %v2813, 64
    %v2818 = vpop.permute.xlu0 %2817
    %v2820 = vmul.f32 %v2797, %v2818
    %2822 = vrot.lane.b32.xlu0 %v2820, 32
    %v2823 = vpop.permute.xlu0 %2822
    %v2825 = vadd.f32 %v2815, %v2823
    %v2826 = vtanh.pop %v2825
    %2828 = vrot.lane.b32.xlu0 %v2826, 64
    %v2829 = vpop.permute.xlu0 %2828
    %v2831 = vmul.f32 %v2797, %v2829
    %v2832 = vmul.f32 %v2812, %v2527
    %2834 = vrot.lane.b32.xlu0 %v2814, 64
    %v2835 = vpop.permute.xlu0 %2834
    %v2837 = vmul.f32 %v2812, %v2835
    %2839 = vrot.lane.b32.xlu0 %v2837, 32
    %v2840 = vpop.permute.xlu0 %2839
    %v2842 = vadd.f32 %v2832, %v2840
    %v2843 = vtanh.pop %v2842
    %2845 = vrot.lane.b32.xlu0 %v2843, 64
    %v2846 = vpop.permute.xlu0 %2845
    %v2848 = vmul.f32 %v2812, %v2846
    %2850 = vrot.lane.b32.xlu0 %v2831, 32
    %v2851 = vpop.permute.xlu0 %2850
    %2854 = vrot.lane.b32.xlu0 %v2848, 64
    %v2855 = vpop.permute.xlu0 %2854
    %v2857 = vsel %vm181, %v2851, %v2855
    %2858 = vst.msk [vmem:[#allocation2 + $0x20] sm:$0xff] %vm260, %v2857
    %2859 = vrot.lane.b32.xlu0 %v2682, 64
    %v2860 = vpop.permute.xlu0 %2859
    %v2862 = vsel %vm181, %v2685, %v2860
    %v2863 = vld [vmem:[%s8] sm:$0xff]
    %v2864 = vld [vmem:[%s8 + $0x8] sm:$0xff]
    %v2865 = vld [vmem:[%s8 + $0x10] sm:$0xff]
    %v2866 = vld [vmem:[%s8 + $0x18] sm:$0xff]
    %v2867 = vld [vmem:[%s8 + $0x20] sm:$0xff]
    %v2868 = vld [vmem:[%s8 + $0x28] sm:$0xff]
    %v2869 = vld [vmem:[%s8 + $0x30] sm:$0xff]
    %v2870 = vld [vmem:[%s8 + $0x38] sm:$0xff]
    %v2871 = vld [vmem:[%s8 + $0x40] sm:$0xff]
    %v2872 = vld [vmem:[%s8 + $0x48] sm:$0xff]
    %v2873 = vld [vmem:[%s8 + $0x50] sm:$0xff]
    %v2874 = vld [vmem:[%s8 + $0x58] sm:$0xff]
    %v2875 = vld [vmem:[%s8 + $0x60] sm:$0xff]
    %v2876 = vld [vmem:[%s8 + $0x68] sm:$0xff]
    %v2877 = vld [vmem:[%s8 + $0x70] sm:$0xff]
    %v2878 = vld [vmem:[%s8 + $0x78] sm:$0xff]
    %v2880 = vsel %vm260, %v2862, 0
    %2882 = vmatpush.msra.mxu0 0.0
    %2883 = vmatpush.msra.mxu0 0.0
    %2884 = vmatpush.msra.mxu0 0.0
    %2885 = vmatpush.msra.mxu0 0.0
    %2886 = vmatpush.msra.mxu0 0.0
    %2887 = vmatpush.msra.mxu0 0.0
    %2888 = vmatpush.msra.mxu0 0.0
    %2889 = vmatpush.msra.mxu0 0.0
    %2890 = vmatpush.msra.mxu0 %v2877
    %2891 = vmatpush.msra.mxu0 %v2875
    %2892 = vmatpush.msra.mxu0 %v2873
    %2893 = vmatpush.msra.mxu0 %v2871
    %2894 = vmatpush.msra.mxu0 %v2869
    %2895 = vmatpush.msra.mxu0 %v2867
    %2896 = vmatpush.msra.mxu0 %v2865
    %2897 = vmatpush.msra.mxu0 %v2863
    %2898 = vmatmul.f32.gmra.mxu0 %v2880
    %v2899 = vpop.f32.mrf.mxu0
    %v2900 = vadd.f32 0.0, %v2899
    %2901 = vdwg.mxu0
    %2902 = vmatpush.msra.mxu0 0.0
    %2903 = vmatpush.msra.mxu0 0.0
    %2904 = vmatpush.msra.mxu0 0.0
    %2905 = vmatpush.msra.mxu0 0.0
    %2906 = vmatpush.msra.mxu0 0.0
    %2907 = vmatpush.msra.mxu0 0.0
    %2908 = vmatpush.msra.mxu0 0.0
    %2909 = vmatpush.msra.mxu0 0.0
    %2910 = vmatpush.msra.mxu0 %v2878
    %2911 = vmatpush.msra.mxu0 %v2876
    %2912 = vmatpush.msra.mxu0 %v2874
    %2913 = vmatpush.msra.mxu0 %v2872
    %2914 = vmatpush.msra.mxu0 %v2870
    %2915 = vmatpush.msra.mxu0 %v2868
    %2916 = vmatpush.msra.mxu0 %v2866
    %2917 = vmatpush.msra.mxu0 %v2864
    %2918 = vmatmul.f32.gmra.mxu0 %v2880
    %v2919 = vpop.f32.mrf.mxu0
    %v2920 = vadd.f32 0.0, %v2919
    %2921 = vdwg.mxu0
    %v2922 = vadd.f32 %v1261, %v2900
    %v2923 = vadd.f32 %v1281, %v2920
    %v2924 = vxor.u32 %v2922, 2147483648
    %v2925 = vxor.u32 %v2923, 2147483648
    %v2926 = vmul.f32 %v2924, 1.442695
    %v2927 = vpow.pop %v2926
    %v2928 = vmul.f32 %v2925, 1.442695
    %v2929 = vpow.pop %v2928
    %v2930 = vadd.f32 %v2927, 1.0
    %v2931 = vadd.f32 %v2929, 1.0
    %v2932 = vrcp.pop %v2930
    %v2933 = vmul.f32 %v2930, %v2932
    %v2934 = vsub.f32 1.0, %v2933
    %v2935 = vmul.f32 %v2932, %v2934
    %v2936 = vadd.f32 %v2932, %v2935
    %vm2937 = vweird.f32 %v2930
    %vm2938 = vweird.f32 %v2932
    %vm2939 = vmor %vm2937, %vm2938
    %v2940 = vsel %vm2939, %v2932, %v2936
    %v2941 = vand.u32 2147483647, %v2930
    %vm2942 = vcmp.eq.f32.partialorder %v2941, 8.507059e+37
    %v2943 = vand.u32 %v2930, 2147483648
    %v2944 = vor.u32 1.1754944e-38, %v2943
    %v2945 = vsel %vm2942, %v2944, %v2940
    %v2946 = vmul.f32 1.0, %v2945
    %v2947 = vrcp.pop %v2931
    %v2948 = vmul.f32 %v2931, %v2947
    %v2949 = vsub.f32 1.0, %v2948
    %v2950 = vmul.f32 %v2947, %v2949
    %v2951 = vadd.f32 %v2947, %v2950
    %vm2952 = vweird.f32 %v2931
    %vm2953 = vweird.f32 %v2947
    %vm2954 = vmor %vm2952, %vm2953
    %v2955 = vsel %vm2954, %v2947, %v2951
    %v2956 = vand.u32 2147483647, %v2931
    %vm2957 = vcmp.eq.f32.partialorder %v2956, 8.507059e+37
    %v2958 = vand.u32 %v2931, 2147483648
    %v2959 = vor.u32 1.1754944e-38, %v2958
    %v2960 = vsel %vm2957, %v2959, %v2955
    %v2961 = vmul.f32 1.0, %v2960
    %v2962 = vtanh.pop %v2922
    %v2963 = vtanh.pop %v2923
    %v2964 = vmul.f32 %v2946, %v2659
    %2966 = vrot.lane.b32.xlu0 %v2962, 64
    %v2967 = vpop.permute.xlu0 %2966
    %v2969 = vmul.f32 %v2946, %v2967
    %2971 = vrot.lane.b32.xlu0 %v2969, 32
    %v2972 = vpop.permute.xlu0 %2971
    %v2974 = vadd.f32 %v2964, %v2972
    %v2975 = vtanh.pop %v2974
    %2977 = vrot.lane.b32.xlu0 %v2975, 64
    %v2978 = vpop.permute.xlu0 %2977
    %v2980 = vmul.f32 %v2946, %v2978
    %v2981 = vmul.f32 %v2961, %v2676
    %2983 = vrot.lane.b32.xlu0 %v2963, 64
    %v2984 = vpop.permute.xlu0 %2983
    %v2986 = vmul.f32 %v2961, %v2984
    %2988 = vrot.lane.b32.xlu0 %v2986, 32
    %v2989 = vpop.permute.xlu0 %2988
    %v2991 = vadd.f32 %v2981, %v2989
    %v2992 = vtanh.pop %v2991
    %2994 = vrot.lane.b32.xlu0 %v2992, 64
    %v2995 = vpop.permute.xlu0 %2994
    %v2997 = vmul.f32 %v2961, %v2995
    %2999 = vrot.lane.b32.xlu0 %v2980, 32
    %v3000 = vpop.permute.xlu0 %2999
    %3002 = vrot.lane.b32.xlu0 %v2831, 64
    %v3003 = vpop.permute.xlu0 %3002
    %3006 = vrot.lane.b32.xlu0 %v2997, 96
    %v3007 = vpop.permute.xlu0 %3006
    %v3009 = vsel %vm181, %v3000, %v3003
    %v3010 = vsel %vm260, %v3009, %v3007
    %v3011 = vsel %vm1435, %v3010, %v2848
    %v3012 = vld [vmem:[#allocation8] sm:$0xff]
    %v3013 = vld [vmem:[#allocation8 + $0x8] sm:$0xff]
    %v3014 = vld [vmem:[#allocation8 + $0x10] sm:$0xff]
    %v3015 = vld [vmem:[#allocation8 + $0x18] sm:$0xff]
    %v3016 = vld [vmem:[#allocation8 + $0x20] sm:$0xff]
    %v3017 = vld [vmem:[#allocation8 + $0x28] sm:$0xff]
    %v3018 = vld [vmem:[#allocation8 + $0x30] sm:$0xff]
    %v3019 = vld [vmem:[#allocation8 + $0x38] sm:$0xff]
    %v3020 = vld [vmem:[#allocation8 + $0x40] sm:$0xff]
    %v3021 = vld [vmem:[#allocation8 + $0x48] sm:$0xff]
    %v3022 = vld [vmem:[#allocation8 + $0x50] sm:$0xff]
    %v3023 = vld [vmem:[#allocation8 + $0x58] sm:$0xff]
    %v3024 = vld [vmem:[#allocation8 + $0x60] sm:$0xff]
    %v3025 = vld [vmem:[#allocation8 + $0x68] sm:$0xff]
    %v3026 = vld [vmem:[#allocation8 + $0x70] sm:$0xff]
    %v3027 = vld [vmem:[#allocation8 + $0x78] sm:$0xff]
    %v3028 = vld [vmem:[#allocation8 + $0x80] sm:$0xff]
    %v3029 = vld [vmem:[#allocation8 + $0x88] sm:$0xff]
    %v3030 = vld [vmem:[#allocation8 + $0x90] sm:$0xff]
    %v3031 = vld [vmem:[#allocation8 + $0x98] sm:$0xff]
    %v3032 = vld [vmem:[#allocation8 + $0xa0] sm:$0xff]
    %v3033 = vld [vmem:[#allocation8 + $0xa8] sm:$0xff]
    %v3034 = vld [vmem:[#allocation8 + $0xb0] sm:$0xff]
    %v3035 = vld [vmem:[#allocation8 + $0xb8] sm:$0xff]
    %v3036 = vld [vmem:[#allocation8 + $0xc0] sm:$0xff]
    %v3037 = vld [vmem:[#allocation8 + $0xc8] sm:$0xff]
    %v3038 = vld [vmem:[#allocation8 + $0xd0] sm:$0xff]
    %v3039 = vld [vmem:[#allocation8 + $0xd8] sm:$0xff]
    %v3040 = vld [vmem:[#allocation8 + $0xe0] sm:$0xff]
    %v3041 = vld [vmem:[#allocation8 + $0xe8] sm:$0xff]
    %v3042 = vld [vmem:[#allocation8 + $0xf0] sm:$0xff]
    %v3043 = vld [vmem:[#allocation8 + $0xf8] sm:$0xff]
    %v3044 = vld [vmem:[%s10] sm:$0x3]
    %v3046 = vperm.slane %v3044, 0
    %v3047 = vperm.slane %v3044, 1
    %3050 = vmatpush.msra.mxu0 %v3042
    %3051 = vmatpush.msra.mxu0 %v3040
    %3052 = vmatpush.msra.mxu0 %v3038
    %3053 = vmatpush.msra.mxu0 %v3036
    %3054 = vmatpush.msra.mxu0 %v3034
    %3055 = vmatpush.msra.mxu0 %v3032
    %3056 = vmatpush.msra.mxu0 %v3030
    %3057 = vmatpush.msra.mxu0 %v3028
    %3058 = vmatpush.msra.mxu0 %v3026
    %3059 = vmatpush.msra.mxu0 %v3024
    %3060 = vmatpush.msra.mxu0 %v3022
    %3061 = vmatpush.msra.mxu0 %v3020
    %3062 = vmatpush.msra.mxu0 %v3018
    %3063 = vmatpush.msra.mxu0 %v3016
    %3064 = vmatpush.msra.mxu0 %v3014
    %3065 = vmatpush.msra.mxu0 %v3012
    %3066 = vmatmul.f32.gmra.mxu0 %v3011
    %v3067 = vpop.f32.mrf.mxu0
    %v3068 = vadd.f32 %v3046, %v3067
    %3069 = vdwg.mxu0
    %3070 = vmatpush.msra.mxu0 %v3043
    %3071 = vmatpush.msra.mxu0 %v3041
    %3072 = vmatpush.msra.mxu0 %v3039
    %3073 = vmatpush.msra.mxu0 %v3037
    %3074 = vmatpush.msra.mxu0 %v3035
    %3075 = vmatpush.msra.mxu0 %v3033
    %3076 = vmatpush.msra.mxu0 %v3031
    %3077 = vmatpush.msra.mxu0 %v3029
    %3078 = vmatpush.msra.mxu0 %v3027
    %3079 = vmatpush.msra.mxu0 %v3025
    %3080 = vmatpush.msra.mxu0 %v3023
    %3081 = vmatpush.msra.mxu0 %v3021
    %3082 = vmatpush.msra.mxu0 %v3019
    %3083 = vmatpush.msra.mxu0 %v3017
    %3084 = vmatpush.msra.mxu0 %v3015
    %3085 = vmatpush.msra.mxu0 %v3013
    %3086 = vmatmul.f32.gmra.mxu0 %v3011
    %v3087 = vpop.f32.mrf.mxu0
    %v3088 = vadd.f32 %v3047, %v3087
    %3089 = vdwg.mxu0
    %v3090 = vxor.u32 %v3068, 2147483648
    %v3091 = vxor.u32 %v3088, 2147483648
    %v3092 = vmul.f32 %v3090, 1.442695
    %v3093 = vpow.pop %v3092
    %v3094 = vmul.f32 %v3091, 1.442695
    %v3095 = vpow.pop %v3094
    %v3096 = vadd.f32 %v3093, 1.0
    %v3097 = vadd.f32 %v3095, 1.0
    %v3098 = vrcp.pop %v3096
    %v3099 = vmul.f32 %v3096, %v3098
    %v3100 = vsub.f32 1.0, %v3099
    %v3101 = vmul.f32 %v3098, %v3100
    %v3102 = vadd.f32 %v3098, %v3101
    %vm3103 = vweird.f32 %v3096
    %vm3104 = vweird.f32 %v3098
    %vm3105 = vmor %vm3103, %vm3104
    %v3106 = vsel %vm3105, %v3098, %v3102
    %v3107 = vand.u32 2147483647, %v3096
    %vm3108 = vcmp.eq.f32.partialorder %v3107, 8.507059e+37
    %v3109 = vand.u32 %v3096, 2147483648
    %v3110 = vor.u32 1.1754944e-38, %v3109
    %v3111 = vsel %vm3108, %v3110, %v3106
    %v3112 = vmul.f32 1.0, %v3111
    %v3113 = vrcp.pop %v3097
    %v3114 = vmul.f32 %v3097, %v3113
    %v3115 = vsub.f32 1.0, %v3114
    %v3116 = vmul.f32 %v3113, %v3115
    %v3117 = vadd.f32 %v3113, %v3116
    %vm3118 = vweird.f32 %v3097
    %vm3119 = vweird.f32 %v3113
    %vm3120 = vmor %vm3118, %vm3119
    %v3121 = vsel %vm3120, %v3113, %v3117
    %v3122 = vand.u32 2147483647, %v3097
    %vm3123 = vcmp.eq.f32.partialorder %v3122, 8.507059e+37
    %v3124 = vand.u32 %v3097, 2147483648
    %v3125 = vor.u32 1.1754944e-38, %v3124
    %v3126 = vsel %vm3123, %v3125, %v3121
    %v3127 = vmul.f32 1.0, %v3126
    %v3128 = vtanh.pop %v3068
    %v3129 = vtanh.pop %v3088
    %v3130 = vmul.f32 %v3112, %v2825
    %3132 = vrot.lane.b32.xlu0 %v3128, 64
    %v3133 = vpop.permute.xlu0 %3132
    %v3135 = vmul.f32 %v3112, %v3133
    %3137 = vrot.lane.b32.xlu0 %v3135, 32
    %v3138 = vpop.permute.xlu0 %3137
    %v3140 = vadd.f32 %v3130, %v3138
    %v3141 = vtanh.pop %v3140
    %3143 = vrot.lane.b32.xlu0 %v3141, 64
    %v3144 = vpop.permute.xlu0 %3143
    %v3146 = vmul.f32 %v3112, %v3144
    %v3147 = vmul.f32 %v3127, %v2842
    %3149 = vrot.lane.b32.xlu0 %v3129, 64
    %v3150 = vpop.permute.xlu0 %3149
    %v3152 = vmul.f32 %v3127, %v3150
    %3154 = vrot.lane.b32.xlu0 %v3152, 32
    %v3155 = vpop.permute.xlu0 %3154
    %v3157 = vadd.f32 %v3147, %v3155
    %v3158 = vtanh.pop %v3157
    %3160 = vrot.lane.b32.xlu0 %v3158, 64
    %v3161 = vpop.permute.xlu0 %3160
    %v3163 = vmul.f32 %v3127, %v3161
    %3165 = vrot.lane.b32.xlu0 %v3146, 32
    %v3166 = vpop.permute.xlu0 %3165
    %3169 = vrot.lane.b32.xlu0 %v3163, 64
    %v3170 = vpop.permute.xlu0 %3169
    %v3172 = vsel %vm181, %v3166, %v3170
    %3173 = vst.msk [vmem:[#allocation2 + $0x28] sm:$0xff] %vm260, %v3172
    %3174 = vrot.lane.b32.xlu0 %v2997, 64
    %v3175 = vpop.permute.xlu0 %3174
    %v3177 = vsel %vm181, %v3000, %v3175
    %v3178 = vld [vmem:[%s8] sm:$0xff]
    %v3179 = vld [vmem:[%s8 + $0x8] sm:$0xff]
    %v3180 = vld [vmem:[%s8 + $0x10] sm:$0xff]
    %v3181 = vld [vmem:[%s8 + $0x18] sm:$0xff]
    %v3182 = vld [vmem:[%s8 + $0x20] sm:$0xff]
    %v3183 = vld [vmem:[%s8 + $0x28] sm:$0xff]
    %v3184 = vld [vmem:[%s8 + $0x30] sm:$0xff]
    %v3185 = vld [vmem:[%s8 + $0x38] sm:$0xff]
    %v3186 = vld [vmem:[%s8 + $0x40] sm:$0xff]
    %v3187 = vld [vmem:[%s8 + $0x48] sm:$0xff]
    %v3188 = vld [vmem:[%s8 + $0x50] sm:$0xff]
    %v3189 = vld [vmem:[%s8 + $0x58] sm:$0xff]
    %v3190 = vld [vmem:[%s8 + $0x60] sm:$0xff]
    %v3191 = vld [vmem:[%s8 + $0x68] sm:$0xff]
    %v3192 = vld [vmem:[%s8 + $0x70] sm:$0xff]
    %v3193 = vld [vmem:[%s8 + $0x78] sm:$0xff]
    %v3195 = vsel %vm260, %v3177, 0
    %3197 = vmatpush.msra.mxu0 0.0
    %3198 = vmatpush.msra.mxu0 0.0
    %3199 = vmatpush.msra.mxu0 0.0
    %3200 = vmatpush.msra.mxu0 0.0
    %3201 = vmatpush.msra.mxu0 0.0
    %3202 = vmatpush.msra.mxu0 0.0
    %3203 = vmatpush.msra.mxu0 0.0
    %3204 = vmatpush.msra.mxu0 0.0
    %3205 = vmatpush.msra.mxu0 %v3192
    %3206 = vmatpush.msra.mxu0 %v3190
    %3207 = vmatpush.msra.mxu0 %v3188
    %3208 = vmatpush.msra.mxu0 %v3186
    %3209 = vmatpush.msra.mxu0 %v3184
    %3210 = vmatpush.msra.mxu0 %v3182
    %3211 = vmatpush.msra.mxu0 %v3180
    %3212 = vmatpush.msra.mxu0 %v3178
    %3213 = vmatmul.f32.gmra.mxu0 %v3195
    %v3214 = vpop.f32.mrf.mxu0
    %v3215 = vadd.f32 0.0, %v3214
    %3216 = vdwg.mxu0
    %3217 = vmatpush.msra.mxu0 0.0
    %3218 = vmatpush.msra.mxu0 0.0
    %3219 = vmatpush.msra.mxu0 0.0
    %3220 = vmatpush.msra.mxu0 0.0
    %3221 = vmatpush.msra.mxu0 0.0
    %3222 = vmatpush.msra.mxu0 0.0
    %3223 = vmatpush.msra.mxu0 0.0
    %3224 = vmatpush.msra.mxu0 0.0
    %3225 = vmatpush.msra.mxu0 %v3193
    %3226 = vmatpush.msra.mxu0 %v3191
    %3227 = vmatpush.msra.mxu0 %v3189
    %3228 = vmatpush.msra.mxu0 %v3187
    %3229 = vmatpush.msra.mxu0 %v3185
    %3230 = vmatpush.msra.mxu0 %v3183
    %3231 = vmatpush.msra.mxu0 %v3181
    %3232 = vmatpush.msra.mxu0 %v3179
    %3233 = vmatmul.f32.gmra.mxu0 %v3195
    %v3234 = vpop.f32.mrf.mxu0
    %v3235 = vadd.f32 0.0, %v3234
    %3236 = vdwg.mxu0
    %v3237 = vadd.f32 %v1261, %v3215
    %v3238 = vadd.f32 %v1281, %v3235
    %v3239 = vxor.u32 %v3237, 2147483648
    %v3240 = vxor.u32 %v3238, 2147483648
    %v3241 = vmul.f32 %v3239, 1.442695
    %v3242 = vpow.pop %v3241
    %v3243 = vmul.f32 %v3240, 1.442695
    %v3244 = vpow.pop %v3243
    %v3245 = vadd.f32 %v3242, 1.0
    %v3246 = vadd.f32 %v3244, 1.0
    %v3247 = vrcp.pop %v3245
    %v3248 = vmul.f32 %v3245, %v3247
    %v3249 = vsub.f32 1.0, %v3248
    %v3250 = vmul.f32 %v3247, %v3249
    %v3251 = vadd.f32 %v3247, %v3250
    %vm3252 = vweird.f32 %v3245
    %vm3253 = vweird.f32 %v3247
    %vm3254 = vmor %vm3252, %vm3253
    %v3255 = vsel %vm3254, %v3247, %v3251
    %v3256 = vand.u32 2147483647, %v3245
    %vm3257 = vcmp.eq.f32.partialorder %v3256, 8.507059e+37
    %v3258 = vand.u32 %v3245, 2147483648
    %v3259 = vor.u32 1.1754944e-38, %v3258
    %v3260 = vsel %vm3257, %v3259, %v3255
    %v3261 = vmul.f32 1.0, %v3260
    %v3262 = vrcp.pop %v3246
    %v3263 = vmul.f32 %v3246, %v3262
    %v3264 = vsub.f32 1.0, %v3263
    %v3265 = vmul.f32 %v3262, %v3264
    %v3266 = vadd.f32 %v3262, %v3265
    %vm3267 = vweird.f32 %v3246
    %vm3268 = vweird.f32 %v3262
    %vm3269 = vmor %vm3267, %vm3268
    %v3270 = vsel %vm3269, %v3262, %v3266
    %v3271 = vand.u32 2147483647, %v3246
    %vm3272 = vcmp.eq.f32.partialorder %v3271, 8.507059e+37
    %v3273 = vand.u32 %v3246, 2147483648
    %v3274 = vor.u32 1.1754944e-38, %v3273
    %v3275 = vsel %vm3272, %v3274, %v3270
    %v3276 = vmul.f32 1.0, %v3275
    %v3277 = vtanh.pop %v3237
    %v3278 = vtanh.pop %v3238
    %v3279 = vmul.f32 %v3261, %v2974
    %3281 = vrot.lane.b32.xlu0 %v3277, 64
    %v3282 = vpop.permute.xlu0 %3281
    %v3284 = vmul.f32 %v3261, %v3282
    %3286 = vrot.lane.b32.xlu0 %v3284, 32
    %v3287 = vpop.permute.xlu0 %3286
    %v3289 = vadd.f32 %v3279, %v3287
    %v3290 = vtanh.pop %v3289
    %3292 = vrot.lane.b32.xlu0 %v3290, 64
    %v3293 = vpop.permute.xlu0 %3292
    %v3295 = vmul.f32 %v3261, %v3293
    %v3296 = vmul.f32 %v3276, %v2991
    %3298 = vrot.lane.b32.xlu0 %v3278, 64
    %v3299 = vpop.permute.xlu0 %3298
    %v3301 = vmul.f32 %v3276, %v3299
    %3303 = vrot.lane.b32.xlu0 %v3301, 32
    %v3304 = vpop.permute.xlu0 %3303
    %v3306 = vadd.f32 %v3296, %v3304
    %v3307 = vtanh.pop %v3306
    %3309 = vrot.lane.b32.xlu0 %v3307, 64
    %v3310 = vpop.permute.xlu0 %3309
    %v3312 = vmul.f32 %v3276, %v3310
    %3314 = vrot.lane.b32.xlu0 %v3295, 32
    %v3315 = vpop.permute.xlu0 %3314
    %3317 = vrot.lane.b32.xlu0 %v3146, 64
    %v3318 = vpop.permute.xlu0 %3317
    %3321 = vrot.lane.b32.xlu0 %v3312, 96
    %v3322 = vpop.permute.xlu0 %3321
    %v3324 = vsel %vm181, %v3315, %v3318
    %v3325 = vsel %vm260, %v3324, %v3322
    %v3326 = vsel %vm1435, %v3325, %v3163
    %v3327 = vld [vmem:[#allocation8] sm:$0xff]
    %v3328 = vld [vmem:[#allocation8 + $0x8] sm:$0xff]
    %v3329 = vld [vmem:[#allocation8 + $0x10] sm:$0xff]
    %v3330 = vld [vmem:[#allocation8 + $0x18] sm:$0xff]
    %v3331 = vld [vmem:[#allocation8 + $0x20] sm:$0xff]
    %v3332 = vld [vmem:[#allocation8 + $0x28] sm:$0xff]
    %v3333 = vld [vmem:[#allocation8 + $0x30] sm:$0xff]
    %v3334 = vld [vmem:[#allocation8 + $0x38] sm:$0xff]
    %v3335 = vld [vmem:[#allocation8 + $0x40] sm:$0xff]
    %v3336 = vld [vmem:[#allocation8 + $0x48] sm:$0xff]
    %v3337 = vld [vmem:[#allocation8 + $0x50] sm:$0xff]
    %v3338 = vld [vmem:[#allocation8 + $0x58] sm:$0xff]
    %v3339 = vld [vmem:[#allocation8 + $0x60] sm:$0xff]
    %v3340 = vld [vmem:[#allocation8 + $0x68] sm:$0xff]
    %v3341 = vld [vmem:[#allocation8 + $0x70] sm:$0xff]
    %v3342 = vld [vmem:[#allocation8 + $0x78] sm:$0xff]
    %v3343 = vld [vmem:[#allocation8 + $0x80] sm:$0xff]
    %v3344 = vld [vmem:[#allocation8 + $0x88] sm:$0xff]
    %v3345 = vld [vmem:[#allocation8 + $0x90] sm:$0xff]
    %v3346 = vld [vmem:[#allocation8 + $0x98] sm:$0xff]
    %v3347 = vld [vmem:[#allocation8 + $0xa0] sm:$0xff]
    %v3348 = vld [vmem:[#allocation8 + $0xa8] sm:$0xff]
    %v3349 = vld [vmem:[#allocation8 + $0xb0] sm:$0xff]
    %v3350 = vld [vmem:[#allocation8 + $0xb8] sm:$0xff]
    %v3351 = vld [vmem:[#allocation8 + $0xc0] sm:$0xff]
    %v3352 = vld [vmem:[#allocation8 + $0xc8] sm:$0xff]
    %v3353 = vld [vmem:[#allocation8 + $0xd0] sm:$0xff]
    %v3354 = vld [vmem:[#allocation8 + $0xd8] sm:$0xff]
    %v3355 = vld [vmem:[#allocation8 + $0xe0] sm:$0xff]
    %v3356 = vld [vmem:[#allocation8 + $0xe8] sm:$0xff]
    %v3357 = vld [vmem:[#allocation8 + $0xf0] sm:$0xff]
    %v3358 = vld [vmem:[#allocation8 + $0xf8] sm:$0xff]
    %v3359 = vld [vmem:[%s10] sm:$0x3]
    %v3361 = vperm.slane %v3359, 0
    %v3362 = vperm.slane %v3359, 1
    %3365 = vmatpush.msra.mxu0 %v3357
    %3366 = vmatpush.msra.mxu0 %v3355
    %3367 = vmatpush.msra.mxu0 %v3353
    %3368 = vmatpush.msra.mxu0 %v3351
    %3369 = vmatpush.msra.mxu0 %v3349
    %3370 = vmatpush.msra.mxu0 %v3347
    %3371 = vmatpush.msra.mxu0 %v3345
    %3372 = vmatpush.msra.mxu0 %v3343
    %3373 = vmatpush.msra.mxu0 %v3341
    %3374 = vmatpush.msra.mxu0 %v3339
    %3375 = vmatpush.msra.mxu0 %v3337
    %3376 = vmatpush.msra.mxu0 %v3335
    %3377 = vmatpush.msra.mxu0 %v3333
    %3378 = vmatpush.msra.mxu0 %v3331
    %3379 = vmatpush.msra.mxu0 %v3329
    %3380 = vmatpush.msra.mxu0 %v3327
    %3381 = vmatmul.f32.gmra.mxu0 %v3326
    %v3382 = vpop.f32.mrf.mxu0
    %v3383 = vadd.f32 %v3361, %v3382
    %3384 = vdwg.mxu0
    %3385 = vmatpush.msra.mxu0 %v3358
    %3386 = vmatpush.msra.mxu0 %v3356
    %3387 = vmatpush.msra.mxu0 %v3354
    %3388 = vmatpush.msra.mxu0 %v3352
    %3389 = vmatpush.msra.mxu0 %v3350
    %3390 = vmatpush.msra.mxu0 %v3348
    %3391 = vmatpush.msra.mxu0 %v3346
    %3392 = vmatpush.msra.mxu0 %v3344
    %3393 = vmatpush.msra.mxu0 %v3342
    %3394 = vmatpush.msra.mxu0 %v3340
    %3395 = vmatpush.msra.mxu0 %v3338
    %3396 = vmatpush.msra.mxu0 %v3336
    %3397 = vmatpush.msra.mxu0 %v3334
    %3398 = vmatpush.msra.mxu0 %v3332
    %3399 = vmatpush.msra.mxu0 %v3330
    %3400 = vmatpush.msra.mxu0 %v3328
    %3401 = vmatmul.f32.gmra.mxu0 %v3326
    %v3402 = vpop.f32.mrf.mxu0
    %v3403 = vadd.f32 %v3362, %v3402
    %3404 = vdwg.mxu0
    %v3405 = vxor.u32 %v3383, 2147483648
    %v3406 = vxor.u32 %v3403, 2147483648
    %v3407 = vmul.f32 %v3405, 1.442695
    %v3408 = vpow.pop %v3407
    %v3409 = vmul.f32 %v3406, 1.442695
    %v3410 = vpow.pop %v3409
    %v3411 = vadd.f32 %v3408, 1.0
    %v3412 = vadd.f32 %v3410, 1.0
    %v3413 = vrcp.pop %v3411
    %v3414 = vmul.f32 %v3411, %v3413
    %v3415 = vsub.f32 1.0, %v3414
    %v3416 = vmul.f32 %v3413, %v3415
    %v3417 = vadd.f32 %v3413, %v3416
    %vm3418 = vweird.f32 %v3411
    %vm3419 = vweird.f32 %v3413
    %vm3420 = vmor %vm3418, %vm3419
    %v3421 = vsel %vm3420, %v3413, %v3417
    %v3422 = vand.u32 2147483647, %v3411
    %vm3423 = vcmp.eq.f32.partialorder %v3422, 8.507059e+37
    %v3424 = vand.u32 %v3411, 2147483648
    %v3425 = vor.u32 1.1754944e-38, %v3424
    %v3426 = vsel %vm3423, %v3425, %v3421
    %v3427 = vmul.f32 1.0, %v3426
    %v3428 = vrcp.pop %v3412
    %v3429 = vmul.f32 %v3412, %v3428
    %v3430 = vsub.f32 1.0, %v3429
    %v3431 = vmul.f32 %v3428, %v3430
    %v3432 = vadd.f32 %v3428, %v3431
    %vm3433 = vweird.f32 %v3412
    %vm3434 = vweird.f32 %v3428
    %vm3435 = vmor %vm3433, %vm3434
    %v3436 = vsel %vm3435, %v3428, %v3432
    %v3437 = vand.u32 2147483647, %v3412
    %vm3438 = vcmp.eq.f32.partialorder %v3437, 8.507059e+37
    %v3439 = vand.u32 %v3412, 2147483648
    %v3440 = vor.u32 1.1754944e-38, %v3439
    %v3441 = vsel %vm3438, %v3440, %v3436
    %v3442 = vmul.f32 1.0, %v3441
    %v3443 = vtanh.pop %v3383
    %v3444 = vtanh.pop %v3403
    %v3445 = vmul.f32 %v3427, %v3140
    %3447 = vrot.lane.b32.xlu0 %v3443, 64
    %v3448 = vpop.permute.xlu0 %3447
    %v3450 = vmul.f32 %v3427, %v3448
    %3452 = vrot.lane.b32.xlu0 %v3450, 32
    %v3453 = vpop.permute.xlu0 %3452
    %v3455 = vadd.f32 %v3445, %v3453
    %v3456 = vtanh.pop %v3455
    %3458 = vrot.lane.b32.xlu0 %v3456, 64
    %v3459 = vpop.permute.xlu0 %3458
    %v3461 = vmul.f32 %v3427, %v3459
    %v3462 = vmul.f32 %v3442, %v3157
    %3464 = vrot.lane.b32.xlu0 %v3444, 64
    %v3465 = vpop.permute.xlu0 %3464
    %v3467 = vmul.f32 %v3442, %v3465
    %3469 = vrot.lane.b32.xlu0 %v3467, 32
    %v3470 = vpop.permute.xlu0 %3469
    %v3472 = vadd.f32 %v3462, %v3470
    %v3473 = vtanh.pop %v3472
    %3475 = vrot.lane.b32.xlu0 %v3473, 64
    %v3476 = vpop.permute.xlu0 %3475
    %v3478 = vmul.f32 %v3442, %v3476
    %3480 = vrot.lane.b32.xlu0 %v3461, 32
    %v3481 = vpop.permute.xlu0 %3480
    %3484 = vrot.lane.b32.xlu0 %v3478, 64
    %v3485 = vpop.permute.xlu0 %3484
    %v3487 = vsel %vm181, %v3481, %v3485
    %3488 = vst.msk [vmem:[#allocation2 + $0x30] sm:$0xff] %vm260, %v3487
    %3489 = vrot.lane.b32.xlu0 %v3312, 64
    %v3490 = vpop.permute.xlu0 %3489
    %v3492 = vsel %vm181, %v3315, %v3490
    %v3493 = vld [vmem:[%s8] sm:$0xff]
    %v3494 = vld [vmem:[%s8 + $0x8] sm:$0xff]
    %v3495 = vld [vmem:[%s8 + $0x10] sm:$0xff]
    %v3496 = vld [vmem:[%s8 + $0x18] sm:$0xff]
    %v3497 = vld [vmem:[%s8 + $0x20] sm:$0xff]
    %v3498 = vld [vmem:[%s8 + $0x28] sm:$0xff]
    %v3499 = vld [vmem:[%s8 + $0x30] sm:$0xff]
    %v3500 = vld [vmem:[%s8 + $0x38] sm:$0xff]
    %v3501 = vld [vmem:[%s8 + $0x40] sm:$0xff]
    %v3502 = vld [vmem:[%s8 + $0x48] sm:$0xff]
    %v3503 = vld [vmem:[%s8 + $0x50] sm:$0xff]
    %v3504 = vld [vmem:[%s8 + $0x58] sm:$0xff]
    %v3505 = vld [vmem:[%s8 + $0x60] sm:$0xff]
    %v3506 = vld [vmem:[%s8 + $0x68] sm:$0xff]
    %v3507 = vld [vmem:[%s8 + $0x70] sm:$0xff]
    %v3508 = vld [vmem:[%s8 + $0x78] sm:$0xff]
    %v3510 = vsel %vm260, %v3492, 0
    %3512 = vmatpush.msra.mxu0 0.0
    %3513 = vmatpush.msra.mxu0 0.0
    %3514 = vmatpush.msra.mxu0 0.0
    %3515 = vmatpush.msra.mxu0 0.0
    %3516 = vmatpush.msra.mxu0 0.0
    %3517 = vmatpush.msra.mxu0 0.0
    %3518 = vmatpush.msra.mxu0 0.0
    %3519 = vmatpush.msra.mxu0 0.0
    %3520 = vmatpush.msra.mxu0 %v3507
    %3521 = vmatpush.msra.mxu0 %v3505
    %3522 = vmatpush.msra.mxu0 %v3503
    %3523 = vmatpush.msra.mxu0 %v3501
    %3524 = vmatpush.msra.mxu0 %v3499
    %3525 = vmatpush.msra.mxu0 %v3497
    %3526 = vmatpush.msra.mxu0 %v3495
    %3527 = vmatpush.msra.mxu0 %v3493
    %3528 = vmatmul.f32.gmra.mxu0 %v3510
    %v3529 = vpop.f32.mrf.mxu0
    %v3530 = vadd.f32 0.0, %v3529
    %3531 = vdwg.mxu0
    %3532 = vmatpush.msra.mxu0 0.0
    %3533 = vmatpush.msra.mxu0 0.0
    %3534 = vmatpush.msra.mxu0 0.0
    %3535 = vmatpush.msra.mxu0 0.0
    %3536 = vmatpush.msra.mxu0 0.0
    %3537 = vmatpush.msra.mxu0 0.0
    %3538 = vmatpush.msra.mxu0 0.0
    %3539 = vmatpush.msra.mxu0 0.0
    %3540 = vmatpush.msra.mxu0 %v3508
    %3541 = vmatpush.msra.mxu0 %v3506
    %3542 = vmatpush.msra.mxu0 %v3504
    %3543 = vmatpush.msra.mxu0 %v3502
    %3544 = vmatpush.msra.mxu0 %v3500
    %3545 = vmatpush.msra.mxu0 %v3498
    %3546 = vmatpush.msra.mxu0 %v3496
    %3547 = vmatpush.msra.mxu0 %v3494
    %3548 = vmatmul.f32.gmra.mxu0 %v3510
    %v3549 = vpop.f32.mrf.mxu0
    %v3550 = vadd.f32 0.0, %v3549
    %3551 = vdwg.mxu0
    %v3552 = vadd.f32 %v1261, %v3530
    %v3553 = vadd.f32 %v1281, %v3550
    %v3554 = vxor.u32 %v3552, 2147483648
    %v3555 = vxor.u32 %v3553, 2147483648
    %v3556 = vmul.f32 %v3554, 1.442695
    %v3557 = vpow.pop %v3556
    %v3558 = vmul.f32 %v3555, 1.442695
    %v3559 = vpow.pop %v3558
    %v3560 = vadd.f32 %v3557, 1.0
    %v3561 = vadd.f32 %v3559, 1.0
    %v3562 = vrcp.pop %v3560
    %v3563 = vmul.f32 %v3560, %v3562
    %v3564 = vsub.f32 1.0, %v3563
    %v3565 = vmul.f32 %v3562, %v3564
    %v3566 = vadd.f32 %v3562, %v3565
    %vm3567 = vweird.f32 %v3560
    %vm3568 = vweird.f32 %v3562
    %vm3569 = vmor %vm3567, %vm3568
    %v3570 = vsel %vm3569, %v3562, %v3566
    %v3571 = vand.u32 2147483647, %v3560
    %vm3572 = vcmp.eq.f32.partialorder %v3571, 8.507059e+37
    %v3573 = vand.u32 %v3560, 2147483648
    %v3574 = vor.u32 1.1754944e-38, %v3573
    %v3575 = vsel %vm3572, %v3574, %v3570
    %v3576 = vmul.f32 1.0, %v3575
    %v3577 = vrcp.pop %v3561
    %v3578 = vmul.f32 %v3561, %v3577
    %v3579 = vsub.f32 1.0, %v3578
    %v3580 = vmul.f32 %v3577, %v3579
    %v3581 = vadd.f32 %v3577, %v3580
    %vm3582 = vweird.f32 %v3561
    %vm3583 = vweird.f32 %v3577
    %vm3584 = vmor %vm3582, %vm3583
    %v3585 = vsel %vm3584, %v3577, %v3581
    %v3586 = vand.u32 2147483647, %v3561
    %vm3587 = vcmp.eq.f32.partialorder %v3586, 8.507059e+37
    %v3588 = vand.u32 %v3561, 2147483648
    %v3589 = vor.u32 1.1754944e-38, %v3588
    %v3590 = vsel %vm3587, %v3589, %v3585
    %v3591 = vmul.f32 1.0, %v3590
    %v3592 = vtanh.pop %v3552
    %v3593 = vtanh.pop %v3553
    %v3594 = vmul.f32 %v3576, %v3289
    %3596 = vrot.lane.b32.xlu0 %v3592, 64
    %v3597 = vpop.permute.xlu0 %3596
    %v3599 = vmul.f32 %v3576, %v3597
    %3601 = vrot.lane.b32.xlu0 %v3599, 32
    %v3602 = vpop.permute.xlu0 %3601
    %v3604 = vadd.f32 %v3594, %v3602
    %v3605 = vtanh.pop %v3604
    %3607 = vrot.lane.b32.xlu0 %v3605, 64
    %v3608 = vpop.permute.xlu0 %3607
    %v3610 = vmul.f32 %v3576, %v3608
    %v3611 = vmul.f32 %v3591, %v3306
    %3613 = vrot.lane.b32.xlu0 %v3593, 64
    %v3614 = vpop.permute.xlu0 %3613
    %v3616 = vmul.f32 %v3591, %v3614
    %3618 = vrot.lane.b32.xlu0 %v3616, 32
    %v3619 = vpop.permute.xlu0 %3618
    %v3621 = vadd.f32 %v3611, %v3619
    %v3622 = vtanh.pop %v3621
    %3624 = vrot.lane.b32.xlu0 %v3622, 64
    %v3625 = vpop.permute.xlu0 %3624
    %v3627 = vmul.f32 %v3591, %v3625
    %3629 = vrot.lane.b32.xlu0 %v3610, 32
    %v3630 = vpop.permute.xlu0 %3629
    %3632 = vrot.lane.b32.xlu0 %v3461, 64
    %v3633 = vpop.permute.xlu0 %3632
    %3636 = vrot.lane.b32.xlu0 %v3627, 96
    %v3637 = vpop.permute.xlu0 %3636
    %v3639 = vsel %vm181, %v3630, %v3633
    %v3640 = vsel %vm260, %v3639, %v3637
    %v3641 = vsel %vm1435, %v3640, %v3478
    %v3642 = vld [vmem:[#allocation8] sm:$0xff]
    %v3643 = vld [vmem:[#allocation8 + $0x8] sm:$0xff]
    %v3644 = vld [vmem:[#allocation8 + $0x10] sm:$0xff]
    %v3645 = vld [vmem:[#allocation8 + $0x18] sm:$0xff]
    %v3646 = vld [vmem:[#allocation8 + $0x20] sm:$0xff]
    %v3647 = vld [vmem:[#allocation8 + $0x28] sm:$0xff]
    %v3648 = vld [vmem:[#allocation8 + $0x30] sm:$0xff]
    %v3649 = vld [vmem:[#allocation8 + $0x38] sm:$0xff]
    %v3650 = vld [vmem:[#allocation8 + $0x40] sm:$0xff]
    %v3651 = vld [vmem:[#allocation8 + $0x48] sm:$0xff]
    %v3652 = vld [vmem:[#allocation8 + $0x50] sm:$0xff]
    %v3653 = vld [vmem:[#allocation8 + $0x58] sm:$0xff]
    %v3654 = vld [vmem:[#allocation8 + $0x60] sm:$0xff]
    %v3655 = vld [vmem:[#allocation8 + $0x68] sm:$0xff]
    %v3656 = vld [vmem:[#allocation8 + $0x70] sm:$0xff]
    %v3657 = vld [vmem:[#allocation8 + $0x78] sm:$0xff]
    %v3658 = vld [vmem:[#allocation8 + $0x80] sm:$0xff]
    %v3659 = vld [vmem:[#allocation8 + $0x88] sm:$0xff]
    %v3660 = vld [vmem:[#allocation8 + $0x90] sm:$0xff]
    %v3661 = vld [vmem:[#allocation8 + $0x98] sm:$0xff]
    %v3662 = vld [vmem:[#allocation8 + $0xa0] sm:$0xff]
    %v3663 = vld [vmem:[#allocation8 + $0xa8] sm:$0xff]
    %v3664 = vld [vmem:[#allocation8 + $0xb0] sm:$0xff]
    %v3665 = vld [vmem:[#allocation8 + $0xb8] sm:$0xff]
    %v3666 = vld [vmem:[#allocation8 + $0xc0] sm:$0xff]
    %v3667 = vld [vmem:[#allocation8 + $0xc8] sm:$0xff]
    %v3668 = vld [vmem:[#allocation8 + $0xd0] sm:$0xff]
    %v3669 = vld [vmem:[#allocation8 + $0xd8] sm:$0xff]
    %v3670 = vld [vmem:[#allocation8 + $0xe0] sm:$0xff]
    %v3671 = vld [vmem:[#allocation8 + $0xe8] sm:$0xff]
    %v3672 = vld [vmem:[#allocation8 + $0xf0] sm:$0xff]
    %v3673 = vld [vmem:[#allocation8 + $0xf8] sm:$0xff]
    %v3674 = vld [vmem:[%s10] sm:$0x3]
    %v3676 = vperm.slane %v3674, 0
    %v3677 = vperm.slane %v3674, 1
    %3680 = vmatpush.msra.mxu0 %v3672
    %3681 = vmatpush.msra.mxu0 %v3670
    %3682 = vmatpush.msra.mxu0 %v3668
    %3683 = vmatpush.msra.mxu0 %v3666
    %3684 = vmatpush.msra.mxu0 %v3664
    %3685 = vmatpush.msra.mxu0 %v3662
    %3686 = vmatpush.msra.mxu0 %v3660
    %3687 = vmatpush.msra.mxu0 %v3658
    %3688 = vmatpush.msra.mxu0 %v3656
    %3689 = vmatpush.msra.mxu0 %v3654
    %3690 = vmatpush.msra.mxu0 %v3652
    %3691 = vmatpush.msra.mxu0 %v3650
    %3692 = vmatpush.msra.mxu0 %v3648
    %3693 = vmatpush.msra.mxu0 %v3646
    %3694 = vmatpush.msra.mxu0 %v3644
    %3695 = vmatpush.msra.mxu0 %v3642
    %3696 = vmatmul.f32.gmra.mxu0 %v3641
    %v3697 = vpop.f32.mrf.mxu0
    %v3698 = vadd.f32 %v3676, %v3697
    %3699 = vdwg.mxu0
    %3700 = vmatpush.msra.mxu0 %v3673
    %3701 = vmatpush.msra.mxu0 %v3671
    %3702 = vmatpush.msra.mxu0 %v3669
    %3703 = vmatpush.msra.mxu0 %v3667
    %3704 = vmatpush.msra.mxu0 %v3665
    %3705 = vmatpush.msra.mxu0 %v3663
    %3706 = vmatpush.msra.mxu0 %v3661
    %3707 = vmatpush.msra.mxu0 %v3659
    %3708 = vmatpush.msra.mxu0 %v3657
    %3709 = vmatpush.msra.mxu0 %v3655
    %3710 = vmatpush.msra.mxu0 %v3653
    %3711 = vmatpush.msra.mxu0 %v3651
    %3712 = vmatpush.msra.mxu0 %v3649
    %3713 = vmatpush.msra.mxu0 %v3647
    %3714 = vmatpush.msra.mxu0 %v3645
    %3715 = vmatpush.msra.mxu0 %v3643
    %3716 = vmatmul.f32.gmra.mxu0 %v3641
    %v3717 = vpop.f32.mrf.mxu0
    %v3718 = vadd.f32 %v3677, %v3717
    %3719 = vdwg.mxu0
    %v3720 = vxor.u32 %v3698, 2147483648
    %v3721 = vxor.u32 %v3718, 2147483648
    %v3722 = vmul.f32 %v3720, 1.442695
    %v3723 = vpow.pop %v3722
    %v3724 = vmul.f32 %v3721, 1.442695
    %v3725 = vpow.pop %v3724
    %v3726 = vadd.f32 %v3723, 1.0
    %v3727 = vadd.f32 %v3725, 1.0
    %v3728 = vrcp.pop %v3726
    %v3729 = vmul.f32 %v3726, %v3728
    %v3730 = vsub.f32 1.0, %v3729
    %v3731 = vmul.f32 %v3728, %v3730
    %v3732 = vadd.f32 %v3728, %v3731
    %vm3733 = vweird.f32 %v3726
    %vm3734 = vweird.f32 %v3728
    %vm3735 = vmor %vm3733, %vm3734
    %v3736 = vsel %vm3735, %v3728, %v3732
    %v3737 = vand.u32 2147483647, %v3726
    %vm3738 = vcmp.eq.f32.partialorder %v3737, 8.507059e+37
    %v3739 = vand.u32 %v3726, 2147483648
    %v3740 = vor.u32 1.1754944e-38, %v3739
    %v3741 = vsel %vm3738, %v3740, %v3736
    %v3742 = vmul.f32 1.0, %v3741
    %v3743 = vrcp.pop %v3727
    %v3744 = vmul.f32 %v3727, %v3743
    %v3745 = vsub.f32 1.0, %v3744
    %v3746 = vmul.f32 %v3743, %v3745
    %v3747 = vadd.f32 %v3743, %v3746
    %vm3748 = vweird.f32 %v3727
    %vm3749 = vweird.f32 %v3743
    %vm3750 = vmor %vm3748, %vm3749
    %v3751 = vsel %vm3750, %v3743, %v3747
    %v3752 = vand.u32 2147483647, %v3727
    %vm3753 = vcmp.eq.f32.partialorder %v3752, 8.507059e+37
    %v3754 = vand.u32 %v3727, 2147483648
    %v3755 = vor.u32 1.1754944e-38, %v3754
    %v3756 = vsel %vm3753, %v3755, %v3751
    %v3757 = vmul.f32 1.0, %v3756
    %v3758 = vtanh.pop %v3698
    %v3759 = vtanh.pop %v3718
    %v3760 = vmul.f32 %v3742, %v3455
    %3762 = vrot.lane.b32.xlu0 %v3758, 64
    %v3763 = vpop.permute.xlu0 %3762
    %v3765 = vmul.f32 %v3742, %v3763
    %3767 = vrot.lane.b32.xlu0 %v3765, 32
    %v3768 = vpop.permute.xlu0 %3767
    %v3770 = vadd.f32 %v3760, %v3768
    %v3771 = vtanh.pop %v3770
    %3773 = vrot.lane.b32.xlu0 %v3771, 64
    %v3774 = vpop.permute.xlu0 %3773
    %v3776 = vmul.f32 %v3742, %v3774
    %v3777 = vmul.f32 %v3757, %v3472
    %3779 = vrot.lane.b32.xlu0 %v3759, 64
    %v3780 = vpop.permute.xlu0 %3779
    %v3782 = vmul.f32 %v3757, %v3780
    %3784 = vrot.lane.b32.xlu0 %v3782, 32
    %v3785 = vpop.permute.xlu0 %3784
    %v3787 = vadd.f32 %v3777, %v3785
    %v3788 = vtanh.pop %v3787
    %3790 = vrot.lane.b32.xlu0 %v3788, 64
    %v3791 = vpop.permute.xlu0 %3790
    %v3793 = vmul.f32 %v3757, %v3791
    %3795 = vrot.lane.b32.xlu0 %v3776, 32
    %v3796 = vpop.permute.xlu0 %3795
    %3799 = vrot.lane.b32.xlu0 %v3793, 64
    %v3800 = vpop.permute.xlu0 %3799
    %v3802 = vsel %vm181, %v3796, %v3800
    %3803 = vst.msk [vmem:[#allocation2 + $0x38] sm:$0xff] %vm260, %v3802
    %v3804 = vld [vmem:[#allocation2] sm:$0xff]
    %v3805 = vld [vmem:[#allocation2 + $0x8] sm:$0xff]
    %v3806 = vld [vmem:[#allocation2 + $0x10] sm:$0xff]
    %v3807 = vld [vmem:[#allocation2 + $0x18] sm:$0xff]
    %v3808 = vld [vmem:[#allocation2 + $0x20] sm:$0xff]
    %v3809 = vld [vmem:[#allocation2 + $0x28] sm:$0xff]
    %v3810 = vld [vmem:[#allocation2 + $0x30] sm:$0xff]
    %v3811 = vld [vmem:[#allocation2 + $0x38] sm:$0xff]
    %v3812 = vld [vmem:[%s11] sm:$0xff]
    %v3813 = vld [vmem:[%s11 + $0x8] sm:$0xff]
    %v3814 = vld [vmem:[%s11 + $0x10] sm:$0xff]
    %v3815 = vld [vmem:[%s11 + $0x18] sm:$0xff]
    %v3816 = vld [vmem:[%s11 + $0x20] sm:$0xff]
    %v3817 = vld [vmem:[%s11 + $0x28] sm:$0xff]
    %v3818 = vld [vmem:[%s11 + $0x30] sm:$0xff]
    %v3819 = vld [vmem:[%s11 + $0x38] sm:$0xff]
    %v3820 = vld [vmem:[%s12] sm:$0x1]
    %v3822 = vperm.slane %v3820, 0
    %v3825 = vsel %vm260, %v3804, 0
    %v3828 = vsel %vm260, %v3805, 0
    %v3831 = vsel %vm260, %v3806, 0
    %v3834 = vsel %vm260, %v3807, 0
    %v3837 = vsel %vm260, %v3808, 0
    %v3840 = vsel %vm260, %v3809, 0
    %v3843 = vsel %vm260, %v3810, 0
    %v3846 = vsel %vm260, %v3811, 0
    %3848 = vmatpush.msra.mxu0 0.0
    %3849 = vmatpush.msra.mxu0 0.0
    %3850 = vmatpush.msra.mxu0 0.0
    %3851 = vmatpush.msra.mxu0 0.0
    %3852 = vmatpush.msra.mxu0 0.0
    %3853 = vmatpush.msra.mxu0 0.0
    %3854 = vmatpush.msra.mxu0 0.0
    %3855 = vmatpush.msra.mxu0 0.0
    %3856 = vmatpush.msra.mxu0 %v3819
    %3857 = vmatpush.msra.mxu0 %v3818
    %3858 = vmatpush.msra.mxu0 %v3817
    %3859 = vmatpush.msra.mxu0 %v3816
    %3860 = vmatpush.msra.mxu0 %v3815
    %3861 = vmatpush.msra.mxu0 %v3814
    %3862 = vmatpush.msra.mxu0 %v3813
    %3863 = vmatpush.msra.mxu0 %v3812
    %3864 = vmatmul.f32.gmra.mxu0 %v3825
    %v3865 = vpop.f32.mrf.mxu0
    %v3866 = vadd.f32 %v3822, %v3865
    %3867 = vmatmul.f32.gmra.mxu0 %v3828
    %v3868 = vpop.f32.mrf.mxu0
    %v3869 = vadd.f32 %v3822, %v3868
    %3870 = vmatmul.f32.gmra.mxu0 %v3831
    %v3871 = vpop.f32.mrf.mxu0
    %v3872 = vadd.f32 %v3822, %v3871
    %3873 = vmatmul.f32.gmra.mxu0 %v3834
    %v3874 = vpop.f32.mrf.mxu0
    %v3875 = vadd.f32 %v3822, %v3874
    %3876 = vmatmul.f32.gmra.mxu0 %v3837
    %v3877 = vpop.f32.mrf.mxu0
    %v3878 = vadd.f32 %v3822, %v3877
    %3879 = vmatmul.f32.gmra.mxu0 %v3840
    %v3880 = vpop.f32.mrf.mxu0
    %v3881 = vadd.f32 %v3822, %v3880
    %3882 = vmatmul.f32.gmra.mxu0 %v3843
    %v3883 = vpop.f32.mrf.mxu0
    %v3884 = vadd.f32 %v3822, %v3883
    %3885 = vmatmul.f32.gmra.mxu0 %v3846
    %v3886 = vpop.f32.mrf.mxu0
    %v3887 = vadd.f32 %v3822, %v3886
    %3888 = vdwg.mxu0
    %vm3889 = vcmask 15360
    %3890 = vst.msk [vmem:[%s13] sm:$0xff] %vm3889, %v3866
    %3891 = vst.msk [vmem:[%s13 + $0x8] sm:$0xff] %vm3889, %v3869
    %3892 = vst.msk [vmem:[%s13 + $0x10] sm:$0xff] %vm3889, %v3872
    %3893 = vst.msk [vmem:[%s13 + $0x18] sm:$0xff] %vm3889, %v3875
    %3894 = vst.msk [vmem:[%s13 + $0x20] sm:$0xff] %vm3889, %v3878
    %3895 = vst.msk [vmem:[%s13 + $0x28] sm:$0xff] %vm3889, %v3881
    %3896 = vst.msk [vmem:[%s13 + $0x30] sm:$0xff] %vm3889, %v3884
    %3897 = vst.msk [vmem:[%s13 + $0x38] sm:$0xff] %vm3889, %v3887
    // Predicated region
    $region70: #{forward_pallas.1} parent=1 // pred_check
      _
    $region71: #{forward_pallas.1} parent=1 // pred_check_branch
      %3899 = sbr.rel (0) target = $region73
    $region72: #{forward_pallas.1} parent=1 // pred_region
      _
    $region73: #{forward_pallas.1} parent=1 // pred_fallthru
      _
    // Predicated region
    $region74: #{forward_pallas.1} parent=1 // pred_check
      _
    $region75: #{forward_pallas.1} parent=1 // pred_check_branch
      %3901 = sbr.rel (0) target = $region77
    $region76: #{forward_pallas.1} parent=1 // pred_region
      _
    $region77: #{forward_pallas.1} parent=1 // pred_fallthru
      _
    %3902 = vsyncpa [#allocation4], 1
    %3903 = vsyncpa [#allocation6], 1
    %3904 = vsyncpa [#allocation9], 1

</llo_original>
